<compile_context>
chip_gen: v6e
topology: v6e:2x2x1
jax: 0.10.0
libtpu: 0.0.40
codegen_flags: <defaults>
</compile_context>

<pallas_src>
import functools
import math

import jax
import jax.numpy as jnp
from jax import lax
from jax.experimental import pallas as pl
from jax.experimental.pallas import tpu as pltpu

_VMEM_LIMIT = 48 * 1024 * 1024  # safe on v7x (64 MiB phys); headroom on v5e/v6e.


def _pick_tile(dim, pref, align):
    """Largest tile <= pref that divides `dim` and is a multiple of `align`,
    falling back to the full dimension (always legal as a block size)."""
    if dim <= pref:
        return dim
    t = (pref // align) * align
    while t >= align:
        if dim % t == 0:
            return t
        t -= align
    return dim


# ----------------------------------------------------------------------------
# Kernel 1: tiled dense projection   out = x @ W^T + b
#   x block (TM, K) stays resident across the out-col axis; weight streams.
#   (K = embed dim is kept whole per block — fine for E = 512; for much larger
#    embed dims a third "arbitrary" K axis + accumulator would be added.)
# ----------------------------------------------------------------------------
def _linear_kernel(x_ref, w_ref, b_ref, o_ref, *, compute_dtype):
    x = x_ref[...].astype(compute_dtype)               # (TM, K)
    w = w_ref[...].astype(compute_dtype)               # (TN, K)  -- (out, in)
    acc = lax.dot_general(x, w,
                          dimension_numbers=(((1,), (1,)), ((), ())),
                          preferred_element_type=jnp.float32)      # (TM, TN)
    o_ref[...] = (acc + b_ref[...].astype(jnp.float32)).astype(o_ref.dtype)


def pallas_linear(x2d, weight, bias, *, out_dtype=None,
                  compute_dtype=jnp.bfloat16, tm=256, tn=256):
    """x2d: (N, K), weight: (OUT, K), bias: (OUT,) -> (N, OUT)."""
    n, k = x2d.shape
    out_dim = weight.shape[0]
    out_dtype = out_dtype if out_dtype is not None else x2d.dtype
    tm = _pick_tile(n, tm, 8)          # sublane-aligned row tile
    tn = _pick_tile(out_dim, tn, 128)  # lane-aligned (MXU-friendly) col tile
    b2d = bias.reshape(1, out_dim)
    kernel = functools.partial(_linear_kernel, compute_dtype=compute_dtype)
    return pl.pallas_call(
        kernel,
        out_shape=jax.ShapeDtypeStruct((n, out_dim), out_dtype),
        grid=(n // tm, out_dim // tn),
        in_specs=[
            pl.BlockSpec((tm, k), lambda i, j: (i, 0)),   # rows, resident over j
            pl.BlockSpec((tn, k), lambda i, j: (j, 0)),   # weight col-tile
            pl.BlockSpec((1, tn), lambda i, j: (0, j)),   # bias slice
        ],
        out_specs=pl.BlockSpec((tm, tn), lambda i, j: (i, j)),
        compiler_params=pltpu.CompilerParams(
            dimension_semantics=("parallel", "parallel"),
            vmem_limit_bytes=_VMEM_LIMIT),
    )(x2d, weight, b2d)


# ----------------------------------------------------------------------------
# Kernel 2: flash-style cross-attention over all heads, fused output projection
#   q:  (B, Sq, E)   (scale already folded into the q projection)
#   kv: (B, Skv, 2E) (k in columns [0, E), v in columns [E, 2E))
#   out = softmax(q k^T) v  @ W_o^T + b_o        -> (B, Sq, E), lane-dense store
# ----------------------------------------------------------------------------
def _cross_attn_kernel(q_ref, kv_ref, wo_ref, bo_ref, o_ref,
                       m_sc, l_sc, acc_sc, *,
                       num_heads, head_dim, compute_dtype):
    e = num_heads * head_dim
    ki = pl.program_id(2)

    @pl.when(ki == 0)
    def _():
        m_sc[...] = jnp.full_like(m_sc, -jnp.inf)
        l_sc[...] = jnp.zeros_like(l_sc)
        acc_sc[...] = jnp.zeros_like(acc_sc)

    q = q_ref[0]    # (tq, E)   bf16
    kv = kv_ref[0]  # (tk, 2E)  bf16

    for h in range(num_heads):           # static, unrolled; slices are static
        hs, he = h * head_dim, (h + 1) * head_dim
        qh = q[:, hs:he]                  # (tq, Dh)
        kh = kv[:, hs:he]                 # (tk, Dh)
        vh = kv[:, e + hs:e + he]         # (tk, Dh)

        # scores: contract the head dims directly (no in-kernel transpose).
        s = lax.dot_general(qh, kh,
                            dimension_numbers=(((1,), (1,)), ((), ())),
                            preferred_element_type=jnp.float32)    # (tq, tk)

        m_prev = m_sc[:, h:h + 1]
        l_prev = l_sc[:, h:h + 1]
        m_new = jnp.maximum(m_prev, jnp.max(s, axis=-1, keepdims=True))
        alpha = jnp.exp(m_prev - m_new)
        p = jnp.exp(s - m_new)                                      # f32
        l_sc[:, h:h + 1] = alpha * l_prev + jnp.sum(p, axis=-1, keepdims=True)
        pv = jnp.dot(p.astype(compute_dtype), vh,
                     preferred_element_type=jnp.float32)            # (tq, Dh)
        acc_sc[:, hs:he] = alpha * acc_sc[:, hs:he] + pv
        m_sc[:, h:h + 1] = m_new

    @pl.when(ki == pl.num_programs(2) - 1)
    def _():
        # normalize each head (EUP reciprocal), then fused output projection.
        for h in range(num_heads):
            hs, he = h * head_dim, (h + 1) * head_dim
            inv_l = pl.reciprocal(l_sc[:, h:h + 1], approx=True)
            acc_sc[:, hs:he] = acc_sc[:, hs:he] * inv_l
        att = acc_sc[...].astype(compute_dtype)                     # (tq, E)
        wo = wo_ref[...].astype(compute_dtype)                      # (E, E)
        out = lax.dot_general(att, wo,
                              dimension_numbers=(((1,), (1,)), ((), ())),
                              preferred_element_type=jnp.float32)
        o_ref[0] = (out + bo_ref[...].astype(jnp.float32)).astype(o_ref.dtype)


def pallas_cross_attention(q3, kv3, out_w, out_b, *, num_heads,
                           compute_dtype=jnp.bfloat16, out_dtype=jnp.float32,
                           tq=256, tk=256):
    b, sq, e = q3.shape
    _, skv, e2 = kv3.shape
    assert e2 == 2 * e and e % num_heads == 0
    head_dim = e // num_heads
    tq = _pick_tile(sq, tq, 8)
    tk = _pick_tile(skv, tk, 8)
    bo2d = out_b.reshape(1, e)
    kernel = functools.partial(_cross_attn_kernel, num_heads=num_heads,
                               head_dim=head_dim, compute_dtype=compute_dtype)
    return pl.pallas_call(
        kernel,
        out_shape=jax.ShapeDtypeStruct((b, sq, e), out_dtype),
        grid=(b, sq // tq, skv // tk),        # KV (reduction) axis last
        in_specs=[
            pl.BlockSpec((1, tq, e), lambda bi, qi, ki: (bi, qi, 0)),
            pl.BlockSpec((1, tk, 2 * e), lambda bi, qi, ki: (bi, ki, 0)),
            pl.BlockSpec((e, e), lambda bi, qi, ki: (0, 0)),   # W_o resident
            pl.BlockSpec((1, e), lambda bi, qi, ki: (0, 0)),   # b_o resident
        ],
        out_specs=pl.BlockSpec((1, tq, e), lambda bi, qi, ki: (bi, qi, 0)),
        scratch_shapes=[
            pltpu.VMEM((tq, num_heads), jnp.float32),   # running max per head
            pltpu.VMEM((tq, num_heads), jnp.float32),   # running denom per head
            pltpu.VMEM((tq, e), jnp.float32),           # un-normalized output
        ],
        compiler_params=pltpu.CompilerParams(
            dimension_semantics=("parallel", "parallel", "arbitrary"),
            vmem_limit_bytes=_VMEM_LIMIT),
    )(q3, kv3, out_w, bo2d)


# ----------------------------------------------------------------------------
# Full module forward (mirrors MHA_EncoderDecoderAttention.forward)
# ----------------------------------------------------------------------------
def mha_encoder_decoder_attention(x, encoded, params, num_heads,
                                  compute_dtype=jnp.bfloat16):
    """x: (B, Sq, E) queries; encoded: (B, Skv, E) keys/values -> (B, Sq, E)."""
    b, sq, e = x.shape
    _, skv, _ = encoded.shape
    head_dim = e // num_heads
    scale = 1.0 / math.sqrt(head_dim)

    in_w = params["in_proj_weight"]     # (3E, E)
    in_b = params["in_proj_bias"]       # (3E,)
    out_w = params["out_proj_weight"]   # (E, E)
    out_b = params["out_proj_bias"]     # (E,)

    # Packed-projection split exactly as PyTorch for q != k, k is v.
    # 1/sqrt(Dh) is folded into the q projection (weights + bias).
    q_w = in_w[:e] * scale
    q_b = in_b[:e] * scale
    kv_w = in_w[e:]
    kv_b = in_b[e:]

    # Projections; bf16 intermediates halve HBM traffic into attention.
    q3 = pallas_linear(x.reshape(b * sq, e), q_w, q_b,
                       out_dtype=compute_dtype,
                       compute_dtype=compute_dtype).reshape(b, sq, e)
    kv3 = pallas_linear(encoded.reshape(b * skv, e), kv_w, kv_b,
                        out_dtype=compute_dtype,
                        compute_dtype=compute_dtype).reshape(b, skv, 2 * e)

    # Fused flash-style cross-attention + output projection.
    out = pallas_cross_attention(q3, kv3, out_w, out_b, num_heads=num_heads,
                                 compute_dtype=compute_dtype,
                                 out_dtype=jnp.float32)
    return out.astype(x.dtype)


# ----------------------------------------------------------------------------
# Pure-JAX f32 reference (cross-attention) for a correctness sanity check
# ----------------------------------------------------------------------------
def mha_reference(x, encoded, params, num_heads):
    b, sq, e = x.shape
    _, skv, _ = encoded.shape
    dh = e // num_heads
    in_w, in_b = params["in_proj_weight"], params["in_proj_bias"]
    q = x @ in_w[:e].T + in_b[:e]
    k = encoded @ in_w[e:2 * e].T + in_b[e:2 * e]
    v = encoded @ in_w[2 * e:].T + in_b[2 * e:]

    def sh(t, s):
        return t.reshape(b, s, num_heads, dh).transpose(0, 2, 1, 3)

    q, k, v = sh(q, sq), sh(k, skv), sh(v, skv)
    scores = jnp.einsum("bhqd,bhkd->bhqk", q, k) / math.sqrt(dh)
    p = jax.nn.softmax(scores, axis=-1)
    o = jnp.einsum("bhqk,bhkd->bhqd", p, v)
    o = o.transpose(0, 2, 1, 3).reshape(b, sq, e)
    return o @ params["out_proj_weight"].T + params["out_proj_bias"]


if __name__ == "__main__":
    # Module defaults: embed_dim = 512, num_heads = 8.  Small batch and
    # (different) query / key-value sequence lengths exercise cross-attention.
    B, SQ, SKV, E, H = 2, 8, 16, 512, 8

    key = jax.random.PRNGKey(0)
    kx, ke, k1, k2, k3, k4 = jax.random.split(key, 6)

    params = {
        "in_proj_weight": jax.random.normal(k1, (3 * E, E), jnp.float32)
        * (1.0 / math.sqrt(E)),
        "in_proj_bias": jax.random.normal(k2, (3 * E,), jnp.float32) * 0.02,
        "out_proj_weight": jax.random.normal(k3, (E, E), jnp.float32)
        * (1.0 / math.sqrt(E)),
        "out_proj_bias": jax.random.normal(k4, (E,), jnp.float32) * 0.02,
    }

    x = jax.random.normal(kx, (B, SQ, E), jnp.float32)
    encoded = jax.random.normal(ke, (B, SKV, E), jnp.float32)

    fwd = jax.jit(functools.partial(mha_encoder_decoder_attention, num_heads=H))
    out = jax.block_until_ready(fwd(x, encoded, params))

    ref = mha_reference(x, encoded, params, H)
    assert out.shape == (B, SQ, E)
    # bf16 MXU operands with f32 accumulation (softmax stats in f32):
    # tolerance is loosened accordingly vs. the pure-f32 reference.
    err = float(jnp.max(jnp.abs(out - ref)))
    assert err < 8e-2, f"mismatch vs reference: max abs err = {err}"

    print("KERNEL_OK")
</pallas_src>

<mosaic_0001>
module attributes {stable_mosaic.version = 11 : i64} {
  func.func @_linear_kernel(%arg0: i32, %arg1: i32, %arg2: memref<32x512xf32, #tpu.memory_space<vmem>>, %arg3: memref<256x512xf32, #tpu.memory_space<vmem>>, %arg4: memref<1x256xf32, #tpu.memory_space<vmem>>, %arg5: memref<32x256xbf16, #tpu.memory_space<vmem>>) attributes {dimension_semantics = [#tpu.dimension_semantics<parallel>, #tpu.dimension_semantics<parallel>], iteration_bounds = array<i64: 1, 4>, scalar_prefetch = 0 : i64, scratch_operands = 0 : i64, tpu.core_type = #tpu.core_type<tc>, window_params = [{transform_indices = @transform_0, window_bounds = array<i64: 32, 512>}, {transform_indices = @transform_1, window_bounds = array<i64: 256, 512>}, {transform_indices = @transform_2, window_bounds = array<i64: 1, 256>}, {transform_indices = @transform_3, window_bounds = array<i64: 32, 256>}]} {
    %c0 = arith.constant 0 : index
    %c0_0 = arith.constant 0 : index
    %0 = vector.load %arg2[%c0, %c0_0] : memref<32x512xf32, #tpu.memory_space<vmem>>, vector<32x512xf32>
    %1 = arith.truncf %0 : vector<32x512xf32> to vector<32x512xbf16>
    %c0_1 = arith.constant 0 : index
    %c0_2 = arith.constant 0 : index
    %2 = vector.load %arg3[%c0_1, %c0_2] : memref<256x512xf32, #tpu.memory_space<vmem>>, vector<256x512xf32>
    %3 = arith.truncf %2 : vector<256x512xf32> to vector<256x512xbf16>
    %cst = arith.constant dense<0.000000e+00> : vector<32x256xf32>
    %4 = tpu.matmul %1, %3, %cst {dimension_numbers = #tpu.dot_dimension_numbers<[1], [1], [0], [0], [0, 0, 1, 0], [], []>} : vector<32x512xbf16>, vector<256x512xbf16>, vector<32x256xf32> -> vector<32x256xf32>
    %c0_3 = arith.constant 0 : index
    %c0_4 = arith.constant 0 : index
    %5 = vector.load %arg4[%c0_3, %c0_4] : memref<1x256xf32, #tpu.memory_space<vmem>>, vector<1x256xf32>
    %6 = vector.broadcast %5 : vector<1x256xf32> to vector<32x256xf32>
    %7 = arith.addf %4, %6 : vector<32x256xf32>
    %8 = arith.truncf %7 : vector<32x256xf32> to vector<32x256xbf16>
    %c0_5 = arith.constant 0 : index
    %c0_6 = arith.constant 0 : index
    %9 = vector.load %arg5[%c0_5, %c0_6] : memref<32x256xbf16, #tpu.memory_space<vmem>>, vector<32x256xbf16>
    tpu.vector_store %arg5[%c0_5, %c0_6], %8 {strides = array<i32>} : memref<32x256xbf16, #tpu.memory_space<vmem>>, vector<32x256xbf16>,
    return
  }
  func.func @transform_0(%arg0: i32, %arg1: i32) -> (i32, i32) {
    %c0_i32 = arith.constant 0 : i32
    %c0_i32_0 = arith.constant 0 : i32
    return %arg0, %c0_i32 : i32, i32
  }
  func.func @transform_1(%arg0: i32, %arg1: i32) -> (i32, i32) {
    %c0_i32 = arith.constant 0 : i32
    %c0_i32_0 = arith.constant 0 : i32
    return %arg1, %c0_i32 : i32, i32
  }
  func.func @transform_2(%arg0: i32, %arg1: i32) -> (i32, i32) {
    %c0_i32 = arith.constant 0 : i32
    %c0_i32_0 = arith.constant 0 : i32
    return %c0_i32, %arg1 : i32, i32
  }
  func.func @transform_3(%arg0: i32, %arg1: i32) -> (i32, i32) {
    %c0_i32 = arith.constant 0 : i32
    return %arg0, %arg1 : i32, i32
  }
}

module attributes {stable_mosaic.version = 11 : i64} {
  func.func @_linear_kernel(%arg0: i32, %arg1: i32, %arg2: memref<16x512xf32, #tpu.memory_space<vmem>>, %arg3: memref<256x512xf32, #tpu.memory_space<vmem>>, %arg4: memref<1x256xf32, #tpu.memory_space<vmem>>, %arg5: memref<16x256xbf16, #tpu.memory_space<vmem>>) attributes {dimension_semantics = [#tpu.dimension_semantics<parallel>, #tpu.dimension_semantics<parallel>], iteration_bounds = array<i64: 1, 2>, scalar_prefetch = 0 : i64, scratch_operands = 0 : i64, tpu.core_type = #tpu.core_type<tc>, window_params = [{transform_indices = @transform_0, window_bounds = array<i64: 16, 512>}, {transform_indices = @transform_1, window_bounds = array<i64: 256, 512>}, {transform_indices = @transform_2, window_bounds = array<i64: 1, 256>}, {transform_indices = @transform_3, window_bounds = array<i64: 16, 256>}]} {
    %c0 = arith.constant 0 : index
    %c0_0 = arith.constant 0 : index
    %0 = vector.load %arg2[%c0, %c0_0] : memref<16x512xf32, #tpu.memory_space<vmem>>, vector<16x512xf32>
    %1 = arith.truncf %0 : vector<16x512xf32> to vector<16x512xbf16>
    %c0_1 = arith.constant 0 : index
    %c0_2 = arith.constant 0 : index
    %2 = vector.load %arg3[%c0_1, %c0_2] : memref<256x512xf32, #tpu.memory_space<vmem>>, vector<256x512xf32>
    %3 = arith.truncf %2 : vector<256x512xf32> to vector<256x512xbf16>
    %cst = arith.constant dense<0.000000e+00> : vector<16x256xf32>
    %4 = tpu.matmul %1, %3, %cst {dimension_numbers = #tpu.dot_dimension_numbers<[1], [1], [0], [0], [0, 0, 1, 0], [], []>} : vector<16x512xbf16>, vector<256x512xbf16>, vector<16x256xf32> -> vector<16x256xf32>
    %c0_3 = arith.constant 0 : index
    %c0_4 = arith.constant 0 : index
    %5 = vector.load %arg4[%c0_3, %c0_4] : memref<1x256xf32, #tpu.memory_space<vmem>>, vector<1x256xf32>
    %6 = vector.broadcast %5 : vector<1x256xf32> to vector<16x256xf32>
    %7 = arith.addf %4, %6 : vector<16x256xf32>
    %8 = arith.truncf %7 : vector<16x256xf32> to vector<16x256xbf16>
    %c0_5 = arith.constant 0 : index
    %c0_6 = arith.constant 0 : index
    %9 = vector.load %arg5[%c0_5, %c0_6] : memref<16x256xbf16, #tpu.memory_space<vmem>>, vector<16x256xbf16>
    tpu.vector_store %arg5[%c0_5, %c0_6], %8 {strides = array<i32>} : memref<16x256xbf16, #tpu.memory_space<vmem>>, vector<16x256xbf16>,
    return
  }
  func.func @transform_0(%arg0: i32, %arg1: i32) -> (i32, i32) {
    %c0_i32 = arith.constant 0 : i32
    %c0_i32_0 = arith.constant 0 : i32
    return %arg0, %c0_i32 : i32, i32
  }
  func.func @transform_1(%arg0: i32, %arg1: i32) -> (i32, i32) {
    %c0_i32 = arith.constant 0 : i32
    %c0_i32_0 = arith.constant 0 : i32
    return %arg1, %c0_i32 : i32, i32
  }
  func.func @transform_2(%arg0: i32, %arg1: i32) -> (i32, i32) {
    %c0_i32 = arith.constant 0 : i32
    %c0_i32_0 = arith.constant 0 : i32
    return %c0_i32, %arg1 : i32, i32
  }
  func.func @transform_3(%arg0: i32, %arg1: i32) -> (i32, i32) {
    %c0_i32 = arith.constant 0 : i32
    return %arg0, %arg1 : i32, i32
  }
}

module attributes {stable_mosaic.version = 11 : i64} {
  func.func @_cross_attn_kernel(%arg0: i32, %arg1: i32, %arg2: i32, %arg3: memref<1x8x512xbf16, #tpu.memory_space<vmem>>, %arg4: memref<1x16x1024xbf16, #tpu.memory_space<vmem>>, %arg5: memref<512x512xf32, #tpu.memory_space<vmem>>, %arg6: memref<1x512xf32, #tpu.memory_space<vmem>>, %arg7: memref<1x8x512xf32, #tpu.memory_space<vmem>>, %arg8: memref<8x8xf32, #tpu.memory_space<vmem>>, %arg9: memref<8x8xf32, #tpu.memory_space<vmem>>, %arg10: memref<8x512xf32, #tpu.memory_space<vmem>>) attributes {dimension_semantics = [#tpu.dimension_semantics<parallel>, #tpu.dimension_semantics<parallel>, #tpu.dimension_semantics<arbitrary>], iteration_bounds = array<i64: 2, 1, 1>, scalar_prefetch = 0 : i64, scratch_operands = 3 : i64, tpu.core_type = #tpu.core_type<tc>, window_params = [{transform_indices = @transform_0, window_bounds = array<i64: 1, 8, 512>}, {transform_indices = @transform_1, window_bounds = array<i64: 1, 16, 1024>}, {pipeline_mode = #tpu.pipeline_mode<synchronous>, transform_indices = @transform_2, window_bounds = array<i64: 512, 512>}, {pipeline_mode = #tpu.pipeline_mode<synchronous>, transform_indices = @transform_3, window_bounds = array<i64: 1, 512>}, {transform_indices = @transform_4, window_bounds = array<i64: 1, 8, 512>}]} {
    %c0_i32 = arith.constant 0 : i32
    %0 = arith.cmpi eq, %arg2, %c0_i32 : i32
    %1 = arith.extui %0 : i1 to i32
    %c0_i32_0 = arith.constant 0 : i32
    %2 = arith.cmpi ne, %1, %c0_i32_0 : i32
    scf.if %2 {
      %cst_121 = arith.constant 0xFF800000 : f32
      %226 = vector.broadcast %cst_121 : f32 to vector<8x8xf32>
      %c0_122 = arith.constant 0 : index
      %c0_123 = arith.constant 0 : index
      %227 = vector.load %arg8[%c0_122, %c0_123] : memref<8x8xf32, #tpu.memory_space<vmem>>, vector<8x8xf32>
      tpu.vector_store %arg8[%c0_122, %c0_123], %226 {strides = array<i32>} : memref<8x8xf32, #tpu.memory_space<vmem>>, vector<8x8xf32>,
      %cst_124 = arith.constant 0.000000e+00 : f32
      %228 = vector.broadcast %cst_124 : f32 to vector<8x8xf32>
      %c0_125 = arith.constant 0 : index
      %c0_126 = arith.constant 0 : index
      %229 = vector.load %arg9[%c0_125, %c0_126] : memref<8x8xf32, #tpu.memory_space<vmem>>, vector<8x8xf32>
      tpu.vector_store %arg9[%c0_125, %c0_126], %228 {strides = array<i32>} : memref<8x8xf32, #tpu.memory_space<vmem>>, vector<8x8xf32>,
      %cst_127 = arith.constant 0.000000e+00 : f32
      %230 = vector.broadcast %cst_127 : f32 to vector<8x512xf32>
      %c0_128 = arith.constant 0 : index
      %c0_129 = arith.constant 0 : index
      %231 = vector.load %arg10[%c0_128, %c0_129] : memref<8x512xf32, #tpu.memory_space<vmem>>, vector<8x512xf32>
      tpu.vector_store %arg10[%c0_128, %c0_129], %230 {strides = array<i32>} : memref<8x512xf32, #tpu.memory_space<vmem>>, vector<8x512xf32>,
    } else {
    }
    %c0 = arith.constant 0 : index
    %c0_1 = arith.constant 0 : index
    %c0_2 = arith.constant 0 : index
    %3 = vector.load %arg3[%c0, %c0_1, %c0_2] : memref<1x8x512xbf16, #tpu.memory_space<vmem>>, vector<1x8x512xbf16>
    %4 = vector.shape_cast %3 : vector<1x8x512xbf16> to vector<8x512xbf16>
    %c0_3 = arith.constant 0 : index
    %c0_4 = arith.constant 0 : index
    %c0_5 = arith.constant 0 : index
    %5 = vector.load %arg4[%c0_3, %c0_4, %c0_5] : memref<1x16x1024xbf16, #tpu.memory_space<vmem>>, vector<1x16x1024xbf16>
    %6 = vector.shape_cast %5 : vector<1x16x1024xbf16> to vector<16x1024xbf16>
    %7 = vector.extract_strided_slice %4 {offsets = [0, 0], sizes = [8, 64], strides = [1, 1]} : vector<8x512xbf16> to vector<8x64xbf16>
    %8 = vector.extract_strided_slice %6 {offsets = [0, 0], sizes = [16, 64], strides = [1, 1]} : vector<16x1024xbf16> to vector<16x64xbf16>
    %9 = vector.extract_strided_slice %6 {offsets = [0, 512], sizes = [16, 64], strides = [1, 1]} : vector<16x1024xbf16> to vector<16x64xbf16>
    %cst = arith.constant dense<0.000000e+00> : vector<8x16xf32>
    %10 = tpu.matmul %7, %8, %cst {dimension_numbers = #tpu.dot_dimension_numbers<[1], [1], [0], [0], [0, 0, 1, 0], [], []>} : vector<8x64xbf16>, vector<16x64xbf16>, vector<8x16xf32> -> vector<8x16xf32>
    %c0_6 = arith.constant 0 : index
    %c0_7 = arith.constant 0 : index
    %11 = vector.load %arg8[%c0_6, %c0_7] : memref<8x8xf32, #tpu.memory_space<vmem>>, vector<8x1xf32>
    %c0_8 = arith.constant 0 : index
    %c0_9 = arith.constant 0 : index
    %12 = vector.load %arg9[%c0_8, %c0_9] : memref<8x8xf32, #tpu.memory_space<vmem>>, vector<8x1xf32>
    %cst_10 = arith.constant dense<0xFF800000> : vector<8xf32>
    %13 = vector.multi_reduction <maximumf>, %10, %cst_10 [1] : vector<8x16xf32> to vector<8xf32>
    %14 = vector.shape_cast %13 : vector<8xf32> to vector<8x1xf32>
    %15 = arith.maximumf %11, %14 : vector<8x1xf32>
    %16 = arith.subf %11, %15 : vector<8x1xf32>
    %17 = math.exp %16 : vector<8x1xf32>
    %18 = vector.broadcast %15 : vector<8x1xf32> to vector<8x16xf32>
    %19 = arith.subf %10, %18 : vector<8x16xf32>
    %20 = math.exp %19 : vector<8x16xf32>
    %21 = arith.mulf %17, %12 : vector<8x1xf32>
    %cst_11 = arith.constant dense<0.000000e+00> : vector<8xf32>
    %22 = vector.multi_reduction <add>, %20, %cst_11 [1] : vector<8x16xf32> to vector<8xf32>
    %23 = vector.shape_cast %22 : vector<8xf32> to vector<8x1xf32>
    %24 = arith.addf %21, %23 : vector<8x1xf32>
    %c0_12 = arith.constant 0 : index
    %c0_13 = arith.constant 0 : index
    %25 = vector.load %arg9[%c0_12, %c0_13] : memref<8x8xf32, #tpu.memory_space<vmem>>, vector<8x1xf32>
    tpu.vector_store %arg9[%c0_12, %c0_13], %24 {strides = array<i32>} : memref<8x8xf32, #tpu.memory_space<vmem>>, vector<8x1xf32>,
    %26 = arith.truncf %20 : vector<8x16xf32> to vector<8x16xbf16>
    %cst_14 = arith.constant dense<0.000000e+00> : vector<8x64xf32>
    %27 = tpu.matmul %26, %9, %cst_14 {dimension_numbers = #tpu.dot_dimension_numbers<[1], [0], [0], [1], [0, 0, 1, 1], [], []>} : vector<8x16xbf16>, vector<16x64xbf16>, vector<8x64xf32> -> vector<8x64xf32>
    %c0_15 = arith.constant 0 : index
    %c0_16 = arith.constant 0 : index
    %28 = vector.load %arg10[%c0_15, %c0_16] : memref<8x512xf32, #tpu.memory_space<vmem>>, vector<8x64xf32>
    %29 = vector.broadcast %17 : vector<8x1xf32> to vector<8x64xf32>
    %30 = arith.mulf %29, %28 : vector<8x64xf32>
    %31 = arith.addf %30, %27 : vector<8x64xf32>
    %c0_17 = arith.constant 0 : index
    %c0_18 = arith.constant 0 : index
    %32 = vector.load %arg10[%c0_17, %c0_18] : memref<8x512xf32, #tpu.memory_space<vmem>>, vector<8x64xf32>
    tpu.vector_store %arg10[%c0_17, %c0_18], %31 {strides = array<i32>} : memref<8x512xf32, #tpu.memory_space<vmem>>, vector<8x64xf32>,
    %c0_19 = arith.constant 0 : index
    %c0_20 = arith.constant 0 : index
    %33 = vector.load %arg8[%c0_19, %c0_20] : memref<8x8xf32, #tpu.memory_space<vmem>>, vector<8x1xf32>
    tpu.vector_store %arg8[%c0_19, %c0_20], %15 {strides = array<i32>} : memref<8x8xf32, #tpu.memory_space<vmem>>, vector<8x1xf32>,
    %34 = vector.extract_strided_slice %4 {offsets = [0, 64], sizes = [8, 64], strides = [1, 1]} : vector<8x512xbf16> to vector<8x64xbf16>
    %35 = vector.extract_strided_slice %6 {offsets = [0, 64], sizes = [16, 64], strides = [1, 1]} : vector<16x1024xbf16> to vector<16x64xbf16>
    %36 = vector.extract_strided_slice %6 {offsets = [0, 576], sizes = [16, 64], strides = [1, 1]} : vector<16x1024xbf16> to vector<16x64xbf16>
    %cst_21 = arith.constant dense<0.000000e+00> : vector<8x16xf32>
    %37 = tpu.matmul %34, %35, %cst_21 {dimension_numbers = #tpu.dot_dimension_numbers<[1], [1], [0], [0], [0, 0, 1, 0], [], []>} : vector<8x64xbf16>, vector<16x64xbf16>, vector<8x16xf32> -> vector<8x16xf32>
    %c0_22 = arith.constant 0 : index
    %c1 = arith.constant 1 : index
    %38 = vector.load %arg8[%c0_22, %c1] : memref<8x8xf32, #tpu.memory_space<vmem>>, vector<8x1xf32>
    %c0_23 = arith.constant 0 : index
    %c1_24 = arith.constant 1 : index
    %39 = vector.load %arg9[%c0_23, %c1_24] : memref<8x8xf32, #tpu.memory_space<vmem>>, vector<8x1xf32>
    %cst_25 = arith.constant dense<0xFF800000> : vector<8xf32>
    %40 = vector.multi_reduction <maximumf>, %37, %cst_25 [1] : vector<8x16xf32> to vector<8xf32>
    %41 = vector.shape_cast %40 : vector<8xf32> to vector<8x1xf32>
    %42 = arith.maximumf %38, %41 : vector<8x1xf32>
    %43 = arith.subf %38, %42 : vector<8x1xf32>
    %44 = math.exp %43 : vector<8x1xf32>
    %45 = vector.broadcast %42 : vector<8x1xf32> to vector<8x16xf32>
    %46 = arith.subf %37, %45 : vector<8x16xf32>
    %47 = math.exp %46 : vector<8x16xf32>
    %48 = arith.mulf %44, %39 : vector<8x1xf32>
    %cst_26 = arith.constant dense<0.000000e+00> : vector<8xf32>
    %49 = vector.multi_reduction <add>, %47, %cst_26 [1] : vector<8x16xf32> to vector<8xf32>
    %50 = vector.shape_cast %49 : vector<8xf32> to vector<8x1xf32>
    %51 = arith.addf %48, %50 : vector<8x1xf32>
    %c0_27 = arith.constant 0 : index
    %c1_28 = arith.constant 1 : index
    %52 = vector.load %arg9[%c0_27, %c1_28] : memref<8x8xf32, #tpu.memory_space<vmem>>, vector<8x1xf32>
    tpu.vector_store %arg9[%c0_27, %c1_28], %51 {strides = array<i32>} : memref<8x8xf32, #tpu.memory_space<vmem>>, vector<8x1xf32>,
    %53 = arith.truncf %47 : vector<8x16xf32> to vector<8x16xbf16>
    %cst_29 = arith.constant dense<0.000000e+00> : vector<8x64xf32>
    %54 = tpu.matmul %53, %36, %cst_29 {dimension_numbers = #tpu.dot_dimension_numbers<[1], [0], [0], [1], [0, 0, 1, 1], [], []>} : vector<8x16xbf16>, vector<16x64xbf16>, vector<8x64xf32> -> vector<8x64xf32>
    %c0_30 = arith.constant 0 : index
    %c64 = arith.constant 64 : index
    %55 = vector.load %arg10[%c0_30, %c64] : memref<8x512xf32, #tpu.memory_space<vmem>>, vector<8x64xf32>
    %56 = vector.broadcast %44 : vector<8x1xf32> to vector<8x64xf32>
    %57 = arith.mulf %56, %55 : vector<8x64xf32>
    %58 = arith.addf %57, %54 : vector<8x64xf32>
    %c0_31 = arith.constant 0 : index
    %c64_32 = arith.constant 64 : index
    %59 = vector.load %arg10[%c0_31, %c64_32] : memref<8x512xf32, #tpu.memory_space<vmem>>, vector<8x64xf32>
    tpu.vector_store %arg10[%c0_31, %c64_32], %58 {strides = array<i32>} : memref<8x512xf32, #tpu.memory_space<vmem>>, vector<8x64xf32>,
    %c0_33 = arith.constant 0 : index
    %c1_34 = arith.constant 1 : index
    %60 = vector.load %arg8[%c0_33, %c1_34] : memref<8x8xf32, #tpu.memory_space<vmem>>, vector<8x1xf32>
    tpu.vector_store %arg8[%c0_33, %c1_34], %42 {strides = array<i32>} : memref<8x8xf32, #tpu.memory_space<vmem>>, vector<8x1xf32>,
    %61 = vector.extract_strided_slice %4 {offsets = [0, 128], sizes = [8, 64], strides = [1, 1]} : vector<8x512xbf16> to vector<8x64xbf16>
    %62 = vector.extract_strided_slice %6 {offsets = [0, 128], sizes = [16, 64], strides = [1, 1]} : vector<16x1024xbf16> to vector<16x64xbf16>
    %63 = vector.extract_strided_slice %6 {offsets = [0, 640], sizes = [16, 64], strides = [1, 1]} : vector<16x1024xbf16> to vector<16x64xbf16>
    %cst_35 = arith.constant dense<0.000000e+00> : vector<8x16xf32>
    %64 = tpu.matmul %61, %62, %cst_35 {dimension_numbers = #tpu.dot_dimension_numbers<[1], [1], [0], [0], [0, 0, 1, 0], [], []>} : vector<8x64xbf16>, vector<16x64xbf16>, vector<8x16xf32> -> vector<8x16xf32>
    %c0_36 = arith.constant 0 : index
    %c2 = arith.constant 2 : index
    %65 = vector.load %arg8[%c0_36, %c2] : memref<8x8xf32, #tpu.memory_space<vmem>>, vector<8x1xf32>
    %c0_37 = arith.constant 0 : index
    %c2_38 = arith.constant 2 : index
    %66 = vector.load %arg9[%c0_37, %c2_38] : memref<8x8xf32, #tpu.memory_space<vmem>>, vector<8x1xf32>
    %cst_39 = arith.constant dense<0xFF800000> : vector<8xf32>
    %67 = vector.multi_reduction <maximumf>, %64, %cst_39 [1] : vector<8x16xf32> to vector<8xf32>
    %68 = vector.shape_cast %67 : vector<8xf32> to vector<8x1xf32>
    %69 = arith.maximumf %65, %68 : vector<8x1xf32>
    %70 = arith.subf %65, %69 : vector<8x1xf32>
    %71 = math.exp %70 : vector<8x1xf32>
    %72 = vector.broadcast %69 : vector<8x1xf32> to vector<8x16xf32>
    %73 = arith.subf %64, %72 : vector<8x16xf32>
    %74 = math.exp %73 : vector<8x16xf32>
    %75 = arith.mulf %71, %66 : vector<8x1xf32>
    %cst_40 = arith.constant dense<0.000000e+00> : vector<8xf32>
    %76 = vector.multi_reduction <add>, %74, %cst_40 [1] : vector<8x16xf32> to vector<8xf32>
    %77 = vector.shape_cast %76 : vector<8xf32> to vector<8x1xf32>
    %78 = arith.addf %75, %77 : vector<8x1xf32>
    %c0_41 = arith.constant 0 : index
    %c2_42 = arith.constant 2 : index
    %79 = vector.load %arg9[%c0_41, %c2_42] : memref<8x8xf32, #tpu.memory_space<vmem>>, vector<8x1xf32>
    tpu.vector_store %arg9[%c0_41, %c2_42], %78 {strides = array<i32>} : memref<8x8xf32, #tpu.memory_space<vmem>>, vector<8x1xf32>,
    %80 = arith.truncf %74 : vector<8x16xf32> to vector<8x16xbf16>
    %cst_43 = arith.constant dense<0.000000e+00> : vector<8x64xf32>
    %81 = tpu.matmul %80, %63, %cst_43 {dimension_numbers = #tpu.dot_dimension_numbers<[1], [0], [0], [1], [0, 0, 1, 1], [], []>} : vector<8x16xbf16>, vector<16x64xbf16>, vector<8x64xf32> -> vector<8x64xf32>
    %c0_44 = arith.constant 0 : index
    %c128 = arith.constant 128 : index
    %82 = vector.load %arg10[%c0_44, %c128] : memref<8x512xf32, #tpu.memory_space<vmem>>, vector<8x64xf32>
    %83 = vector.broadcast %71 : vector<8x1xf32> to vector<8x64xf32>
    %84 = arith.mulf %83, %82 : vector<8x64xf32>
    %85 = arith.addf %84, %81 : vector<8x64xf32>
    %c0_45 = arith.constant 0 : index
    %c128_46 = arith.constant 128 : index
    %86 = vector.load %arg10[%c0_45, %c128_46] : memref<8x512xf32, #tpu.memory_space<vmem>>, vector<8x64xf32>
    tpu.vector_store %arg10[%c0_45, %c128_46], %85 {strides = array<i32>} : memref<8x512xf32, #tpu.memory_space<vmem>>, vector<8x64xf32>,
    %c0_47 = arith.constant 0 : index
    %c2_48 = arith.constant 2 : index
    %87 = vector.load %arg8[%c0_47, %c2_48] : memref<8x8xf32, #tpu.memory_space<vmem>>, vector<8x1xf32>
    tpu.vector_store %arg8[%c0_47, %c2_48], %69 {strides = array<i32>} : memref<8x8xf32, #tpu.memory_space<vmem>>, vector<8x1xf32>,
    %88 = vector.extract_strided_slice %4 {offsets = [0, 192], sizes = [8, 64], strides = [1, 1]} : vector<8x512xbf16> to vector<8x64xbf16>
    %89 = vector.extract_strided_slice %6 {offsets = [0, 192], sizes = [16, 64], strides = [1, 1]} : vector<16x1024xbf16> to vector<16x64xbf16>
    %90 = vector.extract_strided_slice %6 {offsets = [0, 704], sizes = [16, 64], strides = [1, 1]} : vector<16x1024xbf16> to vector<16x64xbf16>
    %cst_49 = arith.constant dense<0.000000e+00> : vector<8x16xf32>
    %91 = tpu.matmul %88, %89, %cst_49 {dimension_numbers = #tpu.dot_dimension_numbers<[1], [1], [0], [0], [0, 0, 1, 0], [], []>} : vector<8x64xbf16>, vector<16x64xbf16>, vector<8x16xf32> -> vector<8x16xf32>
    %c0_50 = arith.constant 0 : index
    %c3 = arith.constant 3 : index
    %92 = vector.load %arg8[%c0_50, %c3] : memref<8x8xf32, #tpu.memory_space<vmem>>, vector<8x1xf32>
    %c0_51 = arith.constant 0 : index
    %c3_52 = arith.constant 3 : index
    %93 = vector.load %arg9[%c0_51, %c3_52] : memref<8x8xf32, #tpu.memory_space<vmem>>, vector<8x1xf32>
    %cst_53 = arith.constant dense<0xFF800000> : vector<8xf32>
    %94 = vector.multi_reduction <maximumf>, %91, %cst_53 [1] : vector<8x16xf32> to vector<8xf32>
    %95 = vector.shape_cast %94 : vector<8xf32> to vector<8x1xf32>
    %96 = arith.maximumf %92, %95 : vector<8x1xf32>
    %97 = arith.subf %92, %96 : vector<8x1xf32>
    %98 = math.exp %97 : vector<8x1xf32>
    %99 = vector.broadcast %96 : vector<8x1xf32> to vector<8x16xf32>
    %100 = arith.subf %91, %99 : vector<8x16xf32>
    %101 = math.exp %100 : vector<8x16xf32>
    %102 = arith.mulf %98, %93 : vector<8x1xf32>
    %cst_54 = arith.constant dense<0.000000e+00> : vector<8xf32>
    %103 = vector.multi_reduction <add>, %101, %cst_54 [1] : vector<8x16xf32> to vector<8xf32>
    %104 = vector.shape_cast %103 : vector<8xf32> to vector<8x1xf32>
    %105 = arith.addf %102, %104 : vector<8x1xf32>
    %c0_55 = arith.constant 0 : index
    %c3_56 = arith.constant 3 : index
    %106 = vector.load %arg9[%c0_55, %c3_56] : memref<8x8xf32, #tpu.memory_space<vmem>>, vector<8x1xf32>
    tpu.vector_store %arg9[%c0_55, %c3_56], %105 {strides = array<i32>} : memref<8x8xf32, #tpu.memory_space<vmem>>, vector<8x1xf32>,
    %107 = arith.truncf %101 : vector<8x16xf32> to vector<8x16xbf16>
    %cst_57 = arith.constant dense<0.000000e+00> : vector<8x64xf32>
    %108 = tpu.matmul %107, %90, %cst_57 {dimension_numbers = #tpu.dot_dimension_numbers<[1], [0], [0], [1], [0, 0, 1, 1], [], []>} : vector<8x16xbf16>, vector<16x64xbf16>, vector<8x64xf32> -> vector<8x64xf32>
    %c0_58 = arith.constant 0 : index
    %c192 = arith.constant 192 : index
    %109 = vector.load %arg10[%c0_58, %c192] : memref<8x512xf32, #tpu.memory_space<vmem>>, vector<8x64xf32>
    %110 = vector.broadcast %98 : vector<8x1xf32> to vector<8x64xf32>
    %111 = arith.mulf %110, %109 : vector<8x64xf32>
    %112 = arith.addf %111, %108 : vector<8x64xf32>
    %c0_59 = arith.constant 0 : index
    %c192_60 = arith.constant 192 : index
    %113 = vector.load %arg10[%c0_59, %c192_60] : memref<8x512xf32, #tpu.memory_space<vmem>>, vector<8x64xf32>
    tpu.vector_store %arg10[%c0_59, %c192_60], %112 {strides = array<i32>} : memref<8x512xf32, #tpu.memory_space<vmem>>, vector<8x64xf32>,
    %c0_61 = arith.constant 0 : index
    %c3_62 = arith.constant 3 : index
    %114 = vector.load %arg8[%c0_61, %c3_62] : memref<8x8xf32, #tpu.memory_space<vmem>>, vector<8x1xf32>
    tpu.vector_store %arg8[%c0_61, %c3_62], %96 {strides = array<i32>} : memref<8x8xf32, #tpu.memory_space<vmem>>, vector<8x1xf32>,
    %115 = vector.extract_strided_slice %4 {offsets = [0, 256], sizes = [8, 64], strides = [1, 1]} : vector<8x512xbf16> to vector<8x64xbf16>
    %116 = vector.extract_strided_slice %6 {offsets = [0, 256], sizes = [16, 64], strides = [1, 1]} : vector<16x1024xbf16> to vector<16x64xbf16>
    %117 = vector.extract_strided_slice %6 {offsets = [0, 768], sizes = [16, 64], strides = [1, 1]} : vector<16x1024xbf16> to vector<16x64xbf16>
    %cst_63 = arith.constant dense<0.000000e+00> : vector<8x16xf32>
    %118 = tpu.matmul %115, %116, %cst_63 {dimension_numbers = #tpu.dot_dimension_numbers<[1], [1], [0], [0], [0, 0, 1, 0], [], []>} : vector<8x64xbf16>, vector<16x64xbf16>, vector<8x16xf32> -> vector<8x16xf32>
    %c0_64 = arith.constant 0 : index
    %c4 = arith.constant 4 : index
    %119 = vector.load %arg8[%c0_64, %c4] : memref<8x8xf32, #tpu.memory_space<vmem>>, vector<8x1xf32>
    %c0_65 = arith.constant 0 : index
    %c4_66 = arith.constant 4 : index
    %120 = vector.load %arg9[%c0_65, %c4_66] : memref<8x8xf32, #tpu.memory_space<vmem>>, vector<8x1xf32>
    %cst_67 = arith.constant dense<0xFF800000> : vector<8xf32>
    %121 = vector.multi_reduction <maximumf>, %118, %cst_67 [1] : vector<8x16xf32> to vector<8xf32>
    %122 = vector.shape_cast %121 : vector<8xf32> to vector<8x1xf32>
    %123 = arith.maximumf %119, %122 : vector<8x1xf32>
    %124 = arith.subf %119, %123 : vector<8x1xf32>
    %125 = math.exp %124 : vector<8x1xf32>
    %126 = vector.broadcast %123 : vector<8x1xf32> to vector<8x16xf32>
    %127 = arith.subf %118, %126 : vector<8x16xf32>
    %128 = math.exp %127 : vector<8x16xf32>
    %129 = arith.mulf %125, %120 : vector<8x1xf32>
    %cst_68 = arith.constant dense<0.000000e+00> : vector<8xf32>
    %130 = vector.multi_reduction <add>, %128, %cst_68 [1] : vector<8x16xf32> to vector<8xf32>
    %131 = vector.shape_cast %130 : vector<8xf32> to vector<8x1xf32>
    %132 = arith.addf %129, %131 : vector<8x1xf32>
    %c0_69 = arith.constant 0 : index
    %c4_70 = arith.constant 4 : index
    %133 = vector.load %arg9[%c0_69, %c4_70] : memref<8x8xf32, #tpu.memory_space<vmem>>, vector<8x1xf32>
    tpu.vector_store %arg9[%c0_69, %c4_70], %132 {strides = array<i32>} : memref<8x8xf32, #tpu.memory_space<vmem>>, vector<8x1xf32>,
    %134 = arith.truncf %128 : vector<8x16xf32> to vector<8x16xbf16>
    %cst_71 = arith.constant dense<0.000000e+00> : vector<8x64xf32>
    %135 = tpu.matmul %134, %117, %cst_71 {dimension_numbers = #tpu.dot_dimension_numbers<[1], [0], [0], [1], [0, 0, 1, 1], [], []>} : vector<8x16xbf16>, vector<16x64xbf16>, vector<8x64xf32> -> vector<8x64xf32>
    %c0_72 = arith.constant 0 : index
    %c256 = arith.constant 256 : index
    %136 = vector.load %arg10[%c0_72, %c256] : memref<8x512xf32, #tpu.memory_space<vmem>>, vector<8x64xf32>
    %137 = vector.broadcast %125 : vector<8x1xf32> to vector<8x64xf32>
    %138 = arith.mulf %137, %136 : vector<8x64xf32>
    %139 = arith.addf %138, %135 : vector<8x64xf32>
    %c0_73 = arith.constant 0 : index
    %c256_74 = arith.constant 256 : index
    %140 = vector.load %arg10[%c0_73, %c256_74] : memref<8x512xf32, #tpu.memory_space<vmem>>, vector<8x64xf32>
    tpu.vector_store %arg10[%c0_73, %c256_74], %139 {strides = array<i32>} : memref<8x512xf32, #tpu.memory_space<vmem>>, vector<8x64xf32>,
    %c0_75 = arith.constant 0 : index
    %c4_76 = arith.constant 4 : index
    %141 = vector.load %arg8[%c0_75, %c4_76] : memref<8x8xf32, #tpu.memory_space<vmem>>, vector<8x1xf32>
    tpu.vector_store %arg8[%c0_75, %c4_76], %123 {strides = array<i32>} : memref<8x8xf32, #tpu.memory_space<vmem>>, vector<8x1xf32>,
    %142 = vector.extract_strided_slice %4 {offsets = [0, 320], sizes = [8, 64], strides = [1, 1]} : vector<8x512xbf16> to vector<8x64xbf16>
    %143 = vector.extract_strided_slice %6 {offsets = [0, 320], sizes = [16, 64], strides = [1, 1]} : vector<16x1024xbf16> to vector<16x64xbf16>
    %144 = vector.extract_strided_slice %6 {offsets = [0, 832], sizes = [16, 64], strides = [1, 1]} : vector<16x1024xbf16> to vector<16x64xbf16>
    %cst_77 = arith.constant dense<0.000000e+00> : vector<8x16xf32>
    %145 = tpu.matmul %142, %143, %cst_77 {dimension_numbers = #tpu.dot_dimension_numbers<[1], [1], [0], [0], [0, 0, 1, 0], [], []>} : vector<8x64xbf16>, vector<16x64xbf16>, vector<8x16xf32> -> vector<8x16xf32>
    %c0_78 = arith.constant 0 : index
    %c5 = arith.constant 5 : index
    %146 = vector.load %arg8[%c0_78, %c5] : memref<8x8xf32, #tpu.memory_space<vmem>>, vector<8x1xf32>
    %c0_79 = arith.constant 0 : index
    %c5_80 = arith.constant 5 : index
    %147 = vector.load %arg9[%c0_79, %c5_80] : memref<8x8xf32, #tpu.memory_space<vmem>>, vector<8x1xf32>
    %cst_81 = arith.constant dense<0xFF800000> : vector<8xf32>
    %148 = vector.multi_reduction <maximumf>, %145, %cst_81 [1] : vector<8x16xf32> to vector<8xf32>
    %149 = vector.shape_cast %148 : vector<8xf32> to vector<8x1xf32>
    %150 = arith.maximumf %146, %149 : vector<8x1xf32>
    %151 = arith.subf %146, %150 : vector<8x1xf32>
    %152 = math.exp %151 : vector<8x1xf32>
    %153 = vector.broadcast %150 : vector<8x1xf32> to vector<8x16xf32>
    %154 = arith.subf %145, %153 : vector<8x16xf32>
    %155 = math.exp %154 : vector<8x16xf32>
    %156 = arith.mulf %152, %147 : vector<8x1xf32>
    %cst_82 = arith.constant dense<0.000000e+00> : vector<8xf32>
    %157 = vector.multi_reduction <add>, %155, %cst_82 [1] : vector<8x16xf32> to vector<8xf32>
    %158 = vector.shape_cast %157 : vector<8xf32> to vector<8x1xf32>
    %159 = arith.addf %156, %158 : vector<8x1xf32>
    %c0_83 = arith.constant 0 : index
    %c5_84 = arith.constant 5 : index
    %160 = vector.load %arg9[%c0_83, %c5_84] : memref<8x8xf32, #tpu.memory_space<vmem>>, vector<8x1xf32>
    tpu.vector_store %arg9[%c0_83, %c5_84], %159 {strides = array<i32>} : memref<8x8xf32, #tpu.memory_space<vmem>>, vector<8x1xf32>,
    %161 = arith.truncf %155 : vector<8x16xf32> to vector<8x16xbf16>
    %cst_85 = arith.constant dense<0.000000e+00> : vector<8x64xf32>
    %162 = tpu.matmul %161, %144, %cst_85 {dimension_numbers = #tpu.dot_dimension_numbers<[1], [0], [0], [1], [0, 0, 1, 1], [], []>} : vector<8x16xbf16>, vector<16x64xbf16>, vector<8x64xf32> -> vector<8x64xf32>
    %c0_86 = arith.constant 0 : index
    %c320 = arith.constant 320 : index
    %163 = vector.load %arg10[%c0_86, %c320] : memref<8x512xf32, #tpu.memory_space<vmem>>, vector<8x64xf32>
    %164 = vector.broadcast %152 : vector<8x1xf32> to vector<8x64xf32>
    %165 = arith.mulf %164, %163 : vector<8x64xf32>
    %166 = arith.addf %165, %162 : vector<8x64xf32>
    %c0_87 = arith.constant 0 : index
    %c320_88 = arith.constant 320 : index
    %167 = vector.load %arg10[%c0_87, %c320_88] : memref<8x512xf32, #tpu.memory_space<vmem>>, vector<8x64xf32>
    tpu.vector_store %arg10[%c0_87, %c320_88], %166 {strides = array<i32>} : memref<8x512xf32, #tpu.memory_space<vmem>>, vector<8x64xf32>,
    %c0_89 = arith.constant 0 : index
    %c5_90 = arith.constant 5 : index
    %168 = vector.load %arg8[%c0_89, %c5_90] : memref<8x8xf32, #tpu.memory_space<vmem>>, vector<8x1xf32>
    tpu.vector_store %arg8[%c0_89, %c5_90], %150 {strides = array<i32>} : memref<8x8xf32, #tpu.memory_space<vmem>>, vector<8x1xf32>,
    %169 = vector.extract_strided_slice %4 {offsets = [0, 384], sizes = [8, 64], strides = [1, 1]} : vector<8x512xbf16> to vector<8x64xbf16>
    %170 = vector.extract_strided_slice %6 {offsets = [0, 384], sizes = [16, 64], strides = [1, 1]} : vector<16x1024xbf16> to vector<16x64xbf16>
    %171 = vector.extract_strided_slice %6 {offsets = [0, 896], sizes = [16, 64], strides = [1, 1]} : vector<16x1024xbf16> to vector<16x64xbf16>
    %cst_91 = arith.constant dense<0.000000e+00> : vector<8x16xf32>
    %172 = tpu.matmul %169, %170, %cst_91 {dimension_numbers = #tpu.dot_dimension_numbers<[1], [1], [0], [0], [0, 0, 1, 0], [], []>} : vector<8x64xbf16>, vector<16x64xbf16>, vector<8x16xf32> -> vector<8x16xf32>
    %c0_92 = arith.constant 0 : index
    %c6 = arith.constant 6 : index
    %173 = vector.load %arg8[%c0_92, %c6] : memref<8x8xf32, #tpu.memory_space<vmem>>, vector<8x1xf32>
    %c0_93 = arith.constant 0 : index
    %c6_94 = arith.constant 6 : index
    %174 = vector.load %arg9[%c0_93, %c6_94] : memref<8x8xf32, #tpu.memory_space<vmem>>, vector<8x1xf32>
    %cst_95 = arith.constant dense<0xFF800000> : vector<8xf32>
    %175 = vector.multi_reduction <maximumf>, %172, %cst_95 [1] : vector<8x16xf32> to vector<8xf32>
    %176 = vector.shape_cast %175 : vector<8xf32> to vector<8x1xf32>
    %177 = arith.maximumf %173, %176 : vector<8x1xf32>
    %178 = arith.subf %173, %177 : vector<8x1xf32>
    %179 = math.exp %178 : vector<8x1xf32>
    %180 = vector.broadcast %177 : vector<8x1xf32> to vector<8x16xf32>
    %181 = arith.subf %172, %180 : vector<8x16xf32>
    %182 = math.exp %181 : vector<8x16xf32>
    %183 = arith.mulf %179, %174 : vector<8x1xf32>
    %cst_96 = arith.constant dense<0.000000e+00> : vector<8xf32>
    %184 = vector.multi_reduction <add>, %182, %cst_96 [1] : vector<8x16xf32> to vector<8xf32>
    %185 = vector.shape_cast %184 : vector<8xf32> to vector<8x1xf32>
    %186 = arith.addf %183, %185 : vector<8x1xf32>
    %c0_97 = arith.constant 0 : index
    %c6_98 = arith.constant 6 : index
    %187 = vector.load %arg9[%c0_97, %c6_98] : memref<8x8xf32, #tpu.memory_space<vmem>>, vector<8x1xf32>
    tpu.vector_store %arg9[%c0_97, %c6_98], %186 {strides = array<i32>} : memref<8x8xf32, #tpu.memory_space<vmem>>, vector<8x1xf32>,
    %188 = arith.truncf %182 : vector<8x16xf32> to vector<8x16xbf16>
    %cst_99 = arith.constant dense<0.000000e+00> : vector<8x64xf32>
    %189 = tpu.matmul %188, %171, %cst_99 {dimension_numbers = #tpu.dot_dimension_numbers<[1], [0], [0], [1], [0, 0, 1, 1], [], []>} : vector<8x16xbf16>, vector<16x64xbf16>, vector<8x64xf32> -> vector<8x64xf32>
    %c0_100 = arith.constant 0 : index
    %c384 = arith.constant 384 : index
    %190 = vector.load %arg10[%c0_100, %c384] : memref<8x512xf32, #tpu.memory_space<vmem>>, vector<8x64xf32>
    %191 = vector.broadcast %179 : vector<8x1xf32> to vector<8x64xf32>
    %192 = arith.mulf %191, %190 : vector<8x64xf32>
    %193 = arith.addf %192, %189 : vector<8x64xf32>
    %c0_101 = arith.constant 0 : index
    %c384_102 = arith.constant 384 : index
    %194 = vector.load %arg10[%c0_101, %c384_102] : memref<8x512xf32, #tpu.memory_space<vmem>>, vector<8x64xf32>
    tpu.vector_store %arg10[%c0_101, %c384_102], %193 {strides = array<i32>} : memref<8x512xf32, #tpu.memory_space<vmem>>, vector<8x64xf32>,
    %c0_103 = arith.constant 0 : index
    %c6_104 = arith.constant 6 : index
    %195 = vector.load %arg8[%c0_103, %c6_104] : memref<8x8xf32, #tpu.memory_space<vmem>>, vector<8x1xf32>
    tpu.vector_store %arg8[%c0_103, %c6_104], %177 {strides = array<i32>} : memref<8x8xf32, #tpu.memory_space<vmem>>, vector<8x1xf32>,
    %196 = vector.extract_strided_slice %4 {offsets = [0, 448], sizes = [8, 64], strides = [1, 1]} : vector<8x512xbf16> to vector<8x64xbf16>
    %197 = vector.extract_strided_slice %6 {offsets = [0, 448], sizes = [16, 64], strides = [1, 1]} : vector<16x1024xbf16> to vector<16x64xbf16>
    %198 = vector.extract_strided_slice %6 {offsets = [0, 960], sizes = [16, 64], strides = [1, 1]} : vector<16x1024xbf16> to vector<16x64xbf16>
    %cst_105 = arith.constant dense<0.000000e+00> : vector<8x16xf32>
    %199 = tpu.matmul %196, %197, %cst_105 {dimension_numbers = #tpu.dot_dimension_numbers<[1], [1], [0], [0], [0, 0, 1, 0], [], []>} : vector<8x64xbf16>, vector<16x64xbf16>, vector<8x16xf32> -> vector<8x16xf32>
    %c0_106 = arith.constant 0 : index
    %c7 = arith.constant 7 : index
    %200 = vector.load %arg8[%c0_106, %c7] : memref<8x8xf32, #tpu.memory_space<vmem>>, vector<8x1xf32>
    %c0_107 = arith.constant 0 : index
    %c7_108 = arith.constant 7 : index
    %201 = vector.load %arg9[%c0_107, %c7_108] : memref<8x8xf32, #tpu.memory_space<vmem>>, vector<8x1xf32>
    %cst_109 = arith.constant dense<0xFF800000> : vector<8xf32>
    %202 = vector.multi_reduction <maximumf>, %199, %cst_109 [1] : vector<8x16xf32> to vector<8xf32>
    %203 = vector.shape_cast %202 : vector<8xf32> to vector<8x1xf32>
    %204 = arith.maximumf %200, %203 : vector<8x1xf32>
    %205 = arith.subf %200, %204 : vector<8x1xf32>
    %206 = math.exp %205 : vector<8x1xf32>
    %207 = vector.broadcast %204 : vector<8x1xf32> to vector<8x16xf32>
    %208 = arith.subf %199, %207 : vector<8x16xf32>
    %209 = math.exp %208 : vector<8x16xf32>
    %210 = arith.mulf %206, %201 : vector<8x1xf32>
    %cst_110 = arith.constant dense<0.000000e+00> : vector<8xf32>
    %211 = vector.multi_reduction <add>, %209, %cst_110 [1] : vector<8x16xf32> to vector<8xf32>
    %212 = vector.shape_cast %211 : vector<8xf32> to vector<8x1xf32>
    %213 = arith.addf %210, %212 : vector<8x1xf32>
    %c0_111 = arith.constant 0 : index
    %c7_112 = arith.constant 7 : index
    %214 = vector.load %arg9[%c0_111, %c7_112] : memref<8x8xf32, #tpu.memory_space<vmem>>, vector<8x1xf32>
    tpu.vector_store %arg9[%c0_111, %c7_112], %213 {strides = array<i32>} : memref<8x8xf32, #tpu.memory_space<vmem>>, vector<8x1xf32>,
    %215 = arith.truncf %209 : vector<8x16xf32> to vector<8x16xbf16>
    %cst_113 = arith.constant dense<0.000000e+00> : vector<8x64xf32>
    %216 = tpu.matmul %215, %198, %cst_113 {dimension_numbers = #tpu.dot_dimension_numbers<[1], [0], [0], [1], [0, 0, 1, 1], [], []>} : vector<8x16xbf16>, vector<16x64xbf16>, vector<8x64xf32> -> vector<8x64xf32>
    %c0_114 = arith.constant 0 : index
    %c448 = arith.constant 448 : index
    %217 = vector.load %arg10[%c0_114, %c448] : memref<8x512xf32, #tpu.memory_space<vmem>>, vector<8x64xf32>
    %218 = vector.broadcast %206 : vector<8x1xf32> to vector<8x64xf32>
    %219 = arith.mulf %218, %217 : vector<8x64xf32>
    %220 = arith.addf %219, %216 : vector<8x64xf32>
    %c0_115 = arith.constant 0 : index
    %c448_116 = arith.constant 448 : index
    %221 = vector.load %arg10[%c0_115, %c448_116] : memref<8x512xf32, #tpu.memory_space<vmem>>, vector<8x64xf32>
    tpu.vector_store %arg10[%c0_115, %c448_116], %220 {strides = array<i32>} : memref<8x512xf32, #tpu.memory_space<vmem>>, vector<8x64xf32>,
    %c0_117 = arith.constant 0 : index
    %c7_118 = arith.constant 7 : index
    %222 = vector.load %arg8[%c0_117, %c7_118] : memref<8x8xf32, #tpu.memory_space<vmem>>, vector<8x1xf32>
    tpu.vector_store %arg8[%c0_117, %c7_118], %204 {strides = array<i32>} : memref<8x8xf32, #tpu.memory_space<vmem>>, vector<8x1xf32>,
    %c0_i32_119 = arith.constant 0 : i32
    %223 = arith.cmpi eq, %arg2, %c0_i32_119 : i32
    %224 = arith.extui %223 : i1 to i32
    %c0_i32_120 = arith.constant 0 : i32
    %225 = arith.cmpi ne, %224, %c0_i32_120 : i32
    scf.if %225 {
      %c0_121 = arith.constant 0 : index
      %c0_122 = arith.constant 0 : index
      %226 = vector.load %arg9[%c0_121, %c0_122] : memref<8x8xf32, #tpu.memory_space<vmem>>, vector<8x1xf32>
      %227 = tpu.reciprocal %226 {approx = true} : vector<8x1xf32> -> vector<8x1xf32>
      %c0_123 = arith.constant 0 : index
      %c0_124 = arith.constant 0 : index
      %228 = vector.load %arg10[%c0_123, %c0_124] : memref<8x512xf32, #tpu.memory_space<vmem>>, vector<8x64xf32>
      %229 = vector.broadcast %227 : vector<8x1xf32> to vector<8x64xf32>
      %230 = arith.mulf %228, %229 : vector<8x64xf32>
      %c0_125 = arith.constant 0 : index
      %c0_126 = arith.constant 0 : index
      %231 = vector.load %arg10[%c0_125, %c0_126] : memref<8x512xf32, #tpu.memory_space<vmem>>, vector<8x64xf32>
      tpu.vector_store %arg10[%c0_125, %c0_126], %230 {strides = array<i32>} : memref<8x512xf32, #tpu.memory_space<vmem>>, vector<8x64xf32>,
      %c0_127 = arith.constant 0 : index
      %c1_128 = arith.constant 1 : index
      %232 = vector.load %arg9[%c0_127, %c1_128] : memref<8x8xf32, #tpu.memory_space<vmem>>, vector<8x1xf32>
      %233 = tpu.reciprocal %232 {approx = true} : vector<8x1xf32> -> vector<8x1xf32>
      %c0_129 = arith.constant 0 : index
      %c64_130 = arith.constant 64 : index
      %234 = vector.load %arg10[%c0_129, %c64_130] : memref<8x512xf32, #tpu.memory_space<vmem>>, vector<8x64xf32>
      %235 = vector.broadcast %233 : vector<8x1xf32> to vector<8x64xf32>
      %236 = arith.mulf %234, %235 : vector<8x64xf32>
      %c0_131 = arith.constant 0 : index
      %c64_132 = arith.constant 64 : index
      %237 = vector.load %arg10[%c0_131, %c64_132] : memref<8x512xf32, #tpu.memory_space<vmem>>, vector<8x64xf32>
      tpu.vector_store %arg10[%c0_131, %c64_132], %236 {strides = array<i32>} : memref<8x512xf32, #tpu.memory_space<vmem>>, vector<8x64xf32>,
      %c0_133 = arith.constant 0 : index
      %c2_134 = arith.constant 2 : index
      %238 = vector.load %arg9[%c0_133, %c2_134] : memref<8x8xf32, #tpu.memory_space<vmem>>, vector<8x1xf32>
      %239 = tpu.reciprocal %238 {approx = true} : vector<8x1xf32> -> vector<8x1xf32>
      %c0_135 = arith.constant 0 : index
      %c128_136 = arith.constant 128 : index
      %240 = vector.load %arg10[%c0_135, %c128_136] : memref<8x512xf32, #tpu.memory_space<vmem>>, vector<8x64xf32>
      %241 = vector.broadcast %239 : vector<8x1xf32> to vector<8x64xf32>
      %242 = arith.mulf %240, %241 : vector<8x64xf32>
      %c0_137 = arith.constant 0 : index
      %c128_138 = arith.constant 128 : index
      %243 = vector.load %arg10[%c0_137, %c128_138] : memref<8x512xf32, #tpu.memory_space<vmem>>, vector<8x64xf32>
      tpu.vector_store %arg10[%c0_137, %c128_138], %242 {strides = array<i32>} : memref<8x512xf32, #tpu.memory_space<vmem>>, vector<8x64xf32>,
      %c0_139 = arith.constant 0 : index
      %c3_140 = arith.constant 3 : index
      %244 = vector.load %arg9[%c0_139, %c3_140] : memref<8x8xf32, #tpu.memory_space<vmem>>, vector<8x1xf32>
      %245 = tpu.reciprocal %244 {approx = true} : vector<8x1xf32> -> vector<8x1xf32>
      %c0_141 = arith.constant 0 : index
      %c192_142 = arith.constant 192 : index
      %246 = vector.load %arg10[%c0_141, %c192_142] : memref<8x512xf32, #tpu.memory_space<vmem>>, vector<8x64xf32>
      %247 = vector.broadcast %245 : vector<8x1xf32> to vector<8x64xf32>
      %248 = arith.mulf %246, %247 : vector<8x64xf32>
      %c0_143 = arith.constant 0 : index
      %c192_144 = arith.constant 192 : index
      %249 = vector.load %arg10[%c0_143, %c192_144] : memref<8x512xf32, #tpu.memory_space<vmem>>, vector<8x64xf32>
      tpu.vector_store %arg10[%c0_143, %c192_144], %248 {strides = array<i32>} : memref<8x512xf32, #tpu.memory_space<vmem>>, vector<8x64xf32>,
      %c0_145 = arith.constant 0 : index
      %c4_146 = arith.constant 4 : index
      %250 = vector.load %arg9[%c0_145, %c4_146] : memref<8x8xf32, #tpu.memory_space<vmem>>, vector<8x1xf32>
      %251 = tpu.reciprocal %250 {approx = true} : vector<8x1xf32> -> vector<8x1xf32>
      %c0_147 = arith.constant 0 : index
      %c256_148 = arith.constant 256 : index
      %252 = vector.load %arg10[%c0_147, %c256_148] : memref<8x512xf32, #tpu.memory_space<vmem>>, vector<8x64xf32>
      %253 = vector.broadcast %251 : vector<8x1xf32> to vector<8x64xf32>
      %254 = arith.mulf %252, %253 : vector<8x64xf32>
      %c0_149 = arith.constant 0 : index
      %c256_150 = arith.constant 256 : index
      %255 = vector.load %arg10[%c0_149, %c256_150] : memref<8x512xf32, #tpu.memory_space<vmem>>, vector<8x64xf32>
      tpu.vector_store %arg10[%c0_149, %c256_150], %254 {strides = array<i32>} : memref<8x512xf32, #tpu.memory_space<vmem>>, vector<8x64xf32>,
      %c0_151 = arith.constant 0 : index
      %c5_152 = arith.constant 5 : index
      %256 = vector.load %arg9[%c0_151, %c5_152] : memref<8x8xf32, #tpu.memory_space<vmem>>, vector<8x1xf32>
      %257 = tpu.reciprocal %256 {approx = true} : vector<8x1xf32> -> vector<8x1xf32>
      %c0_153 = arith.constant 0 : index
      %c320_154 = arith.constant 320 : index
      %258 = vector.load %arg10[%c0_153, %c320_154] : memref<8x512xf32, #tpu.memory_space<vmem>>, vector<8x64xf32>
      %259 = vector.broadcast %257 : vector<8x1xf32> to vector<8x64xf32>
      %260 = arith.mulf %258, %259 : vector<8x64xf32>
      %c0_155 = arith.constant 0 : index
      %c320_156 = arith.constant 320 : index
      %261 = vector.load %arg10[%c0_155, %c320_156] : memref<8x512xf32, #tpu.memory_space<vmem>>, vector<8x64xf32>
      tpu.vector_store %arg10[%c0_155, %c320_156], %260 {strides = array<i32>} : memref<8x512xf32, #tpu.memory_space<vmem>>, vector<8x64xf32>,
      %c0_157 = arith.constant 0 : index
      %c6_158 = arith.constant 6 : index
      %262 = vector.load %arg9[%c0_157, %c6_158] : memref<8x8xf32, #tpu.memory_space<vmem>>, vector<8x1xf32>
      %263 = tpu.reciprocal %262 {approx = true} : vector<8x1xf32> -> vector<8x1xf32>
      %c0_159 = arith.constant 0 : index
      %c384_160 = arith.constant 384 : index
      %264 = vector.load %arg10[%c0_159, %c384_160] : memref<8x512xf32, #tpu.memory_space<vmem>>, vector<8x64xf32>
      %265 = vector.broadcast %263 : vector<8x1xf32> to vector<8x64xf32>
      %266 = arith.mulf %264, %265 : vector<8x64xf32>
      %c0_161 = arith.constant 0 : index
      %c384_162 = arith.constant 384 : index
      %267 = vector.load %arg10[%c0_161, %c384_162] : memref<8x512xf32, #tpu.memory_space<vmem>>, vector<8x64xf32>
      tpu.vector_store %arg10[%c0_161, %c384_162], %266 {strides = array<i32>} : memref<8x512xf32, #tpu.memory_space<vmem>>, vector<8x64xf32>,
      %c0_163 = arith.constant 0 : index
      %c7_164 = arith.constant 7 : index
      %268 = vector.load %arg9[%c0_163, %c7_164] : memref<8x8xf32, #tpu.memory_space<vmem>>, vector<8x1xf32>
      %269 = tpu.reciprocal %268 {approx = true} : vector<8x1xf32> -> vector<8x1xf32>
      %c0_165 = arith.constant 0 : index
      %c448_166 = arith.constant 448 : index
      %270 = vector.load %arg10[%c0_165, %c448_166] : memref<8x512xf32, #tpu.memory_space<vmem>>, vector<8x64xf32>
      %271 = vector.broadcast %269 : vector<8x1xf32> to vector<8x64xf32>
      %272 = arith.mulf %270, %271 : vector<8x64xf32>
      %c0_167 = arith.constant 0 : index
      %c448_168 = arith.constant 448 : index
      %273 = vector.load %arg10[%c0_167, %c448_168] : memref<8x512xf32, #tpu.memory_space<vmem>>, vector<8x64xf32>
      tpu.vector_store %arg10[%c0_167, %c448_168], %272 {strides = array<i32>} : memref<8x512xf32, #tpu.memory_space<vmem>>, vector<8x64xf32>,
      %c0_169 = arith.constant 0 : index
      %c0_170 = arith.constant 0 : index
      %274 = vector.load %arg10[%c0_169, %c0_170] : memref<8x512xf32, #tpu.memory_space<vmem>>, vector<8x512xf32>
      %275 = arith.truncf %274 : vector<8x512xf32> to vector<8x512xbf16>
      %c0_171 = arith.constant 0 : index
      %c0_172 = arith.constant 0 : index
      %276 = vector.load %arg5[%c0_171, %c0_172] : memref<512x512xf32, #tpu.memory_space<vmem>>, vector<512x512xf32>
      %277 = arith.truncf %276 : vector<512x512xf32> to vector<512x512xbf16>
      %cst_173 = arith.constant dense<0.000000e+00> : vector<8x512xf32>
      %278 = tpu.matmul %275, %277, %cst_173 {dimension_numbers = #tpu.dot_dimension_numbers<[1], [1], [0], [0], [0, 0, 1, 0], [], []>} : vector<8x512xbf16>, vector<512x512xbf16>, vector<8x512xf32> -> vector<8x512xf32>
      %c0_174 = arith.constant 0 : index
      %c0_175 = arith.constant 0 : index
      %279 = vector.load %arg6[%c0_174, %c0_175] : memref<1x512xf32, #tpu.memory_space<vmem>>, vector<1x512xf32>
      %280 = vector.broadcast %279 : vector<1x512xf32> to vector<8x512xf32>
      %281 = arith.addf %278, %280 : vector<8x512xf32>
      %c0_176 = arith.constant 0 : index
      %c0_177 = arith.constant 0 : index
      %c0_178 = arith.constant 0 : index
      %282 = vector.load %arg7[%c0_176, %c0_177, %c0_178] : memref<1x8x512xf32, #tpu.memory_space<vmem>>, vector<1x8x512xf32>
      %283 = vector.shape_cast %282 : vector<1x8x512xf32> to vector<8x512xf32>
      %284 = vector.shape_cast %281 : vector<8x512xf32> to vector<1x8x512xf32>
      tpu.vector_store %arg7[%c0_176, %c0_177, %c0_178], %284 {strides = array<i32>} : memref<1x8x512xf32, #tpu.memory_space<vmem>>, vector<1x8x512xf32>,
    } else {
    }
    return
  }
  func.func @transform_0(%arg0: i32, %arg1: i32, %arg2: i32) -> (i32, i32, i32) {
    %c0_i32 = arith.constant 0 : i32
    %c0_i32_0 = arith.constant 0 : i32
    return %arg0, %arg1, %c0_i32 : i32, i32, i32
  }
  func.func @transform_1(%arg0: i32, %arg1: i32, %arg2: i32) -> (i32, i32, i32) {
    %c0_i32 = arith.constant 0 : i32
    %c0_i32_0 = arith.constant 0 : i32
    return %arg0, %arg2, %c0_i32 : i32, i32, i32
  }
  func.func @transform_2(%arg0: i32, %arg1: i32, %arg2: i32) -> (i32, i32) {
    %c0_i32 = arith.constant 0 : i32
    %c0_i32_0 = arith.constant 0 : i32
    %c0_i32_1 = arith.constant 0 : i32
    return %c0_i32, %c0_i32_0 : i32, i32
  }
  func.func @transform_3(%arg0: i32, %arg1: i32, %arg2: i32) -> (i32, i32) {
    %c0_i32 = arith.constant 0 : i32
    %c0_i32_0 = arith.constant 0 : i32
    %c0_i32_1 = arith.constant 0 : i32
    return %c0_i32, %c0_i32_0 : i32, i32
  }
  func.func @transform_4(%arg0: i32, %arg1: i32, %arg2: i32) -> (i32, i32, i32) {
    %c0_i32 = arith.constant 0 : i32
    %c0_i32_0 = arith.constant 0 : i32
    return %arg0, %arg1, %c0_i32 : i32, i32, i32
  }
}

</mosaic_0001>

<llo_original>
// kernel: mha_encoder_decoder_attention.3
$region0: #{mha_encoder_decoder_attention.3}
  #allocation0 [shape = 'u32[]', space=smem, size = 0x4, offset = 0x4, fixed_abs, tag = 'smem constant byte address 0x4 - core index']
  #allocation1 [shape = 'u32[144,128]{1,0:T(1,128)}', space=vmem, size = 0x12000, scoped, tag = 'internal scratch']
  %s0 = inlined_call_operand.vmem [shape: f32[16,512], index: 0, kind: input, shape index: {}]
  %s1 = inlined_call_operand.vmem [shape: f32[512,512], index: 1, kind: input, shape index: {}]
  %s2 = inlined_call_operand.vmem [shape: f32[1,512], index: 2, kind: input, shape index: {}]
  %s3 = inlined_call_operand.vmem [shape: bf16[16,512], index: 3, kind: output, shape index: {}]
  %s4 = sld [smem:[#allocation0]]
  $region79: #{mha_encoder_decoder_attention.3} parent=0
    _
  %s6 = ssub.s32 1, %s4
  %s7 = scalar_select 0, %s6, %s4
  $region1: #{mha_encoder_decoder_attention.3} parent=0
    #allocation2 [shape = 'u8[16384]{0}', space=vmem, size = 0x4000, scoped, tag = 'output window, operand 0']
    loop: start=0, step=1, limit=4
    $region2: #{mha_encoder_decoder_attention.3} parent=1 // loop_pre_header
      _
    $region3: #{mha_encoder_decoder_attention.3} parent=1 // loop_header
      %s9 = sphi 0, %s13
      %p10 = scmp.ge.s32.totalorder %s9, 4
      %s16 = sphi 0, %s28
      %s17 = sphi 0, %s24
      %s18 = sphi 0, %s16
      %s19 = sphi 0, %s17
      %s20 = sphi 0, %s18
      %s21 = sphi 0, %s19
      %s31 = sphi 0, %s33
      %s34 = sphi 0, %s31
      %s35 = sphi 0, %s34
      %s51 = sphi 0, %s35
      %s57 = sphi 0, %s59
      %s60 = sphi 0, %s57
      %s61 = sphi 0, %s60
      %s77 = sphi 0, %s61
      %s83 = sphi 0, %s85
      %s86 = sphi 0, %s83
      %s87 = sphi 0, %s86
      %s103 = sphi 0, %s87
      %s111 = sphi 0, %s113
      %s114 = sphi 0, %s111
      %s115 = sphi 0, %s114
      %s131 = sphi 0, %s115
    $region4: #{mha_encoder_decoder_attention.3} parent=1 // loop_header_branch
      %12 = sbr.rel (%p10) target = $region8
    $region5: #{mha_encoder_decoder_attention.3} parent=1 // loop_body
      %s14 = ssub.s32 %s9, 1
      %s15 = ssub.s32 %s9, 2
      %s22 = sadd.s32 1, %s17
      %p23 = scmp.ge.s32.totalorder %s22, 2
      %s24 = scalar_select %p23, 0, %s22
      %s25 = sadd.s32 1, %s16
      %s26 = scalar_select %p23, %s25, %s16
      %p27 = scmp.ge.s32.totalorder %s26, 1
      %s28 = scalar_select %p27, 0, %s26
      %s29 = ssub.s32 %s16, %s28
      %p30 = scmp.eq.s32.totalorder %s29, 0
      %s32 = sadd.s32 %s31, 1
      %s33 = scalar_select %p30, %s31, %s32
      %p36 = pneg %p30
      %p37 = scmp.eq.s32.totalorder %s9, 1
      %p38 = por %p36, %p37
      %p39 = scmp.ne.s32.totalorder %s31, %s34
      %p40 = scmp.eq.s32.totalorder %s9, 0
      %p41 = por %p39, %p40
      %p42 = scmp.ne.s32.totalorder %s31, %s34
      %p43 = scmp.eq.s32.totalorder %s14, 1
      %p44 = por %p42, %p43
      %p45 = scmp.ne.s32.totalorder %s34, %s35
      %p46 = scmp.eq.s32.totalorder %s14, 0
      %p47 = por %p45, %p46
      %p48 = scmp.ne.s32.totalorder %s34, %s35
      %p49 = scmp.eq.s32.totalorder %s15, 1
      %p50 = por %p48, %p49
      %p52 = scmp.ne.s32.totalorder %s35, %s51
      %p53 = scmp.eq.s32.totalorder %s15, 0
      %p54 = por %p52, %p53
      %s55 = ssub.s32 %s17, %s24
      %p56 = scmp.eq.s32.totalorder %s55, 0
      %s58 = sadd.s32 %s57, 1
      %s59 = scalar_select %p56, %s57, %s58
      %p62 = pneg %p56
      %p63 = scmp.eq.s32.totalorder %s9, 1
      %p64 = por %p62, %p63
      %p65 = scmp.ne.s32.totalorder %s57, %s60
      %p66 = scmp.eq.s32.totalorder %s9, 0
      %p67 = por %p65, %p66
      %p68 = scmp.ne.s32.totalorder %s57, %s60
      %p69 = scmp.eq.s32.totalorder %s14, 1
      %p70 = por %p68, %p69
      %p71 = scmp.ne.s32.totalorder %s60, %s61
      %p72 = scmp.eq.s32.totalorder %s14, 0
      %p73 = por %p71, %p72
      %p74 = scmp.ne.s32.totalorder %s60, %s61
      %p75 = scmp.eq.s32.totalorder %s15, 1
      %p76 = por %p74, %p75
      %p78 = scmp.ne.s32.totalorder %s61, %s77
      %p79 = scmp.eq.s32.totalorder %s15, 0
      %p80 = por %p78, %p79
      %s81 = ssub.s32 %s17, %s24
      %p82 = scmp.eq.s32.totalorder %s81, 0
      %s84 = sadd.s32 %s83, 1
      %s85 = scalar_select %p82, %s83, %s84
      %p88 = pneg %p82
      %p89 = scmp.eq.s32.totalorder %s9, 1
      %p90 = por %p88, %p89
      %p91 = scmp.ne.s32.totalorder %s83, %s86
      %p92 = scmp.eq.s32.totalorder %s9, 0
      %p93 = por %p91, %p92
      %p94 = scmp.ne.s32.totalorder %s83, %s86
      %p95 = scmp.eq.s32.totalorder %s14, 1
      %p96 = por %p94, %p95
      %p97 = scmp.ne.s32.totalorder %s86, %s87
      %p98 = scmp.eq.s32.totalorder %s14, 0
      %p99 = por %p97, %p98
      %p100 = scmp.ne.s32.totalorder %s86, %s87
      %p101 = scmp.eq.s32.totalorder %s15, 1
      %p102 = por %p100, %p101
      %p104 = scmp.ne.s32.totalorder %s87, %s103
      %p105 = scmp.eq.s32.totalorder %s15, 0
      %p106 = por %p104, %p105
      %s107 = ssub.s32 %s16, %s28
      %s108 = ssub.s32 %s17, %s24
      %s109 = sor.u32 %s107, %s108
      %p110 = scmp.eq.s32.totalorder %s109, 0
      %s112 = sadd.s32 %s111, 1
      %s113 = scalar_select %p110, %s111, %s112
      %p116 = pneg %p110
      %p117 = scmp.eq.s32.totalorder %s9, 1
      %p118 = por %p116, %p117
      %p119 = scmp.ne.s32.totalorder %s111, %s114
      %p120 = scmp.eq.s32.totalorder %s9, 0
      %p121 = por %p119, %p120
      %p122 = scmp.ne.s32.totalorder %s111, %s114
      %p123 = scmp.eq.s32.totalorder %s14, 1
      %p124 = por %p122, %p123
      %p125 = scmp.ne.s32.totalorder %s114, %s115
      %p126 = scmp.eq.s32.totalorder %s14, 0
      %p127 = por %p125, %p126
      %p128 = scmp.ne.s32.totalorder %s114, %s115
      %p129 = scmp.eq.s32.totalorder %s15, 1
      %p130 = por %p128, %p129
      %p132 = scmp.ne.s32.totalorder %s115, %s131
      %p133 = scmp.eq.s32.totalorder %s15, 0
      %p134 = por %p132, %p133
      %p135 = scmp.le.s32.totalorder 1, %s9
      %p136 = scmp.lt.s32.totalorder %s9, 3
      %p137 = pnand %p135, %p136
      %p138 = pneg %p137
      // Predicated region
      $region9: #{mha_encoder_decoder_attention.3} parent=5 // pred_check
        _
      $region10: #{mha_encoder_decoder_attention.3} parent=5 // pred_check_branch
        %140 = sbr.rel (%p137) target = $region12
      $region11: #{mha_encoder_decoder_attention.3} parent=5 // pred_region
        %s141 = ssub.s32 %s9, 1
        // Predicated region
        $region13: #{mha_encoder_decoder_attention.3} parent=11 // pred_check
          %p142 = pneg %p47
        $region14: #{mha_encoder_decoder_attention.3} parent=11 // pred_check_branch
          %144 = sbr.rel (%p142) target = $region16
        $region15: #{mha_encoder_decoder_attention.3} parent=11 // pred_region
          %s145 = smul.u32 2, %s18
          %p146 = scmp.lt.s32.totalorder %s145, 1
          %s147 = scalar_select %p146, %s145, 1
          %s148 = smul.addr %s147, 4
          %s149 = smul.addr %s148, 8
          %s150 = scalar_lea.vmem %s0, %s149
          %s151 = smul.u32 2, %s18
        $region16: #{mha_encoder_decoder_attention.3} parent=11 // pred_fallthru
          _
      $region12: #{mha_encoder_decoder_attention.3} parent=5 // pred_fallthru
        _
      %p152 = scmp.lt.s32.totalorder %s9, 2
      // Predicated region
      $region17: #{mha_encoder_decoder_attention.3} parent=5 // pred_check
        %p153 = pneg %p152
      $region18: #{mha_encoder_decoder_attention.3} parent=5 // pred_check_branch
        %155 = sbr.rel (%p153) target = $region20
      $region19: #{mha_encoder_decoder_attention.3} parent=5 // pred_region
        // Predicated region
        $region21: #{mha_encoder_decoder_attention.3} parent=19 // pred_check
          %p156 = pneg %p67
        $region22: #{mha_encoder_decoder_attention.3} parent=19 // pred_check_branch
          %158 = sbr.rel (%p156) target = $region24
        $region23: #{mha_encoder_decoder_attention.3} parent=19 // pred_region
          %s159 = smul.u32 32, %s17
          %p160 = scmp.lt.s32.totalorder %s159, 63
          %s161 = scalar_select %p160, %s159, 63
          %s162 = smul.addr %s161, 4
          %s163 = smul.addr %s162, 8
          %s164 = scalar_lea.vmem %s1, %s163
          %s165 = smul.u32 32, %s17
        $region24: #{mha_encoder_decoder_attention.3} parent=19 // pred_fallthru
          _
        // Predicated region
        $region25: #{mha_encoder_decoder_attention.3} parent=19 // pred_check
          %p166 = pneg %p93
        $region26: #{mha_encoder_decoder_attention.3} parent=19 // pred_check_branch
          %168 = sbr.rel (%p166) target = $region28
        $region27: #{mha_encoder_decoder_attention.3} parent=19 // pred_region
          %s169 = smul.u32 2, %s17
          %p170 = scmp.lt.s32.totalorder %s169, 3
          %s171 = scalar_select %p170, %s169, 3
          %s172 = scalar_lea.vmem %s2, %s171
          %s173 = smul.u32 2, %s17
        $region28: #{mha_encoder_decoder_attention.3} parent=19 // pred_fallthru
          _
      $region20: #{mha_encoder_decoder_attention.3} parent=5 // pred_fallthru
        _
      %p174 = scmp.le.s32.totalorder 1, %s9
      %p175 = scmp.lt.s32.totalorder %s9, 3
      %p176 = pnand %p174, %p175
      %p177 = pneg %p176
      // Predicated region
      $region29: #{mha_encoder_decoder_attention.3} parent=5 // pred_check
        _
      $region30: #{mha_encoder_decoder_attention.3} parent=5 // pred_check_branch
        %179 = sbr.rel (%p176) target = $region32
      $region31: #{mha_encoder_decoder_attention.3} parent=5 // pred_region
        %s180 = ssub.s32 %s9, 1
        %s181 = smul.u32 2, %s18
        %p182 = scmp.lt.s32.totalorder %s181, 1
        %s183 = scalar_select %p182, %s181, 1
        %s184 = smul.addr %s183, 4
        %s185 = smul.addr %s184, 8
        %s186 = scalar_lea.vmem %s0, %s185
        %p187 = pneg %p47
        %p188 = pneg %p44
        %s189 = smul.u32 32, %s19
        %p190 = scmp.lt.s32.totalorder %s189, 63
        %s191 = scalar_select %p190, %s189, 63
        %s192 = smul.addr %s191, 4
        %s193 = smul.addr %s192, 8
        %s194 = scalar_lea.vmem %s1, %s193
        %p195 = pneg %p73
        %p196 = pneg %p70
        %s197 = smul.u32 2, %s19
        %p198 = scmp.lt.s32.totalorder %s197, 3
        %s199 = scalar_select %p198, %s197, 3
        %s200 = scalar_lea.vmem %s2, %s199
        %p201 = pneg %p99
        %p202 = pneg %p96
        %p203 = pneg %p127
        %p204 = pneg %p124
        %s205 = sand.u32 %s114, 1
        %s206 = sand.u32 %s114, 1
        %s207 = smul.addr %s206, 16
        %s208 = scalar_lea.vmem [#allocation2], %s207
        %s209 = smul.u32 2, %s18
        %p210 = scmp.lt.s32.totalorder %s209, 1
        %s211 = scalar_select %p210, %s209, 1
        %s212 = smul.addr %s211, 4
        %s213 = smul.addr %s212, 8
        %s214 = scalar_lea.vmem %s0, %s213
        %s215 = smul.u32 2, %s18
        %s216 = smul.u32 32, %s19
        %p217 = scmp.lt.s32.totalorder %s216, 63
        %s218 = scalar_select %p217, %s216, 63
        %s219 = smul.addr %s218, 4
        %s220 = smul.addr %s219, 8
        %s221 = scalar_lea.vmem %s1, %s220
        %s222 = smul.u32 32, %s19
        %s223 = smul.u32 2, %s19
        %p224 = scmp.lt.s32.totalorder %s223, 3
        %s225 = scalar_select %p224, %s223, 3
        %s226 = scalar_lea.vmem %s2, %s225
        %s227 = smul.u32 2, %s19
        %s228 = smul.u32 2, %s18
        %s229 = smul.u32 2, %s19
        %v230 = vld [vmem:[%s214] sm:$0xff]
        %v231 = vld [vmem:[%s214 + $0x8] sm:$0xff]
        %v232 = vld [vmem:[%s214 + $0x10] sm:$0xff]
        %v233 = vld [vmem:[%s214 + $0x18] sm:$0xff]
        %v234 = vld [vmem:[%s214 + $0x20] sm:$0xff]
        %v235 = vld [vmem:[%s214 + $0x28] sm:$0xff]
        %v236 = vld [vmem:[%s214 + $0x30] sm:$0xff]
        %v237 = vld [vmem:[%s214 + $0x38] sm:$0xff]
        %v238 = vpack.c.bf16 %v234, %v230
        %v239 = vpack.c.bf16 %v235, %v231
        %v240 = vpack.c.bf16 %v236, %v232
        %v241 = vpack.c.bf16 %v237, %v233
        %v242 = vld [vmem:[%s221] sm:$0xff]
        %v243 = vld [vmem:[%s221 + $0x8] sm:$0xff]
        %v244 = vld [vmem:[%s221 + $0x10] sm:$0xff]
        %v245 = vld [vmem:[%s221 + $0x18] sm:$0xff]
        %v246 = vld [vmem:[%s221 + $0x20] sm:$0xff]
        %v247 = vld [vmem:[%s221 + $0x28] sm:$0xff]
        %v248 = vld [vmem:[%s221 + $0x30] sm:$0xff]
        %v249 = vld [vmem:[%s221 + $0x38] sm:$0xff]
        %v250 = vld [vmem:[%s221 + $0x40] sm:$0xff]
        %v251 = vld [vmem:[%s221 + $0x48] sm:$0xff]
        %v252 = vld [vmem:[%s221 + $0x50] sm:$0xff]
        %v253 = vld [vmem:[%s221 + $0x58] sm:$0xff]
        %v254 = vld [vmem:[%s221 + $0x60] sm:$0xff]
        %v255 = vld [vmem:[%s221 + $0x68] sm:$0xff]
        %v256 = vld [vmem:[%s221 + $0x70] sm:$0xff]
        %v257 = vld [vmem:[%s221 + $0x78] sm:$0xff]
        %v258 = vld [vmem:[%s221 + $0x80] sm:$0xff]
        %v259 = vld [vmem:[%s221 + $0x88] sm:$0xff]
        %v260 = vld [vmem:[%s221 + $0x90] sm:$0xff]
        %v261 = vld [vmem:[%s221 + $0x98] sm:$0xff]
        %v262 = vld [vmem:[%s221 + $0xa0] sm:$0xff]
        %v263 = vld [vmem:[%s221 + $0xa8] sm:$0xff]
        %v264 = vld [vmem:[%s221 + $0xb0] sm:$0xff]
        %v265 = vld [vmem:[%s221 + $0xb8] sm:$0xff]
        %v266 = vld [vmem:[%s221 + $0xc0] sm:$0xff]
        %v267 = vld [vmem:[%s221 + $0xc8] sm:$0xff]
        %v268 = vld [vmem:[%s221 + $0xd0] sm:$0xff]
        %v269 = vld [vmem:[%s221 + $0xd8] sm:$0xff]
        %v270 = vld [vmem:[%s221 + $0xe0] sm:$0xff]
        %v271 = vld [vmem:[%s221 + $0xe8] sm:$0xff]
        %v272 = vld [vmem:[%s221 + $0xf0] sm:$0xff]
        %v273 = vld [vmem:[%s221 + $0xf8] sm:$0xff]
        %v274 = vld [vmem:[%s221 + $0x100] sm:$0xff]
        %v275 = vld [vmem:[%s221 + $0x108] sm:$0xff]
        %v276 = vld [vmem:[%s221 + $0x110] sm:$0xff]
        %v277 = vld [vmem:[%s221 + $0x118] sm:$0xff]
        %v278 = vld [vmem:[%s221 + $0x120] sm:$0xff]
        %v279 = vld [vmem:[%s221 + $0x128] sm:$0xff]
        %v280 = vld [vmem:[%s221 + $0x130] sm:$0xff]
        %v281 = vld [vmem:[%s221 + $0x138] sm:$0xff]
        %v282 = vld [vmem:[%s221 + $0x140] sm:$0xff]
        %v283 = vld [vmem:[%s221 + $0x148] sm:$0xff]
        %v284 = vld [vmem:[%s221 + $0x150] sm:$0xff]
        %v285 = vld [vmem:[%s221 + $0x158] sm:$0xff]
        %v286 = vld [vmem:[%s221 + $0x160] sm:$0xff]
        %v287 = vld [vmem:[%s221 + $0x168] sm:$0xff]
        %v288 = vld [vmem:[%s221 + $0x170] sm:$0xff]
        %v289 = vld [vmem:[%s221 + $0x178] sm:$0xff]
        %v290 = vld [vmem:[%s221 + $0x180] sm:$0xff]
        %v291 = vld [vmem:[%s221 + $0x188] sm:$0xff]
        %v292 = vld [vmem:[%s221 + $0x190] sm:$0xff]
        %v293 = vld [vmem:[%s221 + $0x198] sm:$0xff]
        %v294 = vld [vmem:[%s221 + $0x1a0] sm:$0xff]
        %v295 = vld [vmem:[%s221 + $0x1a8] sm:$0xff]
        %v296 = vld [vmem:[%s221 + $0x1b0] sm:$0xff]
        %v297 = vld [vmem:[%s221 + $0x1b8] sm:$0xff]
        %v298 = vld [vmem:[%s221 + $0x1c0] sm:$0xff]
        %v299 = vld [vmem:[%s221 + $0x1c8] sm:$0xff]
        %v300 = vld [vmem:[%s221 + $0x1d0] sm:$0xff]
        %v301 = vld [vmem:[%s221 + $0x1d8] sm:$0xff]
        %v302 = vld [vmem:[%s221 + $0x1e0] sm:$0xff]
        %v303 = vld [vmem:[%s221 + $0x1e8] sm:$0xff]
        %v304 = vld [vmem:[%s221 + $0x1f0] sm:$0xff]
        %v305 = vld [vmem:[%s221 + $0x1f8] sm:$0xff]
        %v306 = vld [vmem:[%s221 + $0x200] sm:$0xff]
        %v307 = vld [vmem:[%s221 + $0x208] sm:$0xff]
        %v308 = vld [vmem:[%s221 + $0x210] sm:$0xff]
        %v309 = vld [vmem:[%s221 + $0x218] sm:$0xff]
        %v310 = vld [vmem:[%s221 + $0x220] sm:$0xff]
        %v311 = vld [vmem:[%s221 + $0x228] sm:$0xff]
        %v312 = vld [vmem:[%s221 + $0x230] sm:$0xff]
        %v313 = vld [vmem:[%s221 + $0x238] sm:$0xff]
        %v314 = vld [vmem:[%s221 + $0x240] sm:$0xff]
        %v315 = vld [vmem:[%s221 + $0x248] sm:$0xff]
        %v316 = vld [vmem:[%s221 + $0x250] sm:$0xff]
        %v317 = vld [vmem:[%s221 + $0x258] sm:$0xff]
        %v318 = vld [vmem:[%s221 + $0x260] sm:$0xff]
        %v319 = vld [vmem:[%s221 + $0x268] sm:$0xff]
        %v320 = vld [vmem:[%s221 + $0x270] sm:$0xff]
        %v321 = vld [vmem:[%s221 + $0x278] sm:$0xff]
        %v322 = vld [vmem:[%s221 + $0x280] sm:$0xff]
        %v323 = vld [vmem:[%s221 + $0x288] sm:$0xff]
        %v324 = vld [vmem:[%s221 + $0x290] sm:$0xff]
        %v325 = vld [vmem:[%s221 + $0x298] sm:$0xff]
        %v326 = vld [vmem:[%s221 + $0x2a0] sm:$0xff]
        %v327 = vld [vmem:[%s221 + $0x2a8] sm:$0xff]
        %v328 = vld [vmem:[%s221 + $0x2b0] sm:$0xff]
        %v329 = vld [vmem:[%s221 + $0x2b8] sm:$0xff]
        %v330 = vld [vmem:[%s221 + $0x2c0] sm:$0xff]
        %v331 = vld [vmem:[%s221 + $0x2c8] sm:$0xff]
        %v332 = vld [vmem:[%s221 + $0x2d0] sm:$0xff]
        %v333 = vld [vmem:[%s221 + $0x2d8] sm:$0xff]
        %v334 = vld [vmem:[%s221 + $0x2e0] sm:$0xff]
        %v335 = vld [vmem:[%s221 + $0x2e8] sm:$0xff]
        %v336 = vld [vmem:[%s221 + $0x2f0] sm:$0xff]
        %v337 = vld [vmem:[%s221 + $0x2f8] sm:$0xff]
        %v338 = vld [vmem:[%s221 + $0x300] sm:$0xff]
        %v339 = vld [vmem:[%s221 + $0x308] sm:$0xff]
        %v340 = vld [vmem:[%s221 + $0x310] sm:$0xff]
        %v341 = vld [vmem:[%s221 + $0x318] sm:$0xff]
        %v342 = vld [vmem:[%s221 + $0x320] sm:$0xff]
        %v343 = vld [vmem:[%s221 + $0x328] sm:$0xff]
        %v344 = vld [vmem:[%s221 + $0x330] sm:$0xff]
        %v345 = vld [vmem:[%s221 + $0x338] sm:$0xff]
        %v346 = vld [vmem:[%s221 + $0x340] sm:$0xff]
        %v347 = vld [vmem:[%s221 + $0x348] sm:$0xff]
        %v348 = vld [vmem:[%s221 + $0x350] sm:$0xff]
        %v349 = vld [vmem:[%s221 + $0x358] sm:$0xff]
        %v350 = vld [vmem:[%s221 + $0x360] sm:$0xff]
        %v351 = vld [vmem:[%s221 + $0x368] sm:$0xff]
        %v352 = vld [vmem:[%s221 + $0x370] sm:$0xff]
        %v353 = vld [vmem:[%s221 + $0x378] sm:$0xff]
        %v354 = vld [vmem:[%s221 + $0x380] sm:$0xff]
        %v355 = vld [vmem:[%s221 + $0x388] sm:$0xff]
        %v356 = vld [vmem:[%s221 + $0x390] sm:$0xff]
        %v357 = vld [vmem:[%s221 + $0x398] sm:$0xff]
        %v358 = vld [vmem:[%s221 + $0x3a0] sm:$0xff]
        %v359 = vld [vmem:[%s221 + $0x3a8] sm:$0xff]
        %v360 = vld [vmem:[%s221 + $0x3b0] sm:$0xff]
        %v361 = vld [vmem:[%s221 + $0x3b8] sm:$0xff]
        %v362 = vld [vmem:[%s221 + $0x3c0] sm:$0xff]
        %v363 = vld [vmem:[%s221 + $0x3c8] sm:$0xff]
        %v364 = vld [vmem:[%s221 + $0x3d0] sm:$0xff]
        %v365 = vld [vmem:[%s221 + $0x3d8] sm:$0xff]
        %v366 = vld [vmem:[%s221 + $0x3e0] sm:$0xff]
        %v367 = vld [vmem:[%s221 + $0x3e8] sm:$0xff]
        %v368 = vld [vmem:[%s221 + $0x3f0] sm:$0xff]
        %v369 = vld [vmem:[%s221 + $0x3f8] sm:$0xff]
        %v370 = vpack.c.bf16 %v246, %v242
        %v371 = vpack.c.bf16 %v247, %v243
        %v372 = vpack.c.bf16 %v248, %v244
        %v373 = vpack.c.bf16 %v249, %v245
        %v374 = vpack.c.bf16 %v254, %v250
        %v375 = vpack.c.bf16 %v255, %v251
        %v376 = vpack.c.bf16 %v256, %v252
        %v377 = vpack.c.bf16 %v257, %v253
        %v378 = vpack.c.bf16 %v262, %v258
        %v379 = vpack.c.bf16 %v263, %v259
        %v380 = vpack.c.bf16 %v264, %v260
        %v381 = vpack.c.bf16 %v265, %v261
        %v382 = vpack.c.bf16 %v270, %v266
        %v383 = vpack.c.bf16 %v271, %v267
        %v384 = vpack.c.bf16 %v272, %v268
        %v385 = vpack.c.bf16 %v273, %v269
        %v386 = vpack.c.bf16 %v278, %v274
        %v387 = vpack.c.bf16 %v279, %v275
        %v388 = vpack.c.bf16 %v280, %v276
        %v389 = vpack.c.bf16 %v281, %v277
        %v390 = vpack.c.bf16 %v286, %v282
        %v391 = vpack.c.bf16 %v287, %v283
        %v392 = vpack.c.bf16 %v288, %v284
        %v393 = vpack.c.bf16 %v289, %v285
        %v394 = vpack.c.bf16 %v294, %v290
        %v395 = vpack.c.bf16 %v295, %v291
        %v396 = vpack.c.bf16 %v296, %v292
        %v397 = vpack.c.bf16 %v297, %v293
        %v398 = vpack.c.bf16 %v302, %v298
        %v399 = vpack.c.bf16 %v303, %v299
        %v400 = vpack.c.bf16 %v304, %v300
        %v401 = vpack.c.bf16 %v305, %v301
        %v402 = vpack.c.bf16 %v310, %v306
        %v403 = vpack.c.bf16 %v311, %v307
        %v404 = vpack.c.bf16 %v312, %v308
        %v405 = vpack.c.bf16 %v313, %v309
        %v406 = vpack.c.bf16 %v318, %v314
        %v407 = vpack.c.bf16 %v319, %v315
        %v408 = vpack.c.bf16 %v320, %v316
        %v409 = vpack.c.bf16 %v321, %v317
        %v410 = vpack.c.bf16 %v326, %v322
        %v411 = vpack.c.bf16 %v327, %v323
        %v412 = vpack.c.bf16 %v328, %v324
        %v413 = vpack.c.bf16 %v329, %v325
        %v414 = vpack.c.bf16 %v334, %v330
        %v415 = vpack.c.bf16 %v335, %v331
        %v416 = vpack.c.bf16 %v336, %v332
        %v417 = vpack.c.bf16 %v337, %v333
        %v418 = vpack.c.bf16 %v342, %v338
        %v419 = vpack.c.bf16 %v343, %v339
        %v420 = vpack.c.bf16 %v344, %v340
        %v421 = vpack.c.bf16 %v345, %v341
        %v422 = vpack.c.bf16 %v350, %v346
        %v423 = vpack.c.bf16 %v351, %v347
        %v424 = vpack.c.bf16 %v352, %v348
        %v425 = vpack.c.bf16 %v353, %v349
        %v426 = vpack.c.bf16 %v358, %v354
        %v427 = vpack.c.bf16 %v359, %v355
        %v428 = vpack.c.bf16 %v360, %v356
        %v429 = vpack.c.bf16 %v361, %v357
        %v430 = vpack.c.bf16 %v366, %v362
        %v431 = vpack.c.bf16 %v367, %v363
        %v432 = vpack.c.bf16 %v368, %v364
        %v433 = vpack.c.bf16 %v369, %v365
        %v434 = vld [vmem:[%s226] sm:$0x3]
        %v436 = vlaneseq
        %v437 = vshrl.u32 %v436, 7
        %v438 = vsub.s32 0, %v437
        %v439 = vrot.slane %v434, %v438
        %v440 = vlaneseq
        %v441 = vshrl.u32 %v440, 7
        %v442 = vsub.s32 1, %v441
        %v443 = vrot.slane %v434, %v442
        %446 = vmatprep.subr.bf16.mxu0 %v399
        %447 = vmatpush1.bf16.xpose.msra.mxu0 %v398
        %448 = vmatprep.subr.bf16.mxu0 %v395
        %449 = vmatpush1.bf16.xpose.msra.mxu0 %v394
        %450 = vmatprep.subr.bf16.mxu0 %v391
        %451 = vmatpush1.bf16.xpose.msra.mxu0 %v390
        %452 = vmatprep.subr.bf16.mxu0 %v387
        %453 = vmatpush1.bf16.xpose.msra.mxu0 %v386
        %454 = vmatprep.subr.bf16.mxu0 %v383
        %455 = vmatpush1.bf16.xpose.msra.mxu0 %v382
        %456 = vmatprep.subr.bf16.mxu0 %v379
        %457 = vmatpush1.bf16.xpose.msra.mxu0 %v378
        %458 = vmatprep.subr.bf16.mxu0 %v375
        %459 = vmatpush1.bf16.xpose.msra.mxu0 %v374
        %460 = vmatprep.subr.bf16.mxu0 %v371
        %461 = vmatpush1.bf16.xpose.msra.mxu0 %v370
        %462 = vmatprep.subr.bf16.mxu0 %v431
        %463 = vmatpush2.bf16.xpose.msra.mxu0 %v430
        %464 = vmatprep.subr.bf16.mxu0 %v427
        %465 = vmatpush2.bf16.xpose.msra.mxu0 %v426
        %466 = vmatprep.subr.bf16.mxu0 %v423
        %467 = vmatpush2.bf16.xpose.msra.mxu0 %v422
        %468 = vmatprep.subr.bf16.mxu0 %v419
        %469 = vmatpush2.bf16.xpose.msra.mxu0 %v418
        %470 = vmatprep.subr.bf16.mxu0 %v415
        %471 = vmatpush2.bf16.xpose.msra.mxu0 %v414
        %472 = vmatprep.subr.bf16.mxu0 %v411
        %473 = vmatpush2.bf16.xpose.msra.mxu0 %v410
        %474 = vmatprep.subr.bf16.mxu0 %v407
        %475 = vmatpush2.bf16.xpose.msra.mxu0 %v406
        %476 = vmatprep.subr.bf16.mxu0 %v403
        %477 = vmatpush2.bf16.xpose.msra.mxu0 %v402
        %478 = vmatprep.mubr.bf16.mxu0 %v239
        %479 = vmatmul.mubr.bf16.gmra.mxu0 %v238
        %v480 = vpop.f32.mrf.mxu0
        %v481 = vadd.f32 %v439, %v480
        %v482 = vpop.f32.mrf.mxu0
        %v483 = vadd.f32 %v443, %v482
        %v484 = vpop.f32.mrf.mxu0
        %v485 = vadd.f32 %v439, %v484
        %v486 = vpop.f32.mrf.mxu0
        %v487 = vadd.f32 %v443, %v486
        %488 = vdwg.mxu0
        %489 = vmatprep.subr.bf16.mxu0 %v401
        %490 = vmatpush1.bf16.xpose.msra.mxu0 %v400
        %491 = vmatprep.subr.bf16.mxu0 %v397
        %492 = vmatpush1.bf16.xpose.msra.mxu0 %v396
        %493 = vmatprep.subr.bf16.mxu0 %v393
        %494 = vmatpush1.bf16.xpose.msra.mxu0 %v392
        %495 = vmatprep.subr.bf16.mxu0 %v389
        %496 = vmatpush1.bf16.xpose.msra.mxu0 %v388
        %497 = vmatprep.subr.bf16.mxu0 %v385
        %498 = vmatpush1.bf16.xpose.msra.mxu0 %v384
        %499 = vmatprep.subr.bf16.mxu0 %v381
        %500 = vmatpush1.bf16.xpose.msra.mxu0 %v380
        %501 = vmatprep.subr.bf16.mxu0 %v377
        %502 = vmatpush1.bf16.xpose.msra.mxu0 %v376
        %503 = vmatprep.subr.bf16.mxu0 %v373
        %504 = vmatpush1.bf16.xpose.msra.mxu0 %v372
        %505 = vmatprep.subr.bf16.mxu0 %v433
        %506 = vmatpush2.bf16.xpose.msra.mxu0 %v432
        %507 = vmatprep.subr.bf16.mxu0 %v429
        %508 = vmatpush2.bf16.xpose.msra.mxu0 %v428
        %509 = vmatprep.subr.bf16.mxu0 %v425
        %510 = vmatpush2.bf16.xpose.msra.mxu0 %v424
        %511 = vmatprep.subr.bf16.mxu0 %v421
        %512 = vmatpush2.bf16.xpose.msra.mxu0 %v420
        %513 = vmatprep.subr.bf16.mxu0 %v417
        %514 = vmatpush2.bf16.xpose.msra.mxu0 %v416
        %515 = vmatprep.subr.bf16.mxu0 %v413
        %516 = vmatpush2.bf16.xpose.msra.mxu0 %v412
        %517 = vmatprep.subr.bf16.mxu0 %v409
        %518 = vmatpush2.bf16.xpose.msra.mxu0 %v408
        %519 = vmatprep.subr.bf16.mxu0 %v405
        %520 = vmatpush2.bf16.xpose.msra.mxu0 %v404
        %521 = vmatprep.mubr.bf16.mxu0 %v241
        %522 = vmatmul.mubr.bf16.gmra.mxu0 %v240
        %v523 = vpop.f32.mrf.mxu0
        %v524 = vadd.f32 %v481, %v523
        %v525 = vpop.f32.mrf.mxu0
        %v526 = vadd.f32 %v483, %v525
        %v527 = vpop.f32.mrf.mxu0
        %v528 = vadd.f32 %v485, %v527
        %v529 = vpop.f32.mrf.mxu0
        %v530 = vadd.f32 %v487, %v529
        %531 = vdwg.mxu0
        %v532 = vpack.c.bf16 %v528, %v524
        %v533 = vpack.c.bf16 %v530, %v526
        %v536 = vunpack.c.l.b16 %v532
        %v537 = vunpack.c.l.b16 %v533
        %v538 = vunpack.c.h.b16 %v532
        %v539 = vunpack.c.h.b16 %v533
        %v540 = vpack.c.b16 %v537, %v536
        %v541 = vpack.c.b16 %v539, %v538
        %544 = vst [vmem:[%s208] sm:$0xff] %v540
        %545 = vst [vmem:[%s208 + $0x8] sm:$0xff] %v541
        %s546 = sand.u32 %s114, 1
        %s547 = sand.u32 %s114, 1
        %s548 = smul.addr %s547, 16
        %s549 = scalar_lea.vmem [#allocation2], %s548
        // Predicated region
        $region33: #{mha_encoder_decoder_attention.3} parent=31 // pred_check
          %p550 = pneg %p124
        $region34: #{mha_encoder_decoder_attention.3} parent=31 // pred_check_branch
          %552 = sbr.rel (%p550) target = $region36
        $region35: #{mha_encoder_decoder_attention.3} parent=31 // pred_region
          %s553 = smul.u32 2, %s18
          %s554 = smul.u32 2, %s19
          %s555 = smul.addr %s553, 4
          %s556 = sadd.s32 %s554, %s555
          %s557 = smul.addr %s556, 4
          %s558 = scalar_lea.vmem %s3, %s557
          // Predicated region
          $region37: #{mha_encoder_decoder_attention.3} parent=35 // pred_check
            _
          $region38: #{mha_encoder_decoder_attention.3} parent=35 // pred_check_branch
            %560 = sbr.rel (0) target = $region40
          $region39: #{mha_encoder_decoder_attention.3} parent=35 // pred_region
            // Predicated region
            $region41: #{mha_encoder_decoder_attention.3} parent=39 // pred_check
              _
            $region42: #{mha_encoder_decoder_attention.3} parent=39 // pred_check_branch
              %562 = sbr.rel (0) target = $region44
            $region43: #{mha_encoder_decoder_attention.3} parent=39 // pred_region
              // Predicated region
              $region56: #{mha_encoder_decoder_attention.3} parent=43 // pred_check
                _
              $region57: #{mha_encoder_decoder_attention.3} parent=43 // pred_check_branch
                %580 = sbr.rel (0) target = $region59
              $region58: #{mha_encoder_decoder_attention.3} parent=43 // pred_region
                loop: start=0, step=1, limit=1
                $region60: #{mha_encoder_decoder_attention.3} parent=58 // loop_pre_header
                  _
                $region61: #{mha_encoder_decoder_attention.3} parent=58 // loop_header
                  %s582 = sphi 0, %s586
                  %p583 = scmp.ge.s32.totalorder %s582, 1
                  %s587 = sphi %s549, %s549
                  %s588 = sphi %s558, %s558
                $region62: #{mha_encoder_decoder_attention.3} parent=58 // loop_header_branch
                  %585 = sbr.rel (%p583) target = $region66
                $region63: #{mha_encoder_decoder_attention.3} parent=58 // loop_body
                  %v589 = vld [vmem:[%s587] sm:$0xff]
                  %590 = vst [vmem:[%s588] sm:$0xff] %v589
                  %v591 = vld [vmem:[%s587 + $0x8] sm:$0xff]
                  %592 = vst [vmem:[%s588 + $0x10] sm:$0xff] %v591
                $region64: #{mha_encoder_decoder_attention.3} parent=58 // loop_footer
                  %s586 = sadd.s32 1, %s582
                $region65: #{mha_encoder_decoder_attention.3} parent=58 // loop_footer_branch
                  %581 = sbr.rel target = $region61
                $region66: #{mha_encoder_decoder_attention.3} parent=58 // loop_exit
                  _
              $region59: #{mha_encoder_decoder_attention.3} parent=43 // pred_fallthru
                _
              // Predicated region
              $region67: #{mha_encoder_decoder_attention.3} parent=43 // pred_check
                _
              $region68: #{mha_encoder_decoder_attention.3} parent=43 // pred_check_branch
                %594 = sbr.rel target = $region70
              $region69: #{mha_encoder_decoder_attention.3} parent=43 // pred_region
                _
              $region70: #{mha_encoder_decoder_attention.3} parent=43 // pred_fallthru
                _
            $region44: #{mha_encoder_decoder_attention.3} parent=39 // pred_fallthru
              _
            // Predicated region
            $region45: #{mha_encoder_decoder_attention.3} parent=39 // pred_check
              _
            $region46: #{mha_encoder_decoder_attention.3} parent=39 // pred_check_branch
              %564 = sbr.rel target = $region48
            $region47: #{mha_encoder_decoder_attention.3} parent=39 // pred_region
              %s566 = ssub.s32 256, 1
              loop: start=0, step=1, limit=1
              $region49: #{mha_encoder_decoder_attention.3} parent=47 // loop_pre_header
                _
              $region50: #{mha_encoder_decoder_attention.3} parent=47 // loop_header
                %s568 = sphi 0, %s572
                %p569 = scmp.ge.s32.totalorder %s568, 1
                %s573 = sphi %s549, %s549
                %s574 = sphi %s558, %s558
              $region51: #{mha_encoder_decoder_attention.3} parent=47 // loop_header_branch
                %571 = sbr.rel (%p569) target = $region55
              $region52: #{mha_encoder_decoder_attention.3} parent=47 // loop_body
                %v575 = vld [vmem:[%s573] sm:%s566]
                %576 = vst [vmem:[%s574] sm:%s566] %v575
                %v577 = vld [vmem:[%s573 + $0x8] sm:%s566]
                %578 = vst [vmem:[%s574 + $0x10] sm:%s566] %v577
              $region53: #{mha_encoder_decoder_attention.3} parent=47 // loop_footer
                %s572 = sadd.s32 1, %s568
              $region54: #{mha_encoder_decoder_attention.3} parent=47 // loop_footer_branch
                %567 = sbr.rel target = $region50
              $region55: #{mha_encoder_decoder_attention.3} parent=47 // loop_exit
                _
            $region48: #{mha_encoder_decoder_attention.3} parent=39 // pred_fallthru
              _
          $region40: #{mha_encoder_decoder_attention.3} parent=35 // pred_fallthru
            _
          %595 = vnop
        $region36: #{mha_encoder_decoder_attention.3} parent=31 // pred_fallthru
          _
      $region32: #{mha_encoder_decoder_attention.3} parent=5 // pred_fallthru
        _
      %p596 = scmp.le.s32.totalorder 2, %s9
      // Predicated region
      $region71: #{mha_encoder_decoder_attention.3} parent=5 // pred_check
        %p597 = pneg %p596
      $region72: #{mha_encoder_decoder_attention.3} parent=5 // pred_check_branch
        %599 = sbr.rel (%p597) target = $region74
      $region73: #{mha_encoder_decoder_attention.3} parent=5 // pred_region
        %s600 = ssub.s32 %s9, 2
        // Predicated region
        $region75: #{mha_encoder_decoder_attention.3} parent=73 // pred_check
          %p601 = pneg %p130
        $region76: #{mha_encoder_decoder_attention.3} parent=73 // pred_check_branch
          %603 = sbr.rel (%p601) target = $region78
        $region77: #{mha_encoder_decoder_attention.3} parent=73 // pred_region
          %s604 = sand.u32 %s115, 1
          %s605 = sand.u32 %s115, 1
          %s606 = smul.addr %s605, 16
          %s607 = scalar_lea.vmem [#allocation2], %s606
        $region78: #{mha_encoder_decoder_attention.3} parent=73 // pred_fallthru
          _
      $region74: #{mha_encoder_decoder_attention.3} parent=5 // pred_fallthru
        _
    $region6: #{mha_encoder_decoder_attention.3} parent=1 // loop_footer
      %s13 = sadd.s32 1, %s9
    $region7: #{mha_encoder_decoder_attention.3} parent=1 // loop_footer_branch
      %8 = sbr.rel target = $region3
    $region8: #{mha_encoder_decoder_attention.3} parent=1 // loop_exit
      _

// kernel: mha_encoder_decoder_attention.4
$region0: #{mha_encoder_decoder_attention.4}
  #allocation0 [shape = 'u32[]', space=smem, size = 0x4, offset = 0x4, fixed_abs, tag = 'smem constant byte address 0x4 - core index']
  #allocation1 [shape = 'u32[144,128]{1,0:T(1,128)}', space=vmem, size = 0x12000, scoped, tag = 'internal scratch']
  %s0 = inlined_call_operand.vmem [shape: f32[32,512], index: 0, kind: input, shape index: {}]
  %s1 = inlined_call_operand.vmem [shape: f32[1024,512], index: 1, kind: input, shape index: {}]
  %s2 = inlined_call_operand.vmem [shape: f32[1,1024], index: 2, kind: input, shape index: {}]
  %s3 = inlined_call_operand.vmem [shape: bf16[32,1024], index: 3, kind: output, shape index: {}]
  %s4 = sld [smem:[#allocation0]]
  $region79: #{mha_encoder_decoder_attention.4} parent=0
    _
  %s6 = ssub.s32 1, %s4
  %s7 = scalar_select 0, %s6, %s4
  $region1: #{mha_encoder_decoder_attention.4} parent=0
    #allocation2 [shape = 'u8[32768]{0}', space=vmem, size = 0x8000, scoped, tag = 'output window, operand 0']
    loop: start=0, step=1, limit=6
    $region2: #{mha_encoder_decoder_attention.4} parent=1 // loop_pre_header
      _
    $region3: #{mha_encoder_decoder_attention.4} parent=1 // loop_header
      %s9 = sphi 0, %s13
      %p10 = scmp.ge.s32.totalorder %s9, 6
      %s16 = sphi 0, %s28
      %s17 = sphi 0, %s24
      %s18 = sphi 0, %s16
      %s19 = sphi 0, %s17
      %s20 = sphi 0, %s18
      %s21 = sphi 0, %s19
      %s31 = sphi 0, %s33
      %s34 = sphi 0, %s31
      %s35 = sphi 0, %s34
      %s51 = sphi 0, %s35
      %s57 = sphi 0, %s59
      %s60 = sphi 0, %s57
      %s61 = sphi 0, %s60
      %s77 = sphi 0, %s61
      %s83 = sphi 0, %s85
      %s86 = sphi 0, %s83
      %s87 = sphi 0, %s86
      %s103 = sphi 0, %s87
      %s111 = sphi 0, %s113
      %s114 = sphi 0, %s111
      %s115 = sphi 0, %s114
      %s131 = sphi 0, %s115
    $region4: #{mha_encoder_decoder_attention.4} parent=1 // loop_header_branch
      %12 = sbr.rel (%p10) target = $region8
    $region5: #{mha_encoder_decoder_attention.4} parent=1 // loop_body
      %s14 = ssub.s32 %s9, 1
      %s15 = ssub.s32 %s9, 2
      %s22 = sadd.s32 1, %s17
      %p23 = scmp.ge.s32.totalorder %s22, 4
      %s24 = scalar_select %p23, 0, %s22
      %s25 = sadd.s32 1, %s16
      %s26 = scalar_select %p23, %s25, %s16
      %p27 = scmp.ge.s32.totalorder %s26, 1
      %s28 = scalar_select %p27, 0, %s26
      %s29 = ssub.s32 %s16, %s28
      %p30 = scmp.eq.s32.totalorder %s29, 0
      %s32 = sadd.s32 %s31, 1
      %s33 = scalar_select %p30, %s31, %s32
      %p36 = pneg %p30
      %p37 = scmp.eq.s32.totalorder %s9, 3
      %p38 = por %p36, %p37
      %p39 = scmp.ne.s32.totalorder %s31, %s34
      %p40 = scmp.eq.s32.totalorder %s9, 0
      %p41 = por %p39, %p40
      %p42 = scmp.ne.s32.totalorder %s31, %s34
      %p43 = scmp.eq.s32.totalorder %s14, 3
      %p44 = por %p42, %p43
      %p45 = scmp.ne.s32.totalorder %s34, %s35
      %p46 = scmp.eq.s32.totalorder %s14, 0
      %p47 = por %p45, %p46
      %p48 = scmp.ne.s32.totalorder %s34, %s35
      %p49 = scmp.eq.s32.totalorder %s15, 3
      %p50 = por %p48, %p49
      %p52 = scmp.ne.s32.totalorder %s35, %s51
      %p53 = scmp.eq.s32.totalorder %s15, 0
      %p54 = por %p52, %p53
      %s55 = ssub.s32 %s17, %s24
      %p56 = scmp.eq.s32.totalorder %s55, 0
      %s58 = sadd.s32 %s57, 1
      %s59 = scalar_select %p56, %s57, %s58
      %p62 = pneg %p56
      %p63 = scmp.eq.s32.totalorder %s9, 3
      %p64 = por %p62, %p63
      %p65 = scmp.ne.s32.totalorder %s57, %s60
      %p66 = scmp.eq.s32.totalorder %s9, 0
      %p67 = por %p65, %p66
      %p68 = scmp.ne.s32.totalorder %s57, %s60
      %p69 = scmp.eq.s32.totalorder %s14, 3
      %p70 = por %p68, %p69
      %p71 = scmp.ne.s32.totalorder %s60, %s61
      %p72 = scmp.eq.s32.totalorder %s14, 0
      %p73 = por %p71, %p72
      %p74 = scmp.ne.s32.totalorder %s60, %s61
      %p75 = scmp.eq.s32.totalorder %s15, 3
      %p76 = por %p74, %p75
      %p78 = scmp.ne.s32.totalorder %s61, %s77
      %p79 = scmp.eq.s32.totalorder %s15, 0
      %p80 = por %p78, %p79
      %s81 = ssub.s32 %s17, %s24
      %p82 = scmp.eq.s32.totalorder %s81, 0
      %s84 = sadd.s32 %s83, 1
      %s85 = scalar_select %p82, %s83, %s84
      %p88 = pneg %p82
      %p89 = scmp.eq.s32.totalorder %s9, 3
      %p90 = por %p88, %p89
      %p91 = scmp.ne.s32.totalorder %s83, %s86
      %p92 = scmp.eq.s32.totalorder %s9, 0
      %p93 = por %p91, %p92
      %p94 = scmp.ne.s32.totalorder %s83, %s86
      %p95 = scmp.eq.s32.totalorder %s14, 3
      %p96 = por %p94, %p95
      %p97 = scmp.ne.s32.totalorder %s86, %s87
      %p98 = scmp.eq.s32.totalorder %s14, 0
      %p99 = por %p97, %p98
      %p100 = scmp.ne.s32.totalorder %s86, %s87
      %p101 = scmp.eq.s32.totalorder %s15, 3
      %p102 = por %p100, %p101
      %p104 = scmp.ne.s32.totalorder %s87, %s103
      %p105 = scmp.eq.s32.totalorder %s15, 0
      %p106 = por %p104, %p105
      %s107 = ssub.s32 %s16, %s28
      %s108 = ssub.s32 %s17, %s24
      %s109 = sor.u32 %s107, %s108
      %p110 = scmp.eq.s32.totalorder %s109, 0
      %s112 = sadd.s32 %s111, 1
      %s113 = scalar_select %p110, %s111, %s112
      %p116 = pneg %p110
      %p117 = scmp.eq.s32.totalorder %s9, 3
      %p118 = por %p116, %p117
      %p119 = scmp.ne.s32.totalorder %s111, %s114
      %p120 = scmp.eq.s32.totalorder %s9, 0
      %p121 = por %p119, %p120
      %p122 = scmp.ne.s32.totalorder %s111, %s114
      %p123 = scmp.eq.s32.totalorder %s14, 3
      %p124 = por %p122, %p123
      %p125 = scmp.ne.s32.totalorder %s114, %s115
      %p126 = scmp.eq.s32.totalorder %s14, 0
      %p127 = por %p125, %p126
      %p128 = scmp.ne.s32.totalorder %s114, %s115
      %p129 = scmp.eq.s32.totalorder %s15, 3
      %p130 = por %p128, %p129
      %p132 = scmp.ne.s32.totalorder %s115, %s131
      %p133 = scmp.eq.s32.totalorder %s15, 0
      %p134 = por %p132, %p133
      %p135 = scmp.le.s32.totalorder 1, %s9
      %p136 = scmp.lt.s32.totalorder %s9, 5
      %p137 = pnand %p135, %p136
      %p138 = pneg %p137
      // Predicated region
      $region9: #{mha_encoder_decoder_attention.4} parent=5 // pred_check
        _
      $region10: #{mha_encoder_decoder_attention.4} parent=5 // pred_check_branch
        %140 = sbr.rel (%p137) target = $region12
      $region11: #{mha_encoder_decoder_attention.4} parent=5 // pred_region
        %s141 = ssub.s32 %s9, 1
        // Predicated region
        $region13: #{mha_encoder_decoder_attention.4} parent=11 // pred_check
          %p142 = pneg %p47
        $region14: #{mha_encoder_decoder_attention.4} parent=11 // pred_check_branch
          %144 = sbr.rel (%p142) target = $region16
        $region15: #{mha_encoder_decoder_attention.4} parent=11 // pred_region
          %s145 = smul.u32 4, %s18
          %p146 = scmp.lt.s32.totalorder %s145, 3
          %s147 = scalar_select %p146, %s145, 3
          %s148 = smul.addr %s147, 4
          %s149 = smul.addr %s148, 8
          %s150 = scalar_lea.vmem %s0, %s149
          %s151 = smul.u32 4, %s18
        $region16: #{mha_encoder_decoder_attention.4} parent=11 // pred_fallthru
          _
      $region12: #{mha_encoder_decoder_attention.4} parent=5 // pred_fallthru
        _
      %p152 = scmp.lt.s32.totalorder %s9, 4
      // Predicated region
      $region17: #{mha_encoder_decoder_attention.4} parent=5 // pred_check
        %p153 = pneg %p152
      $region18: #{mha_encoder_decoder_attention.4} parent=5 // pred_check_branch
        %155 = sbr.rel (%p153) target = $region20
      $region19: #{mha_encoder_decoder_attention.4} parent=5 // pred_region
        // Predicated region
        $region21: #{mha_encoder_decoder_attention.4} parent=19 // pred_check
          %p156 = pneg %p67
        $region22: #{mha_encoder_decoder_attention.4} parent=19 // pred_check_branch
          %158 = sbr.rel (%p156) target = $region24
        $region23: #{mha_encoder_decoder_attention.4} parent=19 // pred_region
          %s159 = smul.u32 32, %s17
          %p160 = scmp.lt.s32.totalorder %s159, 127
          %s161 = scalar_select %p160, %s159, 127
          %s162 = smul.addr %s161, 4
          %s163 = smul.addr %s162, 8
          %s164 = scalar_lea.vmem %s1, %s163
          %s165 = smul.u32 32, %s17
        $region24: #{mha_encoder_decoder_attention.4} parent=19 // pred_fallthru
          _
        // Predicated region
        $region25: #{mha_encoder_decoder_attention.4} parent=19 // pred_check
          %p166 = pneg %p93
        $region26: #{mha_encoder_decoder_attention.4} parent=19 // pred_check_branch
          %168 = sbr.rel (%p166) target = $region28
        $region27: #{mha_encoder_decoder_attention.4} parent=19 // pred_region
          %s169 = smul.u32 2, %s17
          %p170 = scmp.lt.s32.totalorder %s169, 7
          %s171 = scalar_select %p170, %s169, 7
          %s172 = scalar_lea.vmem %s2, %s171
          %s173 = smul.u32 2, %s17
        $region28: #{mha_encoder_decoder_attention.4} parent=19 // pred_fallthru
          _
      $region20: #{mha_encoder_decoder_attention.4} parent=5 // pred_fallthru
        _
      %p174 = scmp.le.s32.totalorder 1, %s9
      %p175 = scmp.lt.s32.totalorder %s9, 5
      %p176 = pnand %p174, %p175
      %p177 = pneg %p176
      // Predicated region
      $region29: #{mha_encoder_decoder_attention.4} parent=5 // pred_check
        _
      $region30: #{mha_encoder_decoder_attention.4} parent=5 // pred_check_branch
        %179 = sbr.rel (%p176) target = $region32
      $region31: #{mha_encoder_decoder_attention.4} parent=5 // pred_region
        %s180 = ssub.s32 %s9, 1
        %s181 = smul.u32 4, %s18
        %p182 = scmp.lt.s32.totalorder %s181, 3
        %s183 = scalar_select %p182, %s181, 3
        %s184 = smul.addr %s183, 4
        %s185 = smul.addr %s184, 8
        %s186 = scalar_lea.vmem %s0, %s185
        %p187 = pneg %p47
        %p188 = pneg %p44
        %s189 = smul.u32 32, %s19
        %p190 = scmp.lt.s32.totalorder %s189, 127
        %s191 = scalar_select %p190, %s189, 127
        %s192 = smul.addr %s191, 4
        %s193 = smul.addr %s192, 8
        %s194 = scalar_lea.vmem %s1, %s193
        %p195 = pneg %p73
        %p196 = pneg %p70
        %s197 = smul.u32 2, %s19
        %p198 = scmp.lt.s32.totalorder %s197, 7
        %s199 = scalar_select %p198, %s197, 7
        %s200 = scalar_lea.vmem %s2, %s199
        %p201 = pneg %p99
        %p202 = pneg %p96
        %p203 = pneg %p127
        %p204 = pneg %p124
        %s205 = sand.u32 %s114, 1
        %s206 = sand.u32 %s114, 1
        %s207 = smul.addr %s206, 32
        %s208 = scalar_lea.vmem [#allocation2], %s207
        %s209 = smul.u32 4, %s18
        %p210 = scmp.lt.s32.totalorder %s209, 3
        %s211 = scalar_select %p210, %s209, 3
        %s212 = smul.addr %s211, 4
        %s213 = smul.addr %s212, 8
        %s214 = scalar_lea.vmem %s0, %s213
        %s215 = smul.u32 4, %s18
        %s216 = smul.u32 32, %s19
        %p217 = scmp.lt.s32.totalorder %s216, 127
        %s218 = scalar_select %p217, %s216, 127
        %s219 = smul.addr %s218, 4
        %s220 = smul.addr %s219, 8
        %s221 = scalar_lea.vmem %s1, %s220
        %s222 = smul.u32 32, %s19
        %s223 = smul.u32 2, %s19
        %p224 = scmp.lt.s32.totalorder %s223, 7
        %s225 = scalar_select %p224, %s223, 7
        %s226 = scalar_lea.vmem %s2, %s225
        %s227 = smul.u32 2, %s19
        %s228 = smul.u32 4, %s18
        %s229 = smul.u32 2, %s19
        %v230 = vld [vmem:[%s214] sm:$0xff]
        %v231 = vld [vmem:[%s214 + $0x8] sm:$0xff]
        %v232 = vld [vmem:[%s214 + $0x10] sm:$0xff]
        %v233 = vld [vmem:[%s214 + $0x18] sm:$0xff]
        %v234 = vld [vmem:[%s214 + $0x20] sm:$0xff]
        %v235 = vld [vmem:[%s214 + $0x28] sm:$0xff]
        %v236 = vld [vmem:[%s214 + $0x30] sm:$0xff]
        %v237 = vld [vmem:[%s214 + $0x38] sm:$0xff]
        %v238 = vld [vmem:[%s214 + $0x40] sm:$0xff]
        %v239 = vld [vmem:[%s214 + $0x48] sm:$0xff]
        %v240 = vld [vmem:[%s214 + $0x50] sm:$0xff]
        %v241 = vld [vmem:[%s214 + $0x58] sm:$0xff]
        %v242 = vld [vmem:[%s214 + $0x60] sm:$0xff]
        %v243 = vld [vmem:[%s214 + $0x68] sm:$0xff]
        %v244 = vld [vmem:[%s214 + $0x70] sm:$0xff]
        %v245 = vld [vmem:[%s214 + $0x78] sm:$0xff]
        %v246 = vpack.c.bf16 %v234, %v230
        %v247 = vpack.c.bf16 %v235, %v231
        %v248 = vpack.c.bf16 %v236, %v232
        %v249 = vpack.c.bf16 %v237, %v233
        %v250 = vpack.c.bf16 %v242, %v238
        %v251 = vpack.c.bf16 %v243, %v239
        %v252 = vpack.c.bf16 %v244, %v240
        %v253 = vpack.c.bf16 %v245, %v241
        %v254 = vld [vmem:[%s221] sm:$0xff]
        %v255 = vld [vmem:[%s221 + $0x8] sm:$0xff]
        %v256 = vld [vmem:[%s221 + $0x10] sm:$0xff]
        %v257 = vld [vmem:[%s221 + $0x18] sm:$0xff]
        %v258 = vld [vmem:[%s221 + $0x20] sm:$0xff]
        %v259 = vld [vmem:[%s221 + $0x28] sm:$0xff]
        %v260 = vld [vmem:[%s221 + $0x30] sm:$0xff]
        %v261 = vld [vmem:[%s221 + $0x38] sm:$0xff]
        %v262 = vld [vmem:[%s221 + $0x40] sm:$0xff]
        %v263 = vld [vmem:[%s221 + $0x48] sm:$0xff]
        %v264 = vld [vmem:[%s221 + $0x50] sm:$0xff]
        %v265 = vld [vmem:[%s221 + $0x58] sm:$0xff]
        %v266 = vld [vmem:[%s221 + $0x60] sm:$0xff]
        %v267 = vld [vmem:[%s221 + $0x68] sm:$0xff]
        %v268 = vld [vmem:[%s221 + $0x70] sm:$0xff]
        %v269 = vld [vmem:[%s221 + $0x78] sm:$0xff]
        %v270 = vld [vmem:[%s221 + $0x80] sm:$0xff]
        %v271 = vld [vmem:[%s221 + $0x88] sm:$0xff]
        %v272 = vld [vmem:[%s221 + $0x90] sm:$0xff]
        %v273 = vld [vmem:[%s221 + $0x98] sm:$0xff]
        %v274 = vld [vmem:[%s221 + $0xa0] sm:$0xff]
        %v275 = vld [vmem:[%s221 + $0xa8] sm:$0xff]
        %v276 = vld [vmem:[%s221 + $0xb0] sm:$0xff]
        %v277 = vld [vmem:[%s221 + $0xb8] sm:$0xff]
        %v278 = vld [vmem:[%s221 + $0xc0] sm:$0xff]
        %v279 = vld [vmem:[%s221 + $0xc8] sm:$0xff]
        %v280 = vld [vmem:[%s221 + $0xd0] sm:$0xff]
        %v281 = vld [vmem:[%s221 + $0xd8] sm:$0xff]
        %v282 = vld [vmem:[%s221 + $0xe0] sm:$0xff]
        %v283 = vld [vmem:[%s221 + $0xe8] sm:$0xff]
        %v284 = vld [vmem:[%s221 + $0xf0] sm:$0xff]
        %v285 = vld [vmem:[%s221 + $0xf8] sm:$0xff]
        %v286 = vld [vmem:[%s221 + $0x100] sm:$0xff]
        %v287 = vld [vmem:[%s221 + $0x108] sm:$0xff]
        %v288 = vld [vmem:[%s221 + $0x110] sm:$0xff]
        %v289 = vld [vmem:[%s221 + $0x118] sm:$0xff]
        %v290 = vld [vmem:[%s221 + $0x120] sm:$0xff]
        %v291 = vld [vmem:[%s221 + $0x128] sm:$0xff]
        %v292 = vld [vmem:[%s221 + $0x130] sm:$0xff]
        %v293 = vld [vmem:[%s221 + $0x138] sm:$0xff]
        %v294 = vld [vmem:[%s221 + $0x140] sm:$0xff]
        %v295 = vld [vmem:[%s221 + $0x148] sm:$0xff]
        %v296 = vld [vmem:[%s221 + $0x150] sm:$0xff]
        %v297 = vld [vmem:[%s221 + $0x158] sm:$0xff]
        %v298 = vld [vmem:[%s221 + $0x160] sm:$0xff]
        %v299 = vld [vmem:[%s221 + $0x168] sm:$0xff]
        %v300 = vld [vmem:[%s221 + $0x170] sm:$0xff]
        %v301 = vld [vmem:[%s221 + $0x178] sm:$0xff]
        %v302 = vld [vmem:[%s221 + $0x180] sm:$0xff]
        %v303 = vld [vmem:[%s221 + $0x188] sm:$0xff]
        %v304 = vld [vmem:[%s221 + $0x190] sm:$0xff]
        %v305 = vld [vmem:[%s221 + $0x198] sm:$0xff]
        %v306 = vld [vmem:[%s221 + $0x1a0] sm:$0xff]
        %v307 = vld [vmem:[%s221 + $0x1a8] sm:$0xff]
        %v308 = vld [vmem:[%s221 + $0x1b0] sm:$0xff]
        %v309 = vld [vmem:[%s221 + $0x1b8] sm:$0xff]
        %v310 = vld [vmem:[%s221 + $0x1c0] sm:$0xff]
        %v311 = vld [vmem:[%s221 + $0x1c8] sm:$0xff]
        %v312 = vld [vmem:[%s221 + $0x1d0] sm:$0xff]
        %v313 = vld [vmem:[%s221 + $0x1d8] sm:$0xff]
        %v314 = vld [vmem:[%s221 + $0x1e0] sm:$0xff]
        %v315 = vld [vmem:[%s221 + $0x1e8] sm:$0xff]
        %v316 = vld [vmem:[%s221 + $0x1f0] sm:$0xff]
        %v317 = vld [vmem:[%s221 + $0x1f8] sm:$0xff]
        %v318 = vld [vmem:[%s221 + $0x200] sm:$0xff]
        %v319 = vld [vmem:[%s221 + $0x208] sm:$0xff]
        %v320 = vld [vmem:[%s221 + $0x210] sm:$0xff]
        %v321 = vld [vmem:[%s221 + $0x218] sm:$0xff]
        %v322 = vld [vmem:[%s221 + $0x220] sm:$0xff]
        %v323 = vld [vmem:[%s221 + $0x228] sm:$0xff]
        %v324 = vld [vmem:[%s221 + $0x230] sm:$0xff]
        %v325 = vld [vmem:[%s221 + $0x238] sm:$0xff]
        %v326 = vld [vmem:[%s221 + $0x240] sm:$0xff]
        %v327 = vld [vmem:[%s221 + $0x248] sm:$0xff]
        %v328 = vld [vmem:[%s221 + $0x250] sm:$0xff]
        %v329 = vld [vmem:[%s221 + $0x258] sm:$0xff]
        %v330 = vld [vmem:[%s221 + $0x260] sm:$0xff]
        %v331 = vld [vmem:[%s221 + $0x268] sm:$0xff]
        %v332 = vld [vmem:[%s221 + $0x270] sm:$0xff]
        %v333 = vld [vmem:[%s221 + $0x278] sm:$0xff]
        %v334 = vld [vmem:[%s221 + $0x280] sm:$0xff]
        %v335 = vld [vmem:[%s221 + $0x288] sm:$0xff]
        %v336 = vld [vmem:[%s221 + $0x290] sm:$0xff]
        %v337 = vld [vmem:[%s221 + $0x298] sm:$0xff]
        %v338 = vld [vmem:[%s221 + $0x2a0] sm:$0xff]
        %v339 = vld [vmem:[%s221 + $0x2a8] sm:$0xff]
        %v340 = vld [vmem:[%s221 + $0x2b0] sm:$0xff]
        %v341 = vld [vmem:[%s221 + $0x2b8] sm:$0xff]
        %v342 = vld [vmem:[%s221 + $0x2c0] sm:$0xff]
        %v343 = vld [vmem:[%s221 + $0x2c8] sm:$0xff]
        %v344 = vld [vmem:[%s221 + $0x2d0] sm:$0xff]
        %v345 = vld [vmem:[%s221 + $0x2d8] sm:$0xff]
        %v346 = vld [vmem:[%s221 + $0x2e0] sm:$0xff]
        %v347 = vld [vmem:[%s221 + $0x2e8] sm:$0xff]
        %v348 = vld [vmem:[%s221 + $0x2f0] sm:$0xff]
        %v349 = vld [vmem:[%s221 + $0x2f8] sm:$0xff]
        %v350 = vld [vmem:[%s221 + $0x300] sm:$0xff]
        %v351 = vld [vmem:[%s221 + $0x308] sm:$0xff]
        %v352 = vld [vmem:[%s221 + $0x310] sm:$0xff]
        %v353 = vld [vmem:[%s221 + $0x318] sm:$0xff]
        %v354 = vld [vmem:[%s221 + $0x320] sm:$0xff]
        %v355 = vld [vmem:[%s221 + $0x328] sm:$0xff]
        %v356 = vld [vmem:[%s221 + $0x330] sm:$0xff]
        %v357 = vld [vmem:[%s221 + $0x338] sm:$0xff]
        %v358 = vld [vmem:[%s221 + $0x340] sm:$0xff]
        %v359 = vld [vmem:[%s221 + $0x348] sm:$0xff]
        %v360 = vld [vmem:[%s221 + $0x350] sm:$0xff]
        %v361 = vld [vmem:[%s221 + $0x358] sm:$0xff]
        %v362 = vld [vmem:[%s221 + $0x360] sm:$0xff]
        %v363 = vld [vmem:[%s221 + $0x368] sm:$0xff]
        %v364 = vld [vmem:[%s221 + $0x370] sm:$0xff]
        %v365 = vld [vmem:[%s221 + $0x378] sm:$0xff]
        %v366 = vld [vmem:[%s221 + $0x380] sm:$0xff]
        %v367 = vld [vmem:[%s221 + $0x388] sm:$0xff]
        %v368 = vld [vmem:[%s221 + $0x390] sm:$0xff]
        %v369 = vld [vmem:[%s221 + $0x398] sm:$0xff]
        %v370 = vld [vmem:[%s221 + $0x3a0] sm:$0xff]
        %v371 = vld [vmem:[%s221 + $0x3a8] sm:$0xff]
        %v372 = vld [vmem:[%s221 + $0x3b0] sm:$0xff]
        %v373 = vld [vmem:[%s221 + $0x3b8] sm:$0xff]
        %v374 = vld [vmem:[%s221 + $0x3c0] sm:$0xff]
        %v375 = vld [vmem:[%s221 + $0x3c8] sm:$0xff]
        %v376 = vld [vmem:[%s221 + $0x3d0] sm:$0xff]
        %v377 = vld [vmem:[%s221 + $0x3d8] sm:$0xff]
        %v378 = vld [vmem:[%s221 + $0x3e0] sm:$0xff]
        %v379 = vld [vmem:[%s221 + $0x3e8] sm:$0xff]
        %v380 = vld [vmem:[%s221 + $0x3f0] sm:$0xff]
        %v381 = vld [vmem:[%s221 + $0x3f8] sm:$0xff]
        %v382 = vpack.c.bf16 %v258, %v254
        %v383 = vpack.c.bf16 %v259, %v255
        %v384 = vpack.c.bf16 %v260, %v256
        %v385 = vpack.c.bf16 %v261, %v257
        %v386 = vpack.c.bf16 %v266, %v262
        %v387 = vpack.c.bf16 %v267, %v263
        %v388 = vpack.c.bf16 %v268, %v264
        %v389 = vpack.c.bf16 %v269, %v265
        %v390 = vpack.c.bf16 %v274, %v270
        %v391 = vpack.c.bf16 %v275, %v271
        %v392 = vpack.c.bf16 %v276, %v272
        %v393 = vpack.c.bf16 %v277, %v273
        %v394 = vpack.c.bf16 %v282, %v278
        %v395 = vpack.c.bf16 %v283, %v279
        %v396 = vpack.c.bf16 %v284, %v280
        %v397 = vpack.c.bf16 %v285, %v281
        %v398 = vpack.c.bf16 %v290, %v286
        %v399 = vpack.c.bf16 %v291, %v287
        %v400 = vpack.c.bf16 %v292, %v288
        %v401 = vpack.c.bf16 %v293, %v289
        %v402 = vpack.c.bf16 %v298, %v294
        %v403 = vpack.c.bf16 %v299, %v295
        %v404 = vpack.c.bf16 %v300, %v296
        %v405 = vpack.c.bf16 %v301, %v297
        %v406 = vpack.c.bf16 %v306, %v302
        %v407 = vpack.c.bf16 %v307, %v303
        %v408 = vpack.c.bf16 %v308, %v304
        %v409 = vpack.c.bf16 %v309, %v305
        %v410 = vpack.c.bf16 %v314, %v310
        %v411 = vpack.c.bf16 %v315, %v311
        %v412 = vpack.c.bf16 %v316, %v312
        %v413 = vpack.c.bf16 %v317, %v313
        %v414 = vpack.c.bf16 %v322, %v318
        %v415 = vpack.c.bf16 %v323, %v319
        %v416 = vpack.c.bf16 %v324, %v320
        %v417 = vpack.c.bf16 %v325, %v321
        %v418 = vpack.c.bf16 %v330, %v326
        %v419 = vpack.c.bf16 %v331, %v327
        %v420 = vpack.c.bf16 %v332, %v328
        %v421 = vpack.c.bf16 %v333, %v329
        %v422 = vpack.c.bf16 %v338, %v334
        %v423 = vpack.c.bf16 %v339, %v335
        %v424 = vpack.c.bf16 %v340, %v336
        %v425 = vpack.c.bf16 %v341, %v337
        %v426 = vpack.c.bf16 %v346, %v342
        %v427 = vpack.c.bf16 %v347, %v343
        %v428 = vpack.c.bf16 %v348, %v344
        %v429 = vpack.c.bf16 %v349, %v345
        %v430 = vpack.c.bf16 %v354, %v350
        %v431 = vpack.c.bf16 %v355, %v351
        %v432 = vpack.c.bf16 %v356, %v352
        %v433 = vpack.c.bf16 %v357, %v353
        %v434 = vpack.c.bf16 %v362, %v358
        %v435 = vpack.c.bf16 %v363, %v359
        %v436 = vpack.c.bf16 %v364, %v360
        %v437 = vpack.c.bf16 %v365, %v361
        %v438 = vpack.c.bf16 %v370, %v366
        %v439 = vpack.c.bf16 %v371, %v367
        %v440 = vpack.c.bf16 %v372, %v368
        %v441 = vpack.c.bf16 %v373, %v369
        %v442 = vpack.c.bf16 %v378, %v374
        %v443 = vpack.c.bf16 %v379, %v375
        %v444 = vpack.c.bf16 %v380, %v376
        %v445 = vpack.c.bf16 %v381, %v377
        %v446 = vld [vmem:[%s226] sm:$0x3]
        %v448 = vlaneseq
        %v449 = vshrl.u32 %v448, 7
        %v450 = vsub.s32 0, %v449
        %v451 = vrot.slane %v446, %v450
        %v452 = vlaneseq
        %v453 = vshrl.u32 %v452, 7
        %v454 = vsub.s32 1, %v453
        %v455 = vrot.slane %v446, %v454
        %458 = vmatprep.subr.bf16.mxu0 %v411
        %459 = vmatpush1.bf16.xpose.msra.mxu0 %v410
        %460 = vmatprep.subr.bf16.mxu0 %v407
        %461 = vmatpush1.bf16.xpose.msra.mxu0 %v406
        %462 = vmatprep.subr.bf16.mxu0 %v403
        %463 = vmatpush1.bf16.xpose.msra.mxu0 %v402
        %464 = vmatprep.subr.bf16.mxu0 %v399
        %465 = vmatpush1.bf16.xpose.msra.mxu0 %v398
        %466 = vmatprep.subr.bf16.mxu0 %v395
        %467 = vmatpush1.bf16.xpose.msra.mxu0 %v394
        %468 = vmatprep.subr.bf16.mxu0 %v391
        %469 = vmatpush1.bf16.xpose.msra.mxu0 %v390
        %470 = vmatprep.subr.bf16.mxu0 %v387
        %471 = vmatpush1.bf16.xpose.msra.mxu0 %v386
        %472 = vmatprep.subr.bf16.mxu0 %v383
        %473 = vmatpush1.bf16.xpose.msra.mxu0 %v382
        %474 = vmatprep.subr.bf16.mxu0 %v443
        %475 = vmatpush2.bf16.xpose.msra.mxu0 %v442
        %476 = vmatprep.subr.bf16.mxu0 %v439
        %477 = vmatpush2.bf16.xpose.msra.mxu0 %v438
        %478 = vmatprep.subr.bf16.mxu0 %v435
        %479 = vmatpush2.bf16.xpose.msra.mxu0 %v434
        %480 = vmatprep.subr.bf16.mxu0 %v431
        %481 = vmatpush2.bf16.xpose.msra.mxu0 %v430
        %482 = vmatprep.subr.bf16.mxu0 %v427
        %483 = vmatpush2.bf16.xpose.msra.mxu0 %v426
        %484 = vmatprep.subr.bf16.mxu0 %v423
        %485 = vmatpush2.bf16.xpose.msra.mxu0 %v422
        %486 = vmatprep.subr.bf16.mxu0 %v419
        %487 = vmatpush2.bf16.xpose.msra.mxu0 %v418
        %488 = vmatprep.subr.bf16.mxu0 %v415
        %489 = vmatpush2.bf16.xpose.msra.mxu0 %v414
        %490 = vmatprep.mubr.bf16.mxu0 %v247
        %491 = vmatmul.mubr.bf16.gmra.mxu0 %v246
        %v492 = vpop.f32.mrf.mxu0
        %v493 = vadd.f32 %v451, %v492
        %v494 = vpop.f32.mrf.mxu0
        %v495 = vadd.f32 %v455, %v494
        %v496 = vpop.f32.mrf.mxu0
        %v497 = vadd.f32 %v451, %v496
        %v498 = vpop.f32.mrf.mxu0
        %v499 = vadd.f32 %v455, %v498
        %500 = vmatprep.mubr.bf16.mxu0 %v251
        %501 = vmatmul.mubr.bf16.gmra.mxu0 %v250
        %v502 = vpop.f32.mrf.mxu0
        %v503 = vadd.f32 %v451, %v502
        %v504 = vpop.f32.mrf.mxu0
        %v505 = vadd.f32 %v455, %v504
        %v506 = vpop.f32.mrf.mxu0
        %v507 = vadd.f32 %v451, %v506
        %v508 = vpop.f32.mrf.mxu0
        %v509 = vadd.f32 %v455, %v508
        %510 = vdwg.mxu0
        %511 = vmatprep.subr.bf16.mxu0 %v413
        %512 = vmatpush1.bf16.xpose.msra.mxu0 %v412
        %513 = vmatprep.subr.bf16.mxu0 %v409
        %514 = vmatpush1.bf16.xpose.msra.mxu0 %v408
        %515 = vmatprep.subr.bf16.mxu0 %v405
        %516 = vmatpush1.bf16.xpose.msra.mxu0 %v404
        %517 = vmatprep.subr.bf16.mxu0 %v401
        %518 = vmatpush1.bf16.xpose.msra.mxu0 %v400
        %519 = vmatprep.subr.bf16.mxu0 %v397
        %520 = vmatpush1.bf16.xpose.msra.mxu0 %v396
        %521 = vmatprep.subr.bf16.mxu0 %v393
        %522 = vmatpush1.bf16.xpose.msra.mxu0 %v392
        %523 = vmatprep.subr.bf16.mxu0 %v389
        %524 = vmatpush1.bf16.xpose.msra.mxu0 %v388
        %525 = vmatprep.subr.bf16.mxu0 %v385
        %526 = vmatpush1.bf16.xpose.msra.mxu0 %v384
        %527 = vmatprep.subr.bf16.mxu0 %v445
        %528 = vmatpush2.bf16.xpose.msra.mxu0 %v444
        %529 = vmatprep.subr.bf16.mxu0 %v441
        %530 = vmatpush2.bf16.xpose.msra.mxu0 %v440
        %531 = vmatprep.subr.bf16.mxu0 %v437
        %532 = vmatpush2.bf16.xpose.msra.mxu0 %v436
        %533 = vmatprep.subr.bf16.mxu0 %v433
        %534 = vmatpush2.bf16.xpose.msra.mxu0 %v432
        %535 = vmatprep.subr.bf16.mxu0 %v429
        %536 = vmatpush2.bf16.xpose.msra.mxu0 %v428
        %537 = vmatprep.subr.bf16.mxu0 %v425
        %538 = vmatpush2.bf16.xpose.msra.mxu0 %v424
        %539 = vmatprep.subr.bf16.mxu0 %v421
        %540 = vmatpush2.bf16.xpose.msra.mxu0 %v420
        %541 = vmatprep.subr.bf16.mxu0 %v417
        %542 = vmatpush2.bf16.xpose.msra.mxu0 %v416
        %543 = vmatprep.mubr.bf16.mxu0 %v249
        %544 = vmatmul.mubr.bf16.gmra.mxu0 %v248
        %v545 = vpop.f32.mrf.mxu0
        %v546 = vadd.f32 %v493, %v545
        %v547 = vpop.f32.mrf.mxu0
        %v548 = vadd.f32 %v495, %v547
        %v549 = vpop.f32.mrf.mxu0
        %v550 = vadd.f32 %v497, %v549
        %v551 = vpop.f32.mrf.mxu0
        %v552 = vadd.f32 %v499, %v551
        %553 = vmatprep.mubr.bf16.mxu0 %v253
        %554 = vmatmul.mubr.bf16.gmra.mxu0 %v252
        %v555 = vpop.f32.mrf.mxu0
        %v556 = vadd.f32 %v503, %v555
        %v557 = vpop.f32.mrf.mxu0
        %v558 = vadd.f32 %v505, %v557
        %v559 = vpop.f32.mrf.mxu0
        %v560 = vadd.f32 %v507, %v559
        %v561 = vpop.f32.mrf.mxu0
        %v562 = vadd.f32 %v509, %v561
        %563 = vdwg.mxu0
        %v564 = vpack.c.bf16 %v550, %v546
        %v565 = vpack.c.bf16 %v552, %v548
        %v566 = vpack.c.bf16 %v560, %v556
        %v567 = vpack.c.bf16 %v562, %v558
        %v572 = vunpack.c.l.b16 %v564
        %v573 = vunpack.c.l.b16 %v565
        %v574 = vunpack.c.h.b16 %v564
        %v575 = vunpack.c.h.b16 %v565
        %v576 = vunpack.c.l.b16 %v566
        %v577 = vunpack.c.l.b16 %v567
        %v578 = vunpack.c.h.b16 %v566
        %v579 = vunpack.c.h.b16 %v567
        %v580 = vpack.c.b16 %v573, %v572
        %v581 = vpack.c.b16 %v575, %v574
        %v582 = vpack.c.b16 %v577, %v576
        %v583 = vpack.c.b16 %v579, %v578
        %588 = vst [vmem:[%s208] sm:$0xff] %v580
        %589 = vst [vmem:[%s208 + $0x8] sm:$0xff] %v581
        %590 = vst [vmem:[%s208 + $0x10] sm:$0xff] %v582
        %591 = vst [vmem:[%s208 + $0x18] sm:$0xff] %v583
        %s592 = sand.u32 %s114, 1
        %s593 = sand.u32 %s114, 1
        %s594 = smul.addr %s593, 32
        %s595 = scalar_lea.vmem [#allocation2], %s594
        // Predicated region
        $region33: #{mha_encoder_decoder_attention.4} parent=31 // pred_check
          %p596 = pneg %p124
        $region34: #{mha_encoder_decoder_attention.4} parent=31 // pred_check_branch
          %598 = sbr.rel (%p596) target = $region36
        $region35: #{mha_encoder_decoder_attention.4} parent=31 // pred_region
          %s599 = smul.u32 4, %s18
          %s600 = smul.u32 2, %s19
          %s601 = smul.addr %s599, 8
          %s602 = sadd.s32 %s600, %s601
          %s603 = smul.addr %s602, 4
          %s604 = scalar_lea.vmem %s3, %s603
          // Predicated region
          $region37: #{mha_encoder_decoder_attention.4} parent=35 // pred_check
            _
          $region38: #{mha_encoder_decoder_attention.4} parent=35 // pred_check_branch
            %606 = sbr.rel (0) target = $region40
          $region39: #{mha_encoder_decoder_attention.4} parent=35 // pred_region
            // Predicated region
            $region41: #{mha_encoder_decoder_attention.4} parent=39 // pred_check
              _
            $region42: #{mha_encoder_decoder_attention.4} parent=39 // pred_check_branch
              %608 = sbr.rel (0) target = $region44
            $region43: #{mha_encoder_decoder_attention.4} parent=39 // pred_region
              // Predicated region
              $region56: #{mha_encoder_decoder_attention.4} parent=43 // pred_check
                _
              $region57: #{mha_encoder_decoder_attention.4} parent=43 // pred_check_branch
                %630 = sbr.rel (0) target = $region59
              $region58: #{mha_encoder_decoder_attention.4} parent=43 // pred_region
                loop: start=0, step=1, limit=1
                $region60: #{mha_encoder_decoder_attention.4} parent=58 // loop_pre_header
                  _
                $region61: #{mha_encoder_decoder_attention.4} parent=58 // loop_header
                  %s632 = sphi 0, %s636
                  %p633 = scmp.ge.s32.totalorder %s632, 1
                  %s637 = sphi %s595, %s595
                  %s638 = sphi %s604, %s604
                $region62: #{mha_encoder_decoder_attention.4} parent=58 // loop_header_branch
                  %635 = sbr.rel (%p633) target = $region66
                $region63: #{mha_encoder_decoder_attention.4} parent=58 // loop_body
                  %v639 = vld [vmem:[%s637] sm:$0xff]
                  %640 = vst [vmem:[%s638] sm:$0xff] %v639
                  %v641 = vld [vmem:[%s637 + $0x8] sm:$0xff]
                  %642 = vst [vmem:[%s638 + $0x20] sm:$0xff] %v641
                  %v643 = vld [vmem:[%s637 + $0x10] sm:$0xff]
                  %644 = vst [vmem:[%s638 + $0x40] sm:$0xff] %v643
                  %v645 = vld [vmem:[%s637 + $0x18] sm:$0xff]
                  %646 = vst [vmem:[%s638 + $0x60] sm:$0xff] %v645
                $region64: #{mha_encoder_decoder_attention.4} parent=58 // loop_footer
                  %s636 = sadd.s32 1, %s632
                $region65: #{mha_encoder_decoder_attention.4} parent=58 // loop_footer_branch
                  %631 = sbr.rel target = $region61
                $region66: #{mha_encoder_decoder_attention.4} parent=58 // loop_exit
                  _
              $region59: #{mha_encoder_decoder_attention.4} parent=43 // pred_fallthru
                _
              // Predicated region
              $region67: #{mha_encoder_decoder_attention.4} parent=43 // pred_check
                _
              $region68: #{mha_encoder_decoder_attention.4} parent=43 // pred_check_branch
                %648 = sbr.rel target = $region70
              $region69: #{mha_encoder_decoder_attention.4} parent=43 // pred_region
                _
              $region70: #{mha_encoder_decoder_attention.4} parent=43 // pred_fallthru
                _
            $region44: #{mha_encoder_decoder_attention.4} parent=39 // pred_fallthru
              _
            // Predicated region
            $region45: #{mha_encoder_decoder_attention.4} parent=39 // pred_check
              _
            $region46: #{mha_encoder_decoder_attention.4} parent=39 // pred_check_branch
              %610 = sbr.rel target = $region48
            $region47: #{mha_encoder_decoder_attention.4} parent=39 // pred_region
              %s612 = ssub.s32 256, 1
              loop: start=0, step=1, limit=1
              $region49: #{mha_encoder_decoder_attention.4} parent=47 // loop_pre_header
                _
              $region50: #{mha_encoder_decoder_attention.4} parent=47 // loop_header
                %s614 = sphi 0, %s618
                %p615 = scmp.ge.s32.totalorder %s614, 1
                %s619 = sphi %s595, %s595
                %s620 = sphi %s604, %s604
              $region51: #{mha_encoder_decoder_attention.4} parent=47 // loop_header_branch
                %617 = sbr.rel (%p615) target = $region55
              $region52: #{mha_encoder_decoder_attention.4} parent=47 // loop_body
                %v621 = vld [vmem:[%s619] sm:%s612]
                %622 = vst [vmem:[%s620] sm:%s612] %v621
                %v623 = vld [vmem:[%s619 + $0x8] sm:%s612]
                %624 = vst [vmem:[%s620 + $0x20] sm:%s612] %v623
                %v625 = vld [vmem:[%s619 + $0x10] sm:%s612]
                %626 = vst [vmem:[%s620 + $0x40] sm:%s612] %v625
                %v627 = vld [vmem:[%s619 + $0x18] sm:%s612]
                %628 = vst [vmem:[%s620 + $0x60] sm:%s612] %v627
              $region53: #{mha_encoder_decoder_attention.4} parent=47 // loop_footer
                %s618 = sadd.s32 1, %s614
              $region54: #{mha_encoder_decoder_attention.4} parent=47 // loop_footer_branch
                %613 = sbr.rel target = $region50
              $region55: #{mha_encoder_decoder_attention.4} parent=47 // loop_exit
                _
            $region48: #{mha_encoder_decoder_attention.4} parent=39 // pred_fallthru
              _
          $region40: #{mha_encoder_decoder_attention.4} parent=35 // pred_fallthru
            _
          %649 = vnop
        $region36: #{mha_encoder_decoder_attention.4} parent=31 // pred_fallthru
          _
      $region32: #{mha_encoder_decoder_attention.4} parent=5 // pred_fallthru
        _
      %p650 = scmp.le.s32.totalorder 2, %s9
      // Predicated region
      $region71: #{mha_encoder_decoder_attention.4} parent=5 // pred_check
        %p651 = pneg %p650
      $region72: #{mha_encoder_decoder_attention.4} parent=5 // pred_check_branch
        %653 = sbr.rel (%p651) target = $region74
      $region73: #{mha_encoder_decoder_attention.4} parent=5 // pred_region
        %s654 = ssub.s32 %s9, 2
        // Predicated region
        $region75: #{mha_encoder_decoder_attention.4} parent=73 // pred_check
          %p655 = pneg %p130
        $region76: #{mha_encoder_decoder_attention.4} parent=73 // pred_check_branch
          %657 = sbr.rel (%p655) target = $region78
        $region77: #{mha_encoder_decoder_attention.4} parent=73 // pred_region
          %s658 = sand.u32 %s115, 1
          %s659 = sand.u32 %s115, 1
          %s660 = smul.addr %s659, 32
          %s661 = scalar_lea.vmem [#allocation2], %s660
        $region78: #{mha_encoder_decoder_attention.4} parent=73 // pred_fallthru
          _
      $region74: #{mha_encoder_decoder_attention.4} parent=5 // pred_fallthru
        _
    $region6: #{mha_encoder_decoder_attention.4} parent=1 // loop_footer
      %s13 = sadd.s32 1, %s9
    $region7: #{mha_encoder_decoder_attention.4} parent=1 // loop_footer_branch
      %8 = sbr.rel target = $region3
    $region8: #{mha_encoder_decoder_attention.4} parent=1 // loop_exit
      _

// kernel: mha_encoder_decoder_attention.5
$region0: #{mha_encoder_decoder_attention.5}
  #allocation0 [shape = 'u32[]', space=smem, size = 0x4, offset = 0x4, fixed_abs, tag = 'smem constant byte address 0x4 - core index']
  #allocation1 [shape = 'u32[144,128]{1,0:T(1,128)}', space=vmem, size = 0x12000, scoped, tag = 'internal scratch']
  #allocation2 [shape = 'f32[8,8]{1,0:T(8,128)}', space=vmem, size = 0x1000, scoped, tag = 'scratch operand']
  #allocation3 [shape = 'f32[8,8]{1,0:T(8,128)}', space=vmem, size = 0x1000, scoped, tag = 'scratch operand']
  #allocation4 [shape = 'f32[8,512]{1,0:T(8,128)}', space=vmem, size = 0x4000, scoped, tag = 'scratch operand']
  %s0 = inlined_call_operand.vmem [shape: bf16[2,8,512], index: 0, kind: input, shape index: {}]
  %s1 = inlined_call_operand.vmem [shape: bf16[2,16,1024], index: 1, kind: input, shape index: {}]
  %s2 = inlined_call_operand.vmem [shape: f32[512,512], index: 2, kind: input, shape index: {}]
  %s3 = inlined_call_operand.vmem [shape: f32[1,512], index: 3, kind: input, shape index: {}]
  %s4 = inlined_call_operand.hbm [shape: f32[2,8,512], index: 4, kind: output, shape index: {}]
  %s5 = sld [smem:[#allocation0]]
  $region57: #{mha_encoder_decoder_attention.5} parent=0
    _
  %s7 = ssub.s32 1, %s5
  %s8 = scalar_select 0, %s7, %s5
  $region1: #{mha_encoder_decoder_attention.5} parent=0
    #allocation5 [shape = 'u8[32768]{0}', space=vmem, size = 0x8000, scoped, tag = 'output window, operand 0']
    #allocation6 [shape = 's32[2]{0}', space=sflag, size = 0x8, scoped, tag = 'scoped memory for mha_encoder_decoder_attention.5']
    %9 = vsyncpa [#allocation6], 0
    %s10 = scalar_lea.sflag [#allocation6], 1
    %11 = vsyncpa %s10, 0
    loop: start=0, step=1, limit=4
    $region2: #{mha_encoder_decoder_attention.5} parent=1 // loop_pre_header
      _
    $region3: #{mha_encoder_decoder_attention.5} parent=1 // loop_header
      %s13 = sphi 0, %s17
      %p14 = scmp.ge.s32.totalorder %s13, 4
      %s20 = sphi 0, %s39
      %s21 = sphi 0, %s35
      %s22 = sphi 0, %s31
      %s23 = sphi 0, %s20
      %s24 = sphi 0, %s21
      %s25 = sphi 0, %s22
      %s26 = sphi 0, %s23
      %s27 = sphi 0, %s24
      %s28 = sphi 0, %s25
      %s44 = sphi 0, %s46
      %s47 = sphi 0, %s44
      %s48 = sphi 0, %s47
      %s64 = sphi 0, %s48
      %s72 = sphi 0, %s74
      %s75 = sphi 0, %s72
      %s76 = sphi 0, %s75
      %s92 = sphi 0, %s76
      %s96 = sphi 0, %s96
      %s98 = sphi 0, %s96
      %s99 = sphi 0, %s98
      %s113 = sphi 0, %s99
      %s117 = sphi 0, %s117
      %s119 = sphi 0, %s117
      %s120 = sphi 0, %s119
      %s134 = sphi 0, %s120
      %s142 = sphi 0, %s144
      %s145 = sphi 0, %s142
      %s146 = sphi 0, %s145
      %s162 = sphi 0, %s146
    $region4: #{mha_encoder_decoder_attention.5} parent=1 // loop_header_branch
      %16 = sbr.rel (%p14) target = $region8
    $region5: #{mha_encoder_decoder_attention.5} parent=1 // loop_body
      %s18 = ssub.s32 %s13, 1
      %s19 = ssub.s32 %s13, 2
      %s29 = sadd.s32 1, %s22
      %p30 = scmp.ge.s32.totalorder %s29, 1
      %s31 = scalar_select %p30, 0, %s29
      %s32 = sadd.s32 1, %s21
      %s33 = scalar_select %p30, %s32, %s21
      %p34 = scmp.ge.s32.totalorder %s33, 1
      %s35 = scalar_select %p34, 0, %s33
      %s36 = sadd.s32 1, %s20
      %s37 = scalar_select %p34, %s36, %s20
      %p38 = scmp.ge.s32.totalorder %s37, 2
      %s39 = scalar_select %p38, 0, %s37
      %s40 = ssub.s32 %s20, %s39
      %s41 = ssub.s32 %s21, %s35
      %s42 = sor.u32 %s40, %s41
      %p43 = scmp.eq.s32.totalorder %s42, 0
      %s45 = sadd.s32 %s44, 1
      %s46 = scalar_select %p43, %s44, %s45
      %p49 = pneg %p43
      %p50 = scmp.eq.s32.totalorder %s13, 1
      %p51 = por %p49, %p50
      %p52 = scmp.ne.s32.totalorder %s44, %s47
      %p53 = scmp.eq.s32.totalorder %s13, 0
      %p54 = por %p52, %p53
      %p55 = scmp.ne.s32.totalorder %s44, %s47
      %p56 = scmp.eq.s32.totalorder %s18, 1
      %p57 = por %p55, %p56
      %p58 = scmp.ne.s32.totalorder %s47, %s48
      %p59 = scmp.eq.s32.totalorder %s18, 0
      %p60 = por %p58, %p59
      %p61 = scmp.ne.s32.totalorder %s47, %s48
      %p62 = scmp.eq.s32.totalorder %s19, 1
      %p63 = por %p61, %p62
      %p65 = scmp.ne.s32.totalorder %s48, %s64
      %p66 = scmp.eq.s32.totalorder %s19, 0
      %p67 = por %p65, %p66
      %s68 = ssub.s32 %s20, %s39
      %s69 = ssub.s32 %s22, %s31
      %s70 = sor.u32 %s68, %s69
      %p71 = scmp.eq.s32.totalorder %s70, 0
      %s73 = sadd.s32 %s72, 1
      %s74 = scalar_select %p71, %s72, %s73
      %p77 = pneg %p71
      %p78 = scmp.eq.s32.totalorder %s13, 1
      %p79 = por %p77, %p78
      %p80 = scmp.ne.s32.totalorder %s72, %s75
      %p81 = scmp.eq.s32.totalorder %s13, 0
      %p82 = por %p80, %p81
      %p83 = scmp.ne.s32.totalorder %s72, %s75
      %p84 = scmp.eq.s32.totalorder %s18, 1
      %p85 = por %p83, %p84
      %p86 = scmp.ne.s32.totalorder %s75, %s76
      %p87 = scmp.eq.s32.totalorder %s18, 0
      %p88 = por %p86, %p87
      %p89 = scmp.ne.s32.totalorder %s75, %s76
      %p90 = scmp.eq.s32.totalorder %s19, 1
      %p91 = por %p89, %p90
      %p93 = scmp.ne.s32.totalorder %s76, %s92
      %p94 = scmp.eq.s32.totalorder %s19, 0
      %p95 = por %p93, %p94
      %s97 = sadd.s32 %s96, 1
      %p100 = scmp.eq.s32.totalorder %s13, 1
      %p101 = scmp.ne.s32.totalorder %s96, %s98
      %p102 = scmp.eq.s32.totalorder %s13, 0
      %p103 = por %p101, %p102
      %p104 = scmp.ne.s32.totalorder %s96, %s98
      %p105 = scmp.eq.s32.totalorder %s18, 1
      %p106 = por %p104, %p105
      %p107 = scmp.ne.s32.totalorder %s98, %s99
      %p108 = scmp.eq.s32.totalorder %s18, 0
      %p109 = por %p107, %p108
      %p110 = scmp.ne.s32.totalorder %s98, %s99
      %p111 = scmp.eq.s32.totalorder %s19, 1
      %p112 = por %p110, %p111
      %p114 = scmp.ne.s32.totalorder %s99, %s113
      %p115 = scmp.eq.s32.totalorder %s19, 0
      %p116 = por %p114, %p115
      %s118 = sadd.s32 %s117, 1
      %p121 = scmp.eq.s32.totalorder %s13, 1
      %p122 = scmp.ne.s32.totalorder %s117, %s119
      %p123 = scmp.eq.s32.totalorder %s13, 0
      %p124 = por %p122, %p123
      %p125 = scmp.ne.s32.totalorder %s117, %s119
      %p126 = scmp.eq.s32.totalorder %s18, 1
      %p127 = por %p125, %p126
      %p128 = scmp.ne.s32.totalorder %s119, %s120
      %p129 = scmp.eq.s32.totalorder %s18, 0
      %p130 = por %p128, %p129
      %p131 = scmp.ne.s32.totalorder %s119, %s120
      %p132 = scmp.eq.s32.totalorder %s19, 1
      %p133 = por %p131, %p132
      %p135 = scmp.ne.s32.totalorder %s120, %s134
      %p136 = scmp.eq.s32.totalorder %s19, 0
      %p137 = por %p135, %p136
      %s138 = ssub.s32 %s20, %s39
      %s139 = ssub.s32 %s21, %s35
      %s140 = sor.u32 %s138, %s139
      %p141 = scmp.eq.s32.totalorder %s140, 0
      %s143 = sadd.s32 %s142, 1
      %s144 = scalar_select %p141, %s142, %s143
      %p147 = pneg %p141
      %p148 = scmp.eq.s32.totalorder %s13, 1
      %p149 = por %p147, %p148
      %p150 = scmp.ne.s32.totalorder %s142, %s145
      %p151 = scmp.eq.s32.totalorder %s13, 0
      %p152 = por %p150, %p151
      %p153 = scmp.ne.s32.totalorder %s142, %s145
      %p154 = scmp.eq.s32.totalorder %s18, 1
      %p155 = por %p153, %p154
      %p156 = scmp.ne.s32.totalorder %s145, %s146
      %p157 = scmp.eq.s32.totalorder %s18, 0
      %p158 = por %p156, %p157
      %p159 = scmp.ne.s32.totalorder %s145, %s146
      %p160 = scmp.eq.s32.totalorder %s19, 1
      %p161 = por %p159, %p160
      %p163 = scmp.ne.s32.totalorder %s146, %s162
      %p164 = scmp.eq.s32.totalorder %s19, 0
      %p165 = por %p163, %p164
      %p166 = scmp.le.s32.totalorder 1, %s13
      %p167 = scmp.lt.s32.totalorder %s13, 3
      %p168 = pnand %p166, %p167
      %p169 = pneg %p168
      // Predicated region
      $region9: #{mha_encoder_decoder_attention.5} parent=5 // pred_check
        _
      $region10: #{mha_encoder_decoder_attention.5} parent=5 // pred_check_branch
        %171 = sbr.rel (%p168) target = $region12
      $region11: #{mha_encoder_decoder_attention.5} parent=5 // pred_region
        %s172 = ssub.s32 %s13, 1
        // Predicated region
        $region13: #{mha_encoder_decoder_attention.5} parent=11 // pred_check
          %p173 = pneg %p109
        $region14: #{mha_encoder_decoder_attention.5} parent=11 // pred_check_branch
          %175 = sbr.rel (%p173) target = $region16
        $region15: #{mha_encoder_decoder_attention.5} parent=11 // pred_region
          _
        $region16: #{mha_encoder_decoder_attention.5} parent=11 // pred_fallthru
          _
        // Predicated region
        $region17: #{mha_encoder_decoder_attention.5} parent=11 // pred_check
          %p176 = pneg %p130
        $region18: #{mha_encoder_decoder_attention.5} parent=11 // pred_check_branch
          %178 = sbr.rel (%p176) target = $region20
        $region19: #{mha_encoder_decoder_attention.5} parent=11 // pred_region
          _
        $region20: #{mha_encoder_decoder_attention.5} parent=11 // pred_fallthru
          _
      $region12: #{mha_encoder_decoder_attention.5} parent=5 // pred_fallthru
        _
      %p179 = scmp.lt.s32.totalorder %s13, 2
      // Predicated region
      $region21: #{mha_encoder_decoder_attention.5} parent=5 // pred_check
        %p180 = pneg %p179
      $region22: #{mha_encoder_decoder_attention.5} parent=5 // pred_check_branch
        %182 = sbr.rel (%p180) target = $region24
      $region23: #{mha_encoder_decoder_attention.5} parent=5 // pred_region
        // Predicated region
        $region25: #{mha_encoder_decoder_attention.5} parent=23 // pred_check
          %p183 = pneg %p54
        $region26: #{mha_encoder_decoder_attention.5} parent=23 // pred_check_branch
          %185 = sbr.rel (%p183) target = $region28
        $region27: #{mha_encoder_decoder_attention.5} parent=23 // pred_region
          %p186 = scmp.lt.s32.totalorder %s20, 1
          %s187 = scalar_select %p186, %s20, 1
          %p188 = scmp.lt.s32.totalorder %s21, 0
          %s189 = scalar_select %p188, %s21, 0
          %s190 = smul.addr %s189, 4
          %s191 = smul.addr %s187, 4
          %s192 = sadd.s32 %s190, %s191
          %s193 = smul.addr %s192, 4
          %s194 = scalar_lea.vmem %s0, %s193
        $region28: #{mha_encoder_decoder_attention.5} parent=23 // pred_fallthru
          _
        // Predicated region
        $region29: #{mha_encoder_decoder_attention.5} parent=23 // pred_check
          %p195 = pneg %p82
        $region30: #{mha_encoder_decoder_attention.5} parent=23 // pred_check_branch
          %197 = sbr.rel (%p195) target = $region32
        $region31: #{mha_encoder_decoder_attention.5} parent=23 // pred_region
          %s198 = smul.u32 2, %s22
          %p199 = scmp.lt.s32.totalorder %s20, 1
          %s200 = scalar_select %p199, %s20, 1
          %p201 = scmp.lt.s32.totalorder %s198, 1
          %s202 = scalar_select %p201, %s198, 1
          %s203 = smul.addr %s202, 8
          %s204 = smul.addr %s200, 16
          %s205 = sadd.s32 %s203, %s204
          %s206 = smul.addr %s205, 4
          %s207 = scalar_lea.vmem %s1, %s206
          %s208 = smul.u32 2, %s22
        $region32: #{mha_encoder_decoder_attention.5} parent=23 // pred_fallthru
          _
      $region24: #{mha_encoder_decoder_attention.5} parent=5 // pred_fallthru
        _
      %p209 = scmp.le.s32.totalorder 1, %s13
      %p210 = scmp.lt.s32.totalorder %s13, 3
      %p211 = pnand %p209, %p210
      %p212 = pneg %p211
      // Predicated region
      $region33: #{mha_encoder_decoder_attention.5} parent=5 // pred_check
        _
      $region34: #{mha_encoder_decoder_attention.5} parent=5 // pred_check_branch
        %214 = sbr.rel (%p211) target = $region36
      $region35: #{mha_encoder_decoder_attention.5} parent=5 // pred_region
        %s215 = ssub.s32 %s13, 1
        %p216 = scmp.lt.s32.totalorder %s23, 1
        %s217 = scalar_select %p216, %s23, 1
        %p218 = scmp.lt.s32.totalorder %s24, 0
        %s219 = scalar_select %p218, %s24, 0
        %s220 = smul.addr %s219, 4
        %s221 = smul.addr %s217, 4
        %s222 = sadd.s32 %s220, %s221
        %s223 = smul.addr %s222, 4
        %s224 = scalar_lea.vmem %s0, %s223
        %p225 = pneg %p60
        %p226 = pneg %p57
        %s227 = smul.u32 2, %s25
        %p228 = scmp.lt.s32.totalorder %s23, 1
        %s229 = scalar_select %p228, %s23, 1
        %p230 = scmp.lt.s32.totalorder %s227, 1
        %s231 = scalar_select %p230, %s227, 1
        %s232 = smul.addr %s231, 8
        %s233 = smul.addr %s229, 16
        %s234 = sadd.s32 %s232, %s233
        %s235 = smul.addr %s234, 4
        %s236 = scalar_lea.vmem %s1, %s235
        %p237 = pneg %p88
        %p238 = pneg %p85
        %p239 = pneg %p109
        %p240 = pneg %p106
        %p241 = pneg %p130
        %p242 = pneg %p127
        %p243 = pneg %p158
        %p244 = pneg %p155
        %s245 = sand.u32 %s145, 1
        %s246 = scalar_lea.sflag [#allocation6], %s245
        %s247 = sand.u32 %s145, 1
        %s248 = smul.addr %s247, 32
        %s249 = scalar_lea.vmem [#allocation5], %s248
        %p250 = scmp.lt.s32.totalorder %s23, 1
        %s251 = scalar_select %p250, %s23, 1
        %p252 = scmp.lt.s32.totalorder %s24, 0
        %s253 = scalar_select %p252, %s24, 0
        %s254 = smul.addr %s253, 4
        %s255 = smul.addr %s251, 4
        %s256 = sadd.s32 %s254, %s255
        %s257 = smul.addr %s256, 4
        %s258 = scalar_lea.vmem %s0, %s257
        %s259 = smul.u32 2, %s25
        %p260 = scmp.lt.s32.totalorder %s23, 1
        %s261 = scalar_select %p260, %s23, 1
        %p262 = scmp.lt.s32.totalorder %s259, 1
        %s263 = scalar_select %p262, %s259, 1
        %s264 = smul.addr %s263, 8
        %s265 = smul.addr %s261, 16
        %s266 = sadd.s32 %s264, %s265
        %s267 = smul.addr %s266, 4
        %s268 = scalar_lea.vmem %s1, %s267
        %s269 = smul.u32 2, %s25
        %p271 = scmp.eq.s32.totalorder %s25, 0
        // Predicated region
        $region37: #{mha_encoder_decoder_attention.5} parent=35 // pred_check
          %p272 = pneg %p271
        $region38: #{mha_encoder_decoder_attention.5} parent=35 // pred_check_branch
          %274 = sbr.rel (%p272) target = $region40
        $region39: #{mha_encoder_decoder_attention.5} parent=35 // pred_region
          %vm275 = vcmask 64512
          %276 = vst.msk [vmem:[#allocation2] sm:$0xff] %vm275, -inf
          %277 = vst.msk [vmem:[#allocation3] sm:$0xff] %vm275, 0.0
          %278 = vst [vmem:[#allocation4] sm:$0xff] 0.0
          %279 = vst [vmem:[#allocation4 + $0x8] sm:$0xff] 0.0
          %280 = vst [vmem:[#allocation4 + $0x10] sm:$0xff] 0.0
          %281 = vst [vmem:[#allocation4 + $0x18] sm:$0xff] 0.0
        $region40: #{mha_encoder_decoder_attention.5} parent=35 // pred_fallthru
          _
        %v282 = vld [vmem:[%s258] sm:$0xff]
        %v283 = vld [vmem:[%s258 + $0x8] sm:$0xff]
        %v284 = vld [vmem:[%s268] sm:$0xff]
        %v285 = vld [vmem:[%s268 + $0x8] sm:$0xff]
        %v286 = vld [vmem:[%s268 + $0x10] sm:$0xff]
        %v287 = vld [vmem:[%s268 + $0x18] sm:$0xff]
        %v288 = vld [vmem:[%s268 + $0x20] sm:$0xff]
        %v289 = vld [vmem:[%s268 + $0x28] sm:$0xff]
        %v290 = vld [vmem:[%s268 + $0x30] sm:$0xff]
        %v291 = vld [vmem:[%s268 + $0x38] sm:$0xff]
        %v294 = vunpack.c.l.b16 %v284
        %v295 = vunpack.c.l.b16 %v288
        %v296 = vpack.c.b16 %v295, %v294
        %vm297 = vcmask 523264
        %v299 = vsel %vm297, %v282, 0
        %v302 = vsel %vm297, %v296, 0
        %304 = vmatprep.subr.bf16.mxu0 0
        %305 = vmatpush1.bf16.xpose.msra.mxu0 0
        %306 = vmatprep.subr.bf16.mxu0 0
        %307 = vmatpush1.bf16.xpose.msra.mxu0 0
        %308 = vmatprep.subr.bf16.mxu0 0
        %309 = vmatpush1.bf16.xpose.msra.mxu0 0
        %310 = vmatprep.subr.bf16.mxu0 0
        %311 = vmatpush1.bf16.xpose.msra.mxu0 0
        %312 = vmatprep.subr.bf16.mxu0 0
        %313 = vmatpush1.bf16.xpose.msra.mxu0 0
        %314 = vmatprep.subr.bf16.mxu0 0
        %315 = vmatpush1.bf16.xpose.msra.mxu0 0
        %316 = vmatprep.subr.bf16.mxu0 0
        %317 = vmatpush1.bf16.xpose.msra.mxu0 0
        %318 = vmatprep.subr.bf16.mxu0 0
        %319 = vmatpush1.bf16.xpose.msra.mxu0 %v302
        %320 = vmatprep.subr.bf16.mxu0 0
        %321 = vmatpush2.bf16.xpose.msra.mxu0 0
        %322 = vmatprep.subr.bf16.mxu0 0
        %323 = vmatpush2.bf16.xpose.msra.mxu0 0
        %324 = vmatprep.subr.bf16.mxu0 0
        %325 = vmatpush2.bf16.xpose.msra.mxu0 0
        %326 = vmatprep.subr.bf16.mxu0 0
        %327 = vmatpush2.bf16.xpose.msra.mxu0 0
        %328 = vmatprep.subr.bf16.mxu0 0
        %329 = vmatpush2.bf16.xpose.msra.mxu0 0
        %330 = vmatprep.subr.bf16.mxu0 0
        %331 = vmatpush2.bf16.xpose.msra.mxu0 0
        %332 = vmatprep.subr.bf16.mxu0 0
        %333 = vmatpush2.bf16.xpose.msra.mxu0 0
        %334 = vmatprep.subr.bf16.mxu0 0
        %335 = vmatpush2.bf16.xpose.msra.mxu0 0
        %336 = vmatprep.mubr.bf16.mxu0 0
        %337 = vmatmul.mubr.bf16.gmra.mxu0 %v299
        %v338 = vpop.f32.mrf.mxu0
        %v339 = vadd.f32 0.0, %v338
        %v340 = vpop.f32.mrf.mxu0
        %v341 = vpop.f32.mrf.mxu0
        %v342 = vpop.f32.mrf.mxu0
        %343 = vdwg.mxu0
        %v344 = vld [vmem:[#allocation2] sm:$0xff]
        %v345 = vld [vmem:[#allocation3] sm:$0xff]
        %vm346 = vcmask 130048
        %v347 = vsel %vm346, %v339, -inf
        %348 = vmax.xlane.f32.xlu0 %v347
        %v349 = vpop.xlane.xlu0 %348
        %v350 = vmax.f32 %v344, %v349
        %v351 = vsub.f32 %v344, %v350
        %v352 = vmul.f32 %v351, 1.442695
        %v353 = vpow.pop %v352
        %355 = vset.pattern.permute.xlu0 0
        %356 = vperm.xlu0 %355, %v350
        %v357 = vpop.permute.xlu0 %356
        %v359 = vsub.f32 %v339, %v357
        %v360 = vmul.f32 %v359, 1.442695
        %v361 = vpow.pop %v360
        %v362 = vmul.f32 %v353, %v345
        %v363 = vsel %vm346, %v361, 0.0
        %364 = vadd.xlane.f32.xlu0 %v363
        %v365 = vpop.xlane.xlu0 %364
        %v366 = vadd.f32 %v362, %v365
        %vm367 = vcmask 7168
        %368 = vst.msk [vmem:[#allocation3] sm:$0xff] %vm367, %v366
        %v369 = vpack.c.bf16 %v361, %v361
        %v372 = vunpack.c.l.b16 %v286
        %v373 = vunpack.c.l.b16 %v290
        %v374 = vpack.c.b16 %v373, %v372
        %v377 = vsel %vm346, %v369, 0
        %379 = vmatprep.subr.bf16.mxu0 0
        %380 = vmatpush1.bf16.msra.mxu0 0
        %381 = vmatprep.subr.bf16.mxu0 0
        %382 = vmatpush1.bf16.msra.mxu0 0
        %383 = vmatprep.subr.bf16.mxu0 0
        %384 = vmatpush1.bf16.msra.mxu0 0
        %385 = vmatprep.subr.bf16.mxu0 0
        %386 = vmatpush1.bf16.msra.mxu0 0
        %387 = vmatprep.subr.bf16.mxu0 0
        %388 = vmatpush1.bf16.msra.mxu0 0
        %389 = vmatprep.subr.bf16.mxu0 0
        %390 = vmatpush1.bf16.msra.mxu0 0
        %391 = vmatprep.subr.bf16.mxu0 0
        %392 = vmatpush1.bf16.msra.mxu0 0
        %393 = vmatprep.subr.bf16.mxu0 0
        %394 = vmatpush1.bf16.msra.mxu0 %v374
        %395 = vmatprep.subr.bf16.mxu0 0
        %396 = vmatpush2.bf16.msra.mxu0 0
        %397 = vmatprep.subr.bf16.mxu0 0
        %398 = vmatpush2.bf16.msra.mxu0 0
        %399 = vmatprep.subr.bf16.mxu0 0
        %400 = vmatpush2.bf16.msra.mxu0 0
        %401 = vmatprep.subr.bf16.mxu0 0
        %402 = vmatpush2.bf16.msra.mxu0 0
        %403 = vmatprep.subr.bf16.mxu0 0
        %404 = vmatpush2.bf16.msra.mxu0 0
        %405 = vmatprep.subr.bf16.mxu0 0
        %406 = vmatpush2.bf16.msra.mxu0 0
        %407 = vmatprep.subr.bf16.mxu0 0
        %408 = vmatpush2.bf16.msra.mxu0 0
        %409 = vmatprep.subr.bf16.mxu0 0
        %410 = vmatpush2.bf16.msra.mxu0 0
        %411 = vmatprep.mubr.bf16.mxu0 0
        %412 = vmatmul.mubr.bf16.gmra.mxu0 %v377
        %v413 = vpop.f32.mrf.mxu0
        %v414 = vadd.f32 0.0, %v413
        %v415 = vpop.f32.mrf.mxu0
        %v416 = vpop.f32.mrf.mxu0
        %v417 = vpop.f32.mrf.mxu0
        %418 = vdwg.mxu0
        %v419 = vld [vmem:[#allocation4] sm:$0xff]
        %421 = vset.pattern.permute.xlu0 0
        %422 = vperm.xlu0 %421, %v353
        %v423 = vpop.permute.xlu0 %422
        %v425 = vmul.f32 %v423, %v419
        %v426 = vadd.f32 %v425, %v414
        %427 = vst.msk [vmem:[#allocation4] sm:$0xff] %vm297, %v426
        %428 = vst.msk [vmem:[#allocation2] sm:$0xff] %vm367, %v350
        %v430 = vunpack.c.l.b16 %v282
        %v431 = vpack.c.b16 %v430, %v430
        %432 = vrot.lane.b32.xlu0 %v431, 64
        %v433 = vpop.permute.xlu0 %432
        %434 = vrot.lane.b32.xlu0 %v296, 64
        %v435 = vpop.permute.xlu0 %434
        %v437 = vsel %vm297, %v433, 0
        %v440 = vsel %vm297, %v435, 0
        %442 = vmatprep.subr.bf16.mxu0 0
        %443 = vmatpush1.bf16.xpose.msra.mxu0 0
        %444 = vmatprep.subr.bf16.mxu0 0
        %445 = vmatpush1.bf16.xpose.msra.mxu0 0
        %446 = vmatprep.subr.bf16.mxu0 0
        %447 = vmatpush1.bf16.xpose.msra.mxu0 0
        %448 = vmatprep.subr.bf16.mxu0 0
        %449 = vmatpush1.bf16.xpose.msra.mxu0 0
        %450 = vmatprep.subr.bf16.mxu0 0
        %451 = vmatpush1.bf16.xpose.msra.mxu0 0
        %452 = vmatprep.subr.bf16.mxu0 0
        %453 = vmatpush1.bf16.xpose.msra.mxu0 0
        %454 = vmatprep.subr.bf16.mxu0 0
        %455 = vmatpush1.bf16.xpose.msra.mxu0 0
        %456 = vmatprep.subr.bf16.mxu0 0
        %457 = vmatpush1.bf16.xpose.msra.mxu0 %v440
        %458 = vmatprep.subr.bf16.mxu0 0
        %459 = vmatpush2.bf16.xpose.msra.mxu0 0
        %460 = vmatprep.subr.bf16.mxu0 0
        %461 = vmatpush2.bf16.xpose.msra.mxu0 0
        %462 = vmatprep.subr.bf16.mxu0 0
        %463 = vmatpush2.bf16.xpose.msra.mxu0 0
        %464 = vmatprep.subr.bf16.mxu0 0
        %465 = vmatpush2.bf16.xpose.msra.mxu0 0
        %466 = vmatprep.subr.bf16.mxu0 0
        %467 = vmatpush2.bf16.xpose.msra.mxu0 0
        %468 = vmatprep.subr.bf16.mxu0 0
        %469 = vmatpush2.bf16.xpose.msra.mxu0 0
        %470 = vmatprep.subr.bf16.mxu0 0
        %471 = vmatpush2.bf16.xpose.msra.mxu0 0
        %472 = vmatprep.subr.bf16.mxu0 0
        %473 = vmatpush2.bf16.xpose.msra.mxu0 0
        %474 = vmatprep.mubr.bf16.mxu0 0
        %475 = vmatmul.mubr.bf16.gmra.mxu0 %v437
        %v476 = vpop.f32.mrf.mxu0
        %v477 = vadd.f32 0.0, %v476
        %v478 = vpop.f32.mrf.mxu0
        %v479 = vpop.f32.mrf.mxu0
        %v480 = vpop.f32.mrf.mxu0
        %481 = vdwg.mxu0
        %v482 = vld [vmem:[#allocation2] sm:$0xff]
        %v483 = vld [vmem:[#allocation3] sm:$0xff]
        %v484 = vsel %vm346, %v477, -inf
        %485 = vmax.xlane.f32.xlu0 %v484
        %v486 = vpop.xlane.xlu0 %485
        %v487 = vmax.f32 %v482, %v486
        %v488 = vsub.f32 %v482, %v487
        %v489 = vmul.f32 %v488, 1.442695
        %v490 = vpow.pop %v489
        %492 = vset.pattern.permute.xlu0 1
        %493 = vperm.xlu0 %492, %v487
        %v494 = vpop.permute.xlu0 %493
        %v496 = vsub.f32 %v477, %v494
        %v497 = vmul.f32 %v496, 1.442695
        %v498 = vpow.pop %v497
        %v499 = vmul.f32 %v490, %v483
        %v500 = vsel %vm346, %v498, 0.0
        %501 = vadd.xlane.f32.xlu0 %v500
        %v502 = vpop.xlane.xlu0 %501
        %v503 = vadd.f32 %v499, %v502
        %vm504 = vcmask 15368
        %505 = vst.msk [vmem:[#allocation3] sm:$0xff] %vm504, %v503
        %v506 = vpack.c.bf16 %v498, %v498
        %507 = vrot.lane.b32.xlu0 %v374, 64
        %v508 = vpop.permute.xlu0 %507
        %v511 = vsel %vm346, %v506, 0
        %513 = vmatprep.subr.bf16.mxu0 0
        %514 = vmatpush1.bf16.msra.mxu0 0
        %515 = vmatprep.subr.bf16.mxu0 0
        %516 = vmatpush1.bf16.msra.mxu0 0
        %517 = vmatprep.subr.bf16.mxu0 0
        %518 = vmatpush1.bf16.msra.mxu0 0
        %519 = vmatprep.subr.bf16.mxu0 0
        %520 = vmatpush1.bf16.msra.mxu0 0
        %521 = vmatprep.subr.bf16.mxu0 0
        %522 = vmatpush1.bf16.msra.mxu0 0
        %523 = vmatprep.subr.bf16.mxu0 0
        %524 = vmatpush1.bf16.msra.mxu0 0
        %525 = vmatprep.subr.bf16.mxu0 0
        %526 = vmatpush1.bf16.msra.mxu0 0
        %527 = vmatprep.subr.bf16.mxu0 0
        %528 = vmatpush1.bf16.msra.mxu0 %v508
        %529 = vmatprep.subr.bf16.mxu0 0
        %530 = vmatpush2.bf16.msra.mxu0 0
        %531 = vmatprep.subr.bf16.mxu0 0
        %532 = vmatpush2.bf16.msra.mxu0 0
        %533 = vmatprep.subr.bf16.mxu0 0
        %534 = vmatpush2.bf16.msra.mxu0 0
        %535 = vmatprep.subr.bf16.mxu0 0
        %536 = vmatpush2.bf16.msra.mxu0 0
        %537 = vmatprep.subr.bf16.mxu0 0
        %538 = vmatpush2.bf16.msra.mxu0 0
        %539 = vmatprep.subr.bf16.mxu0 0
        %540 = vmatpush2.bf16.msra.mxu0 0
        %541 = vmatprep.subr.bf16.mxu0 0
        %542 = vmatpush2.bf16.msra.mxu0 0
        %543 = vmatprep.subr.bf16.mxu0 0
        %544 = vmatpush2.bf16.msra.mxu0 0
        %545 = vmatprep.mubr.bf16.mxu0 0
        %546 = vmatmul.mubr.bf16.gmra.mxu0 %v511
        %v547 = vpop.f32.mrf.mxu0
        %v548 = vadd.f32 0.0, %v547
        %v549 = vpop.f32.mrf.mxu0
        %v550 = vpop.f32.mrf.mxu0
        %v551 = vpop.f32.mrf.mxu0
        %552 = vdwg.mxu0
        %v553 = vld [vmem:[#allocation4] sm:$0xff]
        %555 = vset.pattern.permute.xlu0 1
        %556 = vperm.xlu0 %555, %v490
        %v557 = vpop.permute.xlu0 %556
        %v559 = vmul.f32 %v557, %v553
        %561 = vrot.lane.b32.xlu0 %v548, 64
        %v562 = vpop.permute.xlu0 %561
        %v564 = vadd.f32 %v559, %v562
        %vm565 = vcmask 1048064
        %566 = vst.msk [vmem:[#allocation4] sm:$0xff] %vm565, %v564
        %567 = vst.msk [vmem:[#allocation2] sm:$0xff] %vm504, %v487
        %v568 = vunpack.c.h.b16 %v282
        %v569 = vpack.c.b16 %v568, %v568
        %v570 = vunpack.c.h.b16 %v284
        %v571 = vunpack.c.h.b16 %v288
        %v572 = vpack.c.b16 %v571, %v570
        %v574 = vsel %vm297, %v569, 0
        %v577 = vsel %vm297, %v572, 0
        %579 = vmatprep.subr.bf16.mxu0 0
        %580 = vmatpush1.bf16.xpose.msra.mxu0 0
        %581 = vmatprep.subr.bf16.mxu0 0
        %582 = vmatpush1.bf16.xpose.msra.mxu0 0
        %583 = vmatprep.subr.bf16.mxu0 0
        %584 = vmatpush1.bf16.xpose.msra.mxu0 0
        %585 = vmatprep.subr.bf16.mxu0 0
        %586 = vmatpush1.bf16.xpose.msra.mxu0 0
        %587 = vmatprep.subr.bf16.mxu0 0
        %588 = vmatpush1.bf16.xpose.msra.mxu0 0
        %589 = vmatprep.subr.bf16.mxu0 0
        %590 = vmatpush1.bf16.xpose.msra.mxu0 0
        %591 = vmatprep.subr.bf16.mxu0 0
        %592 = vmatpush1.bf16.xpose.msra.mxu0 0
        %593 = vmatprep.subr.bf16.mxu0 0
        %594 = vmatpush1.bf16.xpose.msra.mxu0 %v577
        %595 = vmatprep.subr.bf16.mxu0 0
        %596 = vmatpush2.bf16.xpose.msra.mxu0 0
        %597 = vmatprep.subr.bf16.mxu0 0
        %598 = vmatpush2.bf16.xpose.msra.mxu0 0
        %599 = vmatprep.subr.bf16.mxu0 0
        %600 = vmatpush2.bf16.xpose.msra.mxu0 0
        %601 = vmatprep.subr.bf16.mxu0 0
        %602 = vmatpush2.bf16.xpose.msra.mxu0 0
        %603 = vmatprep.subr.bf16.mxu0 0
        %604 = vmatpush2.bf16.xpose.msra.mxu0 0
        %605 = vmatprep.subr.bf16.mxu0 0
        %606 = vmatpush2.bf16.xpose.msra.mxu0 0
        %607 = vmatprep.subr.bf16.mxu0 0
        %608 = vmatpush2.bf16.xpose.msra.mxu0 0
        %609 = vmatprep.subr.bf16.mxu0 0
        %610 = vmatpush2.bf16.xpose.msra.mxu0 0
        %611 = vmatprep.mubr.bf16.mxu0 0
        %612 = vmatmul.mubr.bf16.gmra.mxu0 %v574
        %v613 = vpop.f32.mrf.mxu0
        %v614 = vadd.f32 0.0, %v613
        %v615 = vpop.f32.mrf.mxu0
        %v616 = vpop.f32.mrf.mxu0
        %v617 = vpop.f32.mrf.mxu0
        %618 = vdwg.mxu0
        %v619 = vld [vmem:[#allocation2] sm:$0xff]
        %v620 = vld [vmem:[#allocation3] sm:$0xff]
        %v621 = vsel %vm346, %v614, -inf
        %622 = vmax.xlane.f32.xlu0 %v621
        %v623 = vpop.xlane.xlu0 %622
        %v624 = vmax.f32 %v619, %v623
        %v625 = vsub.f32 %v619, %v624
        %v626 = vmul.f32 %v625, 1.442695
        %v627 = vpow.pop %v626
        %629 = vset.pattern.permute.xlu0 2
        %630 = vperm.xlu0 %629, %v624
        %v631 = vpop.permute.xlu0 %630
        %v633 = vsub.f32 %v614, %v631
        %v634 = vmul.f32 %v633, 1.442695
        %v635 = vpow.pop %v634
        %v636 = vmul.f32 %v627, %v620
        %v637 = vsel %vm346, %v635, 0.0
        %638 = vadd.xlane.f32.xlu0 %v637
        %v639 = vpop.xlane.xlu0 %638
        %v640 = vadd.f32 %v636, %v639
        %vm641 = vcmask 23568
        %642 = vst.msk [vmem:[#allocation3] sm:$0xff] %vm641, %v640
        %v643 = vpack.c.bf16 %v635, %v635
        %v644 = vunpack.c.h.b16 %v286
        %v645 = vunpack.c.h.b16 %v290
        %v646 = vpack.c.b16 %v645, %v644
        %v649 = vsel %vm346, %v643, 0
        %651 = vmatprep.subr.bf16.mxu0 0
        %652 = vmatpush1.bf16.msra.mxu0 0
        %653 = vmatprep.subr.bf16.mxu0 0
        %654 = vmatpush1.bf16.msra.mxu0 0
        %655 = vmatprep.subr.bf16.mxu0 0
        %656 = vmatpush1.bf16.msra.mxu0 0
        %657 = vmatprep.subr.bf16.mxu0 0
        %658 = vmatpush1.bf16.msra.mxu0 0
        %659 = vmatprep.subr.bf16.mxu0 0
        %660 = vmatpush1.bf16.msra.mxu0 0
        %661 = vmatprep.subr.bf16.mxu0 0
        %662 = vmatpush1.bf16.msra.mxu0 0
        %663 = vmatprep.subr.bf16.mxu0 0
        %664 = vmatpush1.bf16.msra.mxu0 0
        %665 = vmatprep.subr.bf16.mxu0 0
        %666 = vmatpush1.bf16.msra.mxu0 %v646
        %667 = vmatprep.subr.bf16.mxu0 0
        %668 = vmatpush2.bf16.msra.mxu0 0
        %669 = vmatprep.subr.bf16.mxu0 0
        %670 = vmatpush2.bf16.msra.mxu0 0
        %671 = vmatprep.subr.bf16.mxu0 0
        %672 = vmatpush2.bf16.msra.mxu0 0
        %673 = vmatprep.subr.bf16.mxu0 0
        %674 = vmatpush2.bf16.msra.mxu0 0
        %675 = vmatprep.subr.bf16.mxu0 0
        %676 = vmatpush2.bf16.msra.mxu0 0
        %677 = vmatprep.subr.bf16.mxu0 0
        %678 = vmatpush2.bf16.msra.mxu0 0
        %679 = vmatprep.subr.bf16.mxu0 0
        %680 = vmatpush2.bf16.msra.mxu0 0
        %681 = vmatprep.subr.bf16.mxu0 0
        %682 = vmatpush2.bf16.msra.mxu0 0
        %683 = vmatprep.mubr.bf16.mxu0 0
        %684 = vmatmul.mubr.bf16.gmra.mxu0 %v649
        %v685 = vpop.f32.mrf.mxu0
        %v686 = vadd.f32 0.0, %v685
        %v687 = vpop.f32.mrf.mxu0
        %v688 = vpop.f32.mrf.mxu0
        %v689 = vpop.f32.mrf.mxu0
        %690 = vdwg.mxu0
        %v691 = vld [vmem:[#allocation4 + $0x8] sm:$0xff]
        %693 = vset.pattern.permute.xlu0 2
        %694 = vperm.xlu0 %693, %v627
        %v695 = vpop.permute.xlu0 %694
        %v697 = vmul.f32 %v695, %v691
        %v698 = vadd.f32 %v697, %v686
        %699 = vst.msk [vmem:[#allocation4 + $0x8] sm:$0xff] %vm297, %v698
        %700 = vst.msk [vmem:[#allocation2] sm:$0xff] %vm641, %v624
        %701 = vrot.lane.b32.xlu0 %v569, 64
        %v702 = vpop.permute.xlu0 %701
        %703 = vrot.lane.b32.xlu0 %v572, 64
        %v704 = vpop.permute.xlu0 %703
        %v706 = vsel %vm297, %v702, 0
        %v709 = vsel %vm297, %v704, 0
        %711 = vmatprep.subr.bf16.mxu0 0
        %712 = vmatpush1.bf16.xpose.msra.mxu0 0
        %713 = vmatprep.subr.bf16.mxu0 0
        %714 = vmatpush1.bf16.xpose.msra.mxu0 0
        %715 = vmatprep.subr.bf16.mxu0 0
        %716 = vmatpush1.bf16.xpose.msra.mxu0 0
        %717 = vmatprep.subr.bf16.mxu0 0
        %718 = vmatpush1.bf16.xpose.msra.mxu0 0
        %719 = vmatprep.subr.bf16.mxu0 0
        %720 = vmatpush1.bf16.xpose.msra.mxu0 0
        %721 = vmatprep.subr.bf16.mxu0 0
        %722 = vmatpush1.bf16.xpose.msra.mxu0 0
        %723 = vmatprep.subr.bf16.mxu0 0
        %724 = vmatpush1.bf16.xpose.msra.mxu0 0
        %725 = vmatprep.subr.bf16.mxu0 0
        %726 = vmatpush1.bf16.xpose.msra.mxu0 %v709
        %727 = vmatprep.subr.bf16.mxu0 0
        %728 = vmatpush2.bf16.xpose.msra.mxu0 0
        %729 = vmatprep.subr.bf16.mxu0 0
        %730 = vmatpush2.bf16.xpose.msra.mxu0 0
        %731 = vmatprep.subr.bf16.mxu0 0
        %732 = vmatpush2.bf16.xpose.msra.mxu0 0
        %733 = vmatprep.subr.bf16.mxu0 0
        %734 = vmatpush2.bf16.xpose.msra.mxu0 0
        %735 = vmatprep.subr.bf16.mxu0 0
        %736 = vmatpush2.bf16.xpose.msra.mxu0 0
        %737 = vmatprep.subr.bf16.mxu0 0
        %738 = vmatpush2.bf16.xpose.msra.mxu0 0
        %739 = vmatprep.subr.bf16.mxu0 0
        %740 = vmatpush2.bf16.xpose.msra.mxu0 0
        %741 = vmatprep.subr.bf16.mxu0 0
        %742 = vmatpush2.bf16.xpose.msra.mxu0 0
        %743 = vmatprep.mubr.bf16.mxu0 0
        %744 = vmatmul.mubr.bf16.gmra.mxu0 %v706
        %v745 = vpop.f32.mrf.mxu0
        %v746 = vadd.f32 0.0, %v745
        %v747 = vpop.f32.mrf.mxu0
        %v748 = vpop.f32.mrf.mxu0
        %v749 = vpop.f32.mrf.mxu0
        %750 = vdwg.mxu0
        %v751 = vld [vmem:[#allocation2] sm:$0xff]
        %v752 = vld [vmem:[#allocation3] sm:$0xff]
        %v753 = vsel %vm346, %v746, -inf
        %754 = vmax.xlane.f32.xlu0 %v753
        %v755 = vpop.xlane.xlu0 %754
        %v756 = vmax.f32 %v751, %v755
        %v757 = vsub.f32 %v751, %v756
        %v758 = vmul.f32 %v757, 1.442695
        %v759 = vpow.pop %v758
        %761 = vset.pattern.permute.xlu0 3
        %762 = vperm.xlu0 %761, %v756
        %v763 = vpop.permute.xlu0 %762
        %v765 = vsub.f32 %v746, %v763
        %v766 = vmul.f32 %v765, 1.442695
        %v767 = vpow.pop %v766
        %v768 = vmul.f32 %v759, %v752
        %v769 = vsel %vm346, %v767, 0.0
        %770 = vadd.xlane.f32.xlu0 %v769
        %v771 = vpop.xlane.xlu0 %770
        %v772 = vadd.f32 %v768, %v771
        %vm773 = vcmask 31768
        %774 = vst.msk [vmem:[#allocation3] sm:$0xff] %vm773, %v772
        %v775 = vpack.c.bf16 %v767, %v767
        %776 = vrot.lane.b32.xlu0 %v646, 64
        %v777 = vpop.permute.xlu0 %776
        %v780 = vsel %vm346, %v775, 0
        %782 = vmatprep.subr.bf16.mxu0 0
        %783 = vmatpush1.bf16.msra.mxu0 0
        %784 = vmatprep.subr.bf16.mxu0 0
        %785 = vmatpush1.bf16.msra.mxu0 0
        %786 = vmatprep.subr.bf16.mxu0 0
        %787 = vmatpush1.bf16.msra.mxu0 0
        %788 = vmatprep.subr.bf16.mxu0 0
        %789 = vmatpush1.bf16.msra.mxu0 0
        %790 = vmatprep.subr.bf16.mxu0 0
        %791 = vmatpush1.bf16.msra.mxu0 0
        %792 = vmatprep.subr.bf16.mxu0 0
        %793 = vmatpush1.bf16.msra.mxu0 0
        %794 = vmatprep.subr.bf16.mxu0 0
        %795 = vmatpush1.bf16.msra.mxu0 0
        %796 = vmatprep.subr.bf16.mxu0 0
        %797 = vmatpush1.bf16.msra.mxu0 %v777
        %798 = vmatprep.subr.bf16.mxu0 0
        %799 = vmatpush2.bf16.msra.mxu0 0
        %800 = vmatprep.subr.bf16.mxu0 0
        %801 = vmatpush2.bf16.msra.mxu0 0
        %802 = vmatprep.subr.bf16.mxu0 0
        %803 = vmatpush2.bf16.msra.mxu0 0
        %804 = vmatprep.subr.bf16.mxu0 0
        %805 = vmatpush2.bf16.msra.mxu0 0
        %806 = vmatprep.subr.bf16.mxu0 0
        %807 = vmatpush2.bf16.msra.mxu0 0
        %808 = vmatprep.subr.bf16.mxu0 0
        %809 = vmatpush2.bf16.msra.mxu0 0
        %810 = vmatprep.subr.bf16.mxu0 0
        %811 = vmatpush2.bf16.msra.mxu0 0
        %812 = vmatprep.subr.bf16.mxu0 0
        %813 = vmatpush2.bf16.msra.mxu0 0
        %814 = vmatprep.mubr.bf16.mxu0 0
        %815 = vmatmul.mubr.bf16.gmra.mxu0 %v780
        %v816 = vpop.f32.mrf.mxu0
        %v817 = vadd.f32 0.0, %v816
        %v818 = vpop.f32.mrf.mxu0
        %v819 = vpop.f32.mrf.mxu0
        %v820 = vpop.f32.mrf.mxu0
        %821 = vdwg.mxu0
        %v822 = vld [vmem:[#allocation4 + $0x8] sm:$0xff]
        %824 = vset.pattern.permute.xlu0 3
        %825 = vperm.xlu0 %824, %v759
        %v826 = vpop.permute.xlu0 %825
        %v828 = vmul.f32 %v826, %v822
        %830 = vrot.lane.b32.xlu0 %v817, 64
        %v831 = vpop.permute.xlu0 %830
        %v833 = vadd.f32 %v828, %v831
        %834 = vst.msk [vmem:[#allocation4 + $0x8] sm:$0xff] %vm565, %v833
        %835 = vst.msk [vmem:[#allocation2] sm:$0xff] %vm773, %v756
        %v838 = vunpack.c.l.b16 %v285
        %v839 = vunpack.c.l.b16 %v289
        %v840 = vpack.c.b16 %v839, %v838
        %v842 = vsel %vm297, %v283, 0
        %v845 = vsel %vm297, %v840, 0
        %847 = vmatprep.subr.bf16.mxu0 0
        %848 = vmatpush1.bf16.xpose.msra.mxu0 0
        %849 = vmatprep.subr.bf16.mxu0 0
        %850 = vmatpush1.bf16.xpose.msra.mxu0 0
        %851 = vmatprep.subr.bf16.mxu0 0
        %852 = vmatpush1.bf16.xpose.msra.mxu0 0
        %853 = vmatprep.subr.bf16.mxu0 0
        %854 = vmatpush1.bf16.xpose.msra.mxu0 0
        %855 = vmatprep.subr.bf16.mxu0 0
        %856 = vmatpush1.bf16.xpose.msra.mxu0 0
        %857 = vmatprep.subr.bf16.mxu0 0
        %858 = vmatpush1.bf16.xpose.msra.mxu0 0
        %859 = vmatprep.subr.bf16.mxu0 0
        %860 = vmatpush1.bf16.xpose.msra.mxu0 0
        %861 = vmatprep.subr.bf16.mxu0 0
        %862 = vmatpush1.bf16.xpose.msra.mxu0 %v845
        %863 = vmatprep.subr.bf16.mxu0 0
        %864 = vmatpush2.bf16.xpose.msra.mxu0 0
        %865 = vmatprep.subr.bf16.mxu0 0
        %866 = vmatpush2.bf16.xpose.msra.mxu0 0
        %867 = vmatprep.subr.bf16.mxu0 0
        %868 = vmatpush2.bf16.xpose.msra.mxu0 0
        %869 = vmatprep.subr.bf16.mxu0 0
        %870 = vmatpush2.bf16.xpose.msra.mxu0 0
        %871 = vmatprep.subr.bf16.mxu0 0
        %872 = vmatpush2.bf16.xpose.msra.mxu0 0
        %873 = vmatprep.subr.bf16.mxu0 0
        %874 = vmatpush2.bf16.xpose.msra.mxu0 0
        %875 = vmatprep.subr.bf16.mxu0 0
        %876 = vmatpush2.bf16.xpose.msra.mxu0 0
        %877 = vmatprep.subr.bf16.mxu0 0
        %878 = vmatpush2.bf16.xpose.msra.mxu0 0
        %879 = vmatprep.mubr.bf16.mxu0 0
        %880 = vmatmul.mubr.bf16.gmra.mxu0 %v842
        %v881 = vpop.f32.mrf.mxu0
        %v882 = vadd.f32 0.0, %v881
        %v883 = vpop.f32.mrf.mxu0
        %v884 = vpop.f32.mrf.mxu0
        %v885 = vpop.f32.mrf.mxu0
        %886 = vdwg.mxu0
        %v887 = vld [vmem:[#allocation2] sm:$0xff]
        %v888 = vld [vmem:[#allocation3] sm:$0xff]
        %v889 = vsel %vm346, %v882, -inf
        %890 = vmax.xlane.f32.xlu0 %v889
        %v891 = vpop.xlane.xlu0 %890
        %v892 = vmax.f32 %v887, %v891
        %v893 = vsub.f32 %v887, %v892
        %v894 = vmul.f32 %v893, 1.442695
        %v895 = vpow.pop %v894
        %897 = vset.pattern.permute.xlu0 4
        %898 = vperm.xlu0 %897, %v892
        %v899 = vpop.permute.xlu0 %898
        %v901 = vsub.f32 %v882, %v899
        %v902 = vmul.f32 %v901, 1.442695
        %v903 = vpow.pop %v902
        %v904 = vmul.f32 %v895, %v888
        %v905 = vsel %vm346, %v903, 0.0
        %906 = vadd.xlane.f32.xlu0 %v905
        %v907 = vpop.xlane.xlu0 %906
        %v908 = vadd.f32 %v904, %v907
        %vm909 = vcmask 39968
        %910 = vst.msk [vmem:[#allocation3] sm:$0xff] %vm909, %v908
        %v911 = vpack.c.bf16 %v903, %v903
        %v914 = vunpack.c.l.b16 %v287
        %v915 = vunpack.c.l.b16 %v291
        %v916 = vpack.c.b16 %v915, %v914
        %v919 = vsel %vm346, %v911, 0
        %921 = vmatprep.subr.bf16.mxu0 0
        %922 = vmatpush1.bf16.msra.mxu0 0
        %923 = vmatprep.subr.bf16.mxu0 0
        %924 = vmatpush1.bf16.msra.mxu0 0
        %925 = vmatprep.subr.bf16.mxu0 0
        %926 = vmatpush1.bf16.msra.mxu0 0
        %927 = vmatprep.subr.bf16.mxu0 0
        %928 = vmatpush1.bf16.msra.mxu0 0
        %929 = vmatprep.subr.bf16.mxu0 0
        %930 = vmatpush1.bf16.msra.mxu0 0
        %931 = vmatprep.subr.bf16.mxu0 0
        %932 = vmatpush1.bf16.msra.mxu0 0
        %933 = vmatprep.subr.bf16.mxu0 0
        %934 = vmatpush1.bf16.msra.mxu0 0
        %935 = vmatprep.subr.bf16.mxu0 0
        %936 = vmatpush1.bf16.msra.mxu0 %v916
        %937 = vmatprep.subr.bf16.mxu0 0
        %938 = vmatpush2.bf16.msra.mxu0 0
        %939 = vmatprep.subr.bf16.mxu0 0
        %940 = vmatpush2.bf16.msra.mxu0 0
        %941 = vmatprep.subr.bf16.mxu0 0
        %942 = vmatpush2.bf16.msra.mxu0 0
        %943 = vmatprep.subr.bf16.mxu0 0
        %944 = vmatpush2.bf16.msra.mxu0 0
        %945 = vmatprep.subr.bf16.mxu0 0
        %946 = vmatpush2.bf16.msra.mxu0 0
        %947 = vmatprep.subr.bf16.mxu0 0
        %948 = vmatpush2.bf16.msra.mxu0 0
        %949 = vmatprep.subr.bf16.mxu0 0
        %950 = vmatpush2.bf16.msra.mxu0 0
        %951 = vmatprep.subr.bf16.mxu0 0
        %952 = vmatpush2.bf16.msra.mxu0 0
        %953 = vmatprep.mubr.bf16.mxu0 0
        %954 = vmatmul.mubr.bf16.gmra.mxu0 %v919
        %v955 = vpop.f32.mrf.mxu0
        %v956 = vadd.f32 0.0, %v955
        %v957 = vpop.f32.mrf.mxu0
        %v958 = vpop.f32.mrf.mxu0
        %v959 = vpop.f32.mrf.mxu0
        %960 = vdwg.mxu0
        %v961 = vld [vmem:[#allocation4 + $0x10] sm:$0xff]
        %963 = vset.pattern.permute.xlu0 4
        %964 = vperm.xlu0 %963, %v895
        %v965 = vpop.permute.xlu0 %964
        %v967 = vmul.f32 %v965, %v961
        %v968 = vadd.f32 %v967, %v956
        %969 = vst.msk [vmem:[#allocation4 + $0x10] sm:$0xff] %vm297, %v968
        %970 = vst.msk [vmem:[#allocation2] sm:$0xff] %vm909, %v892
        %v972 = vunpack.c.l.b16 %v283
        %v973 = vpack.c.b16 %v972, %v972
        %974 = vrot.lane.b32.xlu0 %v973, 64
        %v975 = vpop.permute.xlu0 %974
        %976 = vrot.lane.b32.xlu0 %v840, 64
        %v977 = vpop.permute.xlu0 %976
        %v979 = vsel %vm297, %v975, 0
        %v982 = vsel %vm297, %v977, 0
        %984 = vmatprep.subr.bf16.mxu0 0
        %985 = vmatpush1.bf16.xpose.msra.mxu0 0
        %986 = vmatprep.subr.bf16.mxu0 0
        %987 = vmatpush1.bf16.xpose.msra.mxu0 0
        %988 = vmatprep.subr.bf16.mxu0 0
        %989 = vmatpush1.bf16.xpose.msra.mxu0 0
        %990 = vmatprep.subr.bf16.mxu0 0
        %991 = vmatpush1.bf16.xpose.msra.mxu0 0
        %992 = vmatprep.subr.bf16.mxu0 0
        %993 = vmatpush1.bf16.xpose.msra.mxu0 0
        %994 = vmatprep.subr.bf16.mxu0 0
        %995 = vmatpush1.bf16.xpose.msra.mxu0 0
        %996 = vmatprep.subr.bf16.mxu0 0
        %997 = vmatpush1.bf16.xpose.msra.mxu0 0
        %998 = vmatprep.subr.bf16.mxu0 0
        %999 = vmatpush1.bf16.xpose.msra.mxu0 %v982
        %1000 = vmatprep.subr.bf16.mxu0 0
        %1001 = vmatpush2.bf16.xpose.msra.mxu0 0
        %1002 = vmatprep.subr.bf16.mxu0 0
        %1003 = vmatpush2.bf16.xpose.msra.mxu0 0
        %1004 = vmatprep.subr.bf16.mxu0 0
        %1005 = vmatpush2.bf16.xpose.msra.mxu0 0
        %1006 = vmatprep.subr.bf16.mxu0 0
        %1007 = vmatpush2.bf16.xpose.msra.mxu0 0
        %1008 = vmatprep.subr.bf16.mxu0 0
        %1009 = vmatpush2.bf16.xpose.msra.mxu0 0
        %1010 = vmatprep.subr.bf16.mxu0 0
        %1011 = vmatpush2.bf16.xpose.msra.mxu0 0
        %1012 = vmatprep.subr.bf16.mxu0 0
        %1013 = vmatpush2.bf16.xpose.msra.mxu0 0
        %1014 = vmatprep.subr.bf16.mxu0 0
        %1015 = vmatpush2.bf16.xpose.msra.mxu0 0
        %1016 = vmatprep.mubr.bf16.mxu0 0
        %1017 = vmatmul.mubr.bf16.gmra.mxu0 %v979
        %v1018 = vpop.f32.mrf.mxu0
        %v1019 = vadd.f32 0.0, %v1018
        %v1020 = vpop.f32.mrf.mxu0
        %v1021 = vpop.f32.mrf.mxu0
        %v1022 = vpop.f32.mrf.mxu0
        %1023 = vdwg.mxu0
        %v1024 = vld [vmem:[#allocation2] sm:$0xff]
        %v1025 = vld [vmem:[#allocation3] sm:$0xff]
        %v1026 = vsel %vm346, %v1019, -inf
        %1027 = vmax.xlane.f32.xlu0 %v1026
        %v1028 = vpop.xlane.xlu0 %1027
        %v1029 = vmax.f32 %v1024, %v1028
        %v1030 = vsub.f32 %v1024, %v1029
        %v1031 = vmul.f32 %v1030, 1.442695
        %v1032 = vpow.pop %v1031
        %1034 = vset.pattern.permute.xlu0 5
        %1035 = vperm.xlu0 %1034, %v1029
        %v1036 = vpop.permute.xlu0 %1035
        %v1038 = vsub.f32 %v1019, %v1036
        %v1039 = vmul.f32 %v1038, 1.442695
        %v1040 = vpow.pop %v1039
        %v1041 = vmul.f32 %v1032, %v1025
        %v1042 = vsel %vm346, %v1040, 0.0
        %1043 = vadd.xlane.f32.xlu0 %v1042
        %v1044 = vpop.xlane.xlu0 %1043
        %v1045 = vadd.f32 %v1041, %v1044
        %vm1046 = vcmask 48168
        %1047 = vst.msk [vmem:[#allocation3] sm:$0xff] %vm1046, %v1045
        %v1048 = vpack.c.bf16 %v1040, %v1040
        %1049 = vrot.lane.b32.xlu0 %v916, 64
        %v1050 = vpop.permute.xlu0 %1049
        %v1053 = vsel %vm346, %v1048, 0
        %1055 = vmatprep.subr.bf16.mxu0 0
        %1056 = vmatpush1.bf16.msra.mxu0 0
        %1057 = vmatprep.subr.bf16.mxu0 0
        %1058 = vmatpush1.bf16.msra.mxu0 0
        %1059 = vmatprep.subr.bf16.mxu0 0
        %1060 = vmatpush1.bf16.msra.mxu0 0
        %1061 = vmatprep.subr.bf16.mxu0 0
        %1062 = vmatpush1.bf16.msra.mxu0 0
        %1063 = vmatprep.subr.bf16.mxu0 0
        %1064 = vmatpush1.bf16.msra.mxu0 0
        %1065 = vmatprep.subr.bf16.mxu0 0
        %1066 = vmatpush1.bf16.msra.mxu0 0
        %1067 = vmatprep.subr.bf16.mxu0 0
        %1068 = vmatpush1.bf16.msra.mxu0 0
        %1069 = vmatprep.subr.bf16.mxu0 0
        %1070 = vmatpush1.bf16.msra.mxu0 %v1050
        %1071 = vmatprep.subr.bf16.mxu0 0
        %1072 = vmatpush2.bf16.msra.mxu0 0
        %1073 = vmatprep.subr.bf16.mxu0 0
        %1074 = vmatpush2.bf16.msra.mxu0 0
        %1075 = vmatprep.subr.bf16.mxu0 0
        %1076 = vmatpush2.bf16.msra.mxu0 0
        %1077 = vmatprep.subr.bf16.mxu0 0
        %1078 = vmatpush2.bf16.msra.mxu0 0
        %1079 = vmatprep.subr.bf16.mxu0 0
        %1080 = vmatpush2.bf16.msra.mxu0 0
        %1081 = vmatprep.subr.bf16.mxu0 0
        %1082 = vmatpush2.bf16.msra.mxu0 0
        %1083 = vmatprep.subr.bf16.mxu0 0
        %1084 = vmatpush2.bf16.msra.mxu0 0
        %1085 = vmatprep.subr.bf16.mxu0 0
        %1086 = vmatpush2.bf16.msra.mxu0 0
        %1087 = vmatprep.mubr.bf16.mxu0 0
        %1088 = vmatmul.mubr.bf16.gmra.mxu0 %v1053
        %v1089 = vpop.f32.mrf.mxu0
        %v1090 = vadd.f32 0.0, %v1089
        %v1091 = vpop.f32.mrf.mxu0
        %v1092 = vpop.f32.mrf.mxu0
        %v1093 = vpop.f32.mrf.mxu0
        %1094 = vdwg.mxu0
        %v1095 = vld [vmem:[#allocation4 + $0x10] sm:$0xff]
        %1097 = vset.pattern.permute.xlu0 5
        %1098 = vperm.xlu0 %1097, %v1032
        %v1099 = vpop.permute.xlu0 %1098
        %v1101 = vmul.f32 %v1099, %v1095
        %1103 = vrot.lane.b32.xlu0 %v1090, 64
        %v1104 = vpop.permute.xlu0 %1103
        %v1106 = vadd.f32 %v1101, %v1104
        %1107 = vst.msk [vmem:[#allocation4 + $0x10] sm:$0xff] %vm565, %v1106
        %1108 = vst.msk [vmem:[#allocation2] sm:$0xff] %vm1046, %v1029
        %v1109 = vunpack.c.h.b16 %v283
        %v1110 = vpack.c.b16 %v1109, %v1109
        %v1111 = vunpack.c.h.b16 %v285
        %v1112 = vunpack.c.h.b16 %v289
        %v1113 = vpack.c.b16 %v1112, %v1111
        %v1115 = vsel %vm297, %v1110, 0
        %v1118 = vsel %vm297, %v1113, 0
        %1120 = vmatprep.subr.bf16.mxu0 0
        %1121 = vmatpush1.bf16.xpose.msra.mxu0 0
        %1122 = vmatprep.subr.bf16.mxu0 0
        %1123 = vmatpush1.bf16.xpose.msra.mxu0 0
        %1124 = vmatprep.subr.bf16.mxu0 0
        %1125 = vmatpush1.bf16.xpose.msra.mxu0 0
        %1126 = vmatprep.subr.bf16.mxu0 0
        %1127 = vmatpush1.bf16.xpose.msra.mxu0 0
        %1128 = vmatprep.subr.bf16.mxu0 0
        %1129 = vmatpush1.bf16.xpose.msra.mxu0 0
        %1130 = vmatprep.subr.bf16.mxu0 0
        %1131 = vmatpush1.bf16.xpose.msra.mxu0 0
        %1132 = vmatprep.subr.bf16.mxu0 0
        %1133 = vmatpush1.bf16.xpose.msra.mxu0 0
        %1134 = vmatprep.subr.bf16.mxu0 0
        %1135 = vmatpush1.bf16.xpose.msra.mxu0 %v1118
        %1136 = vmatprep.subr.bf16.mxu0 0
        %1137 = vmatpush2.bf16.xpose.msra.mxu0 0
        %1138 = vmatprep.subr.bf16.mxu0 0
        %1139 = vmatpush2.bf16.xpose.msra.mxu0 0
        %1140 = vmatprep.subr.bf16.mxu0 0
        %1141 = vmatpush2.bf16.xpose.msra.mxu0 0
        %1142 = vmatprep.subr.bf16.mxu0 0
        %1143 = vmatpush2.bf16.xpose.msra.mxu0 0
        %1144 = vmatprep.subr.bf16.mxu0 0
        %1145 = vmatpush2.bf16.xpose.msra.mxu0 0
        %1146 = vmatprep.subr.bf16.mxu0 0
        %1147 = vmatpush2.bf16.xpose.msra.mxu0 0
        %1148 = vmatprep.subr.bf16.mxu0 0
        %1149 = vmatpush2.bf16.xpose.msra.mxu0 0
        %1150 = vmatprep.subr.bf16.mxu0 0
        %1151 = vmatpush2.bf16.xpose.msra.mxu0 0
        %1152 = vmatprep.mubr.bf16.mxu0 0
        %1153 = vmatmul.mubr.bf16.gmra.mxu0 %v1115
        %v1154 = vpop.f32.mrf.mxu0
        %v1155 = vadd.f32 0.0, %v1154
        %v1156 = vpop.f32.mrf.mxu0
        %v1157 = vpop.f32.mrf.mxu0
        %v1158 = vpop.f32.mrf.mxu0
        %1159 = vdwg.mxu0
        %v1160 = vld [vmem:[#allocation2] sm:$0xff]
        %v1161 = vld [vmem:[#allocation3] sm:$0xff]
        %v1162 = vsel %vm346, %v1155, -inf
        %1163 = vmax.xlane.f32.xlu0 %v1162
        %v1164 = vpop.xlane.xlu0 %1163
        %v1165 = vmax.f32 %v1160, %v1164
        %v1166 = vsub.f32 %v1160, %v1165
        %v1167 = vmul.f32 %v1166, 1.442695
        %v1168 = vpow.pop %v1167
        %1170 = vset.pattern.permute.xlu0 6
        %1171 = vperm.xlu0 %1170, %v1165
        %v1172 = vpop.permute.xlu0 %1171
        %v1174 = vsub.f32 %v1155, %v1172
        %v1175 = vmul.f32 %v1174, 1.442695
        %v1176 = vpow.pop %v1175
        %v1177 = vmul.f32 %v1168, %v1161
        %v1178 = vsel %vm346, %v1176, 0.0
        %1179 = vadd.xlane.f32.xlu0 %v1178
        %v1180 = vpop.xlane.xlu0 %1179
        %v1181 = vadd.f32 %v1177, %v1180
        %vm1182 = vcmask 56368
        %1183 = vst.msk [vmem:[#allocation3] sm:$0xff] %vm1182, %v1181
        %v1184 = vpack.c.bf16 %v1176, %v1176
        %v1185 = vunpack.c.h.b16 %v287
        %v1186 = vunpack.c.h.b16 %v291
        %v1187 = vpack.c.b16 %v1186, %v1185
        %v1190 = vsel %vm346, %v1184, 0
        %1192 = vmatprep.subr.bf16.mxu0 0
        %1193 = vmatpush1.bf16.msra.mxu0 0
        %1194 = vmatprep.subr.bf16.mxu0 0
        %1195 = vmatpush1.bf16.msra.mxu0 0
        %1196 = vmatprep.subr.bf16.mxu0 0
        %1197 = vmatpush1.bf16.msra.mxu0 0
        %1198 = vmatprep.subr.bf16.mxu0 0
        %1199 = vmatpush1.bf16.msra.mxu0 0
        %1200 = vmatprep.subr.bf16.mxu0 0
        %1201 = vmatpush1.bf16.msra.mxu0 0
        %1202 = vmatprep.subr.bf16.mxu0 0
        %1203 = vmatpush1.bf16.msra.mxu0 0
        %1204 = vmatprep.subr.bf16.mxu0 0
        %1205 = vmatpush1.bf16.msra.mxu0 0
        %1206 = vmatprep.subr.bf16.mxu0 0
        %1207 = vmatpush1.bf16.msra.mxu0 %v1187
        %1208 = vmatprep.subr.bf16.mxu0 0
        %1209 = vmatpush2.bf16.msra.mxu0 0
        %1210 = vmatprep.subr.bf16.mxu0 0
        %1211 = vmatpush2.bf16.msra.mxu0 0
        %1212 = vmatprep.subr.bf16.mxu0 0
        %1213 = vmatpush2.bf16.msra.mxu0 0
        %1214 = vmatprep.subr.bf16.mxu0 0
        %1215 = vmatpush2.bf16.msra.mxu0 0
        %1216 = vmatprep.subr.bf16.mxu0 0
        %1217 = vmatpush2.bf16.msra.mxu0 0
        %1218 = vmatprep.subr.bf16.mxu0 0
        %1219 = vmatpush2.bf16.msra.mxu0 0
        %1220 = vmatprep.subr.bf16.mxu0 0
        %1221 = vmatpush2.bf16.msra.mxu0 0
        %1222 = vmatprep.subr.bf16.mxu0 0
        %1223 = vmatpush2.bf16.msra.mxu0 0
        %1224 = vmatprep.mubr.bf16.mxu0 0
        %1225 = vmatmul.mubr.bf16.gmra.mxu0 %v1190
        %v1226 = vpop.f32.mrf.mxu0
        %v1227 = vadd.f32 0.0, %v1226
        %v1228 = vpop.f32.mrf.mxu0
        %v1229 = vpop.f32.mrf.mxu0
        %v1230 = vpop.f32.mrf.mxu0
        %1231 = vdwg.mxu0
        %v1232 = vld [vmem:[#allocation4 + $0x18] sm:$0xff]
        %1234 = vset.pattern.permute.xlu0 6
        %1235 = vperm.xlu0 %1234, %v1168
        %v1236 = vpop.permute.xlu0 %1235
        %v1238 = vmul.f32 %v1236, %v1232
        %v1239 = vadd.f32 %v1238, %v1227
        %1240 = vst.msk [vmem:[#allocation4 + $0x18] sm:$0xff] %vm297, %v1239
        %1241 = vst.msk [vmem:[#allocation2] sm:$0xff] %vm1182, %v1165
        %1242 = vrot.lane.b32.xlu0 %v1110, 64
        %v1243 = vpop.permute.xlu0 %1242
        %1244 = vrot.lane.b32.xlu0 %v1113, 64
        %v1245 = vpop.permute.xlu0 %1244
        %v1247 = vsel %vm297, %v1243, 0
        %v1250 = vsel %vm297, %v1245, 0
        %1252 = vmatprep.subr.bf16.mxu0 0
        %1253 = vmatpush1.bf16.xpose.msra.mxu0 0
        %1254 = vmatprep.subr.bf16.mxu0 0
        %1255 = vmatpush1.bf16.xpose.msra.mxu0 0
        %1256 = vmatprep.subr.bf16.mxu0 0
        %1257 = vmatpush1.bf16.xpose.msra.mxu0 0
        %1258 = vmatprep.subr.bf16.mxu0 0
        %1259 = vmatpush1.bf16.xpose.msra.mxu0 0
        %1260 = vmatprep.subr.bf16.mxu0 0
        %1261 = vmatpush1.bf16.xpose.msra.mxu0 0
        %1262 = vmatprep.subr.bf16.mxu0 0
        %1263 = vmatpush1.bf16.xpose.msra.mxu0 0
        %1264 = vmatprep.subr.bf16.mxu0 0
        %1265 = vmatpush1.bf16.xpose.msra.mxu0 0
        %1266 = vmatprep.subr.bf16.mxu0 0
        %1267 = vmatpush1.bf16.xpose.msra.mxu0 %v1250
        %1268 = vmatprep.subr.bf16.mxu0 0
        %1269 = vmatpush2.bf16.xpose.msra.mxu0 0
        %1270 = vmatprep.subr.bf16.mxu0 0
        %1271 = vmatpush2.bf16.xpose.msra.mxu0 0
        %1272 = vmatprep.subr.bf16.mxu0 0
        %1273 = vmatpush2.bf16.xpose.msra.mxu0 0
        %1274 = vmatprep.subr.bf16.mxu0 0
        %1275 = vmatpush2.bf16.xpose.msra.mxu0 0
        %1276 = vmatprep.subr.bf16.mxu0 0
        %1277 = vmatpush2.bf16.xpose.msra.mxu0 0
        %1278 = vmatprep.subr.bf16.mxu0 0
        %1279 = vmatpush2.bf16.xpose.msra.mxu0 0
        %1280 = vmatprep.subr.bf16.mxu0 0
        %1281 = vmatpush2.bf16.xpose.msra.mxu0 0
        %1282 = vmatprep.subr.bf16.mxu0 0
        %1283 = vmatpush2.bf16.xpose.msra.mxu0 0
        %1284 = vmatprep.mubr.bf16.mxu0 0
        %1285 = vmatmul.mubr.bf16.gmra.mxu0 %v1247
        %v1286 = vpop.f32.mrf.mxu0
        %v1287 = vadd.f32 0.0, %v1286
        %v1288 = vpop.f32.mrf.mxu0
        %v1289 = vpop.f32.mrf.mxu0
        %v1290 = vpop.f32.mrf.mxu0
        %1291 = vdwg.mxu0
        %v1292 = vld [vmem:[#allocation2] sm:$0xff]
        %v1293 = vld [vmem:[#allocation3] sm:$0xff]
        %v1294 = vsel %vm346, %v1287, -inf
        %1295 = vmax.xlane.f32.xlu0 %v1294
        %v1296 = vpop.xlane.xlu0 %1295
        %v1297 = vmax.f32 %v1292, %v1296
        %v1298 = vsub.f32 %v1292, %v1297
        %v1299 = vmul.f32 %v1298, 1.442695
        %v1300 = vpow.pop %v1299
        %1302 = vset.pattern.permute.xlu0 7
        %1303 = vperm.xlu0 %1302, %v1297
        %v1304 = vpop.permute.xlu0 %1303
        %v1306 = vsub.f32 %v1287, %v1304
        %v1307 = vmul.f32 %v1306, 1.442695
        %v1308 = vpow.pop %v1307
        %v1309 = vmul.f32 %v1300, %v1293
        %v1310 = vsel %vm346, %v1308, 0.0
        %1311 = vadd.xlane.f32.xlu0 %v1310
        %v1312 = vpop.xlane.xlu0 %1311
        %v1313 = vadd.f32 %v1309, %v1312
        %vm1314 = vcmask 64568
        %1315 = vst.msk [vmem:[#allocation3] sm:$0xff] %vm1314, %v1313
        %v1316 = vpack.c.bf16 %v1308, %v1308
        %1317 = vrot.lane.b32.xlu0 %v1187, 64
        %v1318 = vpop.permute.xlu0 %1317
        %v1321 = vsel %vm346, %v1316, 0
        %1323 = vmatprep.subr.bf16.mxu0 0
        %1324 = vmatpush1.bf16.msra.mxu0 0
        %1325 = vmatprep.subr.bf16.mxu0 0
        %1326 = vmatpush1.bf16.msra.mxu0 0
        %1327 = vmatprep.subr.bf16.mxu0 0
        %1328 = vmatpush1.bf16.msra.mxu0 0
        %1329 = vmatprep.subr.bf16.mxu0 0
        %1330 = vmatpush1.bf16.msra.mxu0 0
        %1331 = vmatprep.subr.bf16.mxu0 0
        %1332 = vmatpush1.bf16.msra.mxu0 0
        %1333 = vmatprep.subr.bf16.mxu0 0
        %1334 = vmatpush1.bf16.msra.mxu0 0
        %1335 = vmatprep.subr.bf16.mxu0 0
        %1336 = vmatpush1.bf16.msra.mxu0 0
        %1337 = vmatprep.subr.bf16.mxu0 0
        %1338 = vmatpush1.bf16.msra.mxu0 %v1318
        %1339 = vmatprep.subr.bf16.mxu0 0
        %1340 = vmatpush2.bf16.msra.mxu0 0
        %1341 = vmatprep.subr.bf16.mxu0 0
        %1342 = vmatpush2.bf16.msra.mxu0 0
        %1343 = vmatprep.subr.bf16.mxu0 0
        %1344 = vmatpush2.bf16.msra.mxu0 0
        %1345 = vmatprep.subr.bf16.mxu0 0
        %1346 = vmatpush2.bf16.msra.mxu0 0
        %1347 = vmatprep.subr.bf16.mxu0 0
        %1348 = vmatpush2.bf16.msra.mxu0 0
        %1349 = vmatprep.subr.bf16.mxu0 0
        %1350 = vmatpush2.bf16.msra.mxu0 0
        %1351 = vmatprep.subr.bf16.mxu0 0
        %1352 = vmatpush2.bf16.msra.mxu0 0
        %1353 = vmatprep.subr.bf16.mxu0 0
        %1354 = vmatpush2.bf16.msra.mxu0 0
        %1355 = vmatprep.mubr.bf16.mxu0 0
        %1356 = vmatmul.mubr.bf16.gmra.mxu0 %v1321
        %v1357 = vpop.f32.mrf.mxu0
        %v1358 = vadd.f32 0.0, %v1357
        %v1359 = vpop.f32.mrf.mxu0
        %v1360 = vpop.f32.mrf.mxu0
        %v1361 = vpop.f32.mrf.mxu0
        %1362 = vdwg.mxu0
        %v1363 = vld [vmem:[#allocation4 + $0x18] sm:$0xff]
        %1365 = vset.pattern.permute.xlu0 7
        %1366 = vperm.xlu0 %1365, %v1300
        %v1367 = vpop.permute.xlu0 %1366
        %v1369 = vmul.f32 %v1367, %v1363
        %1371 = vrot.lane.b32.xlu0 %v1358, 64
        %v1372 = vpop.permute.xlu0 %1371
        %v1374 = vadd.f32 %v1369, %v1372
        %1375 = vst.msk [vmem:[#allocation4 + $0x18] sm:$0xff] %vm565, %v1374
        %1376 = vst.msk [vmem:[#allocation2] sm:$0xff] %vm1314, %v1297
        // Predicated region
        $region41: #{mha_encoder_decoder_attention.5} parent=35 // pred_check
          %p1377 = pneg %p271
        $region42: #{mha_encoder_decoder_attention.5} parent=35 // pred_check_branch
          %1379 = sbr.rel (%p1377) target = $region44
        $region43: #{mha_encoder_decoder_attention.5} parent=35 // pred_region
          %v1380 = vld [vmem:[#allocation3] sm:$0xff]
          %v1381 = vrcp.pop %v1380
          %v1382 = vld [vmem:[#allocation4] sm:$0xff]
          %1384 = vset.pattern.permute.xlu0 0
          %1385 = vperm.xlu0 %1384, %v1381
          %v1386 = vpop.permute.xlu0 %1385
          %v1388 = vmul.f32 %v1382, %v1386
          %1389 = vst.msk [vmem:[#allocation4] sm:$0xff] %vm297, %v1388
          %v1390 = vld [vmem:[#allocation3] sm:$0xff]
          %v1391 = vrcp.pop %v1390
          %v1392 = vld [vmem:[#allocation4] sm:$0xff]
          %1394 = vset.pattern.permute.xlu0 1
          %1395 = vperm.xlu0 %1394, %v1391
          %v1396 = vpop.permute.xlu0 %1395
          %v1398 = vmul.f32 %v1392, %v1396
          %1399 = vst.msk [vmem:[#allocation4] sm:$0xff] %vm565, %v1398
          %v1400 = vld [vmem:[#allocation3] sm:$0xff]
          %v1401 = vrcp.pop %v1400
          %v1402 = vld [vmem:[#allocation4 + $0x8] sm:$0xff]
          %1404 = vset.pattern.permute.xlu0 2
          %1405 = vperm.xlu0 %1404, %v1401
          %v1406 = vpop.permute.xlu0 %1405
          %v1408 = vmul.f32 %v1402, %v1406
          %1409 = vst.msk [vmem:[#allocation4 + $0x8] sm:$0xff] %vm297, %v1408
          %v1410 = vld [vmem:[#allocation3] sm:$0xff]
          %v1411 = vrcp.pop %v1410
          %v1412 = vld [vmem:[#allocation4 + $0x8] sm:$0xff]
          %1414 = vset.pattern.permute.xlu0 3
          %1415 = vperm.xlu0 %1414, %v1411
          %v1416 = vpop.permute.xlu0 %1415
          %v1418 = vmul.f32 %v1412, %v1416
          %1419 = vst.msk [vmem:[#allocation4 + $0x8] sm:$0xff] %vm565, %v1418
          %v1420 = vld [vmem:[#allocation3] sm:$0xff]
          %v1421 = vrcp.pop %v1420
          %v1422 = vld [vmem:[#allocation4 + $0x10] sm:$0xff]
          %1424 = vset.pattern.permute.xlu0 4
          %1425 = vperm.xlu0 %1424, %v1421
          %v1426 = vpop.permute.xlu0 %1425
          %v1428 = vmul.f32 %v1422, %v1426
          %1429 = vst.msk [vmem:[#allocation4 + $0x10] sm:$0xff] %vm297, %v1428
          %v1430 = vld [vmem:[#allocation3] sm:$0xff]
          %v1431 = vrcp.pop %v1430
          %v1432 = vld [vmem:[#allocation4 + $0x10] sm:$0xff]
          %1434 = vset.pattern.permute.xlu0 5
          %1435 = vperm.xlu0 %1434, %v1431
          %v1436 = vpop.permute.xlu0 %1435
          %v1438 = vmul.f32 %v1432, %v1436
          %1439 = vst.msk [vmem:[#allocation4 + $0x10] sm:$0xff] %vm565, %v1438
          %v1440 = vld [vmem:[#allocation3] sm:$0xff]
          %v1441 = vrcp.pop %v1440
          %v1442 = vld [vmem:[#allocation4 + $0x18] sm:$0xff]
          %1444 = vset.pattern.permute.xlu0 6
          %1445 = vperm.xlu0 %1444, %v1441
          %v1446 = vpop.permute.xlu0 %1445
          %v1448 = vmul.f32 %v1442, %v1446
          %1449 = vst.msk [vmem:[#allocation4 + $0x18] sm:$0xff] %vm297, %v1448
          %v1450 = vld [vmem:[#allocation3] sm:$0xff]
          %v1451 = vrcp.pop %v1450
          %v1452 = vld [vmem:[#allocation4 + $0x18] sm:$0xff]
          %1454 = vset.pattern.permute.xlu0 7
          %1455 = vperm.xlu0 %1454, %v1451
          %v1456 = vpop.permute.xlu0 %1455
          %v1458 = vmul.f32 %v1452, %v1456
          %1459 = vst.msk [vmem:[#allocation4 + $0x18] sm:$0xff] %vm565, %v1458
          %v1460 = vld [vmem:[#allocation4] sm:$0xff]
          %v1461 = vld [vmem:[#allocation4 + $0x8] sm:$0xff]
          %v1462 = vld [vmem:[#allocation4 + $0x10] sm:$0xff]
          %v1463 = vld [vmem:[#allocation4 + $0x18] sm:$0xff]
          %v1464 = vpack.c.bf16 %v1460, %v1460
          %v1465 = vpack.c.bf16 %v1461, %v1461
          %v1466 = vpack.c.bf16 %v1462, %v1462
          %v1467 = vpack.c.bf16 %v1463, %v1463
          %v1468 = vld [vmem:[%s2] sm:$0xff]
          %v1469 = vld [vmem:[%s2 + $0x8] sm:$0xff]
          %v1470 = vld [vmem:[%s2 + $0x10] sm:$0xff]
          %v1471 = vld [vmem:[%s2 + $0x18] sm:$0xff]
          %v1472 = vld [vmem:[%s2 + $0x20] sm:$0xff]
          %v1473 = vld [vmem:[%s2 + $0x28] sm:$0xff]
          %v1474 = vld [vmem:[%s2 + $0x30] sm:$0xff]
          %v1475 = vld [vmem:[%s2 + $0x38] sm:$0xff]
          %v1476 = vld [vmem:[%s2 + $0x40] sm:$0xff]
          %v1477 = vld [vmem:[%s2 + $0x48] sm:$0xff]
          %v1478 = vld [vmem:[%s2 + $0x50] sm:$0xff]
          %v1479 = vld [vmem:[%s2 + $0x58] sm:$0xff]
          %v1480 = vld [vmem:[%s2 + $0x60] sm:$0xff]
          %v1481 = vld [vmem:[%s2 + $0x68] sm:$0xff]
          %v1482 = vld [vmem:[%s2 + $0x70] sm:$0xff]
          %v1483 = vld [vmem:[%s2 + $0x78] sm:$0xff]
          %v1484 = vld [vmem:[%s2 + $0x80] sm:$0xff]
          %v1485 = vld [vmem:[%s2 + $0x88] sm:$0xff]
          %v1486 = vld [vmem:[%s2 + $0x90] sm:$0xff]
          %v1487 = vld [vmem:[%s2 + $0x98] sm:$0xff]
          %v1488 = vld [vmem:[%s2 + $0xa0] sm:$0xff]
          %v1489 = vld [vmem:[%s2 + $0xa8] sm:$0xff]
          %v1490 = vld [vmem:[%s2 + $0xb0] sm:$0xff]
          %v1491 = vld [vmem:[%s2 + $0xb8] sm:$0xff]
          %v1492 = vld [vmem:[%s2 + $0xc0] sm:$0xff]
          %v1493 = vld [vmem:[%s2 + $0xc8] sm:$0xff]
          %v1494 = vld [vmem:[%s2 + $0xd0] sm:$0xff]
          %v1495 = vld [vmem:[%s2 + $0xd8] sm:$0xff]
          %v1496 = vld [vmem:[%s2 + $0xe0] sm:$0xff]
          %v1497 = vld [vmem:[%s2 + $0xe8] sm:$0xff]
          %v1498 = vld [vmem:[%s2 + $0xf0] sm:$0xff]
          %v1499 = vld [vmem:[%s2 + $0xf8] sm:$0xff]
          %v1500 = vld [vmem:[%s2 + $0x100] sm:$0xff]
          %v1501 = vld [vmem:[%s2 + $0x108] sm:$0xff]
          %v1502 = vld [vmem:[%s2 + $0x110] sm:$0xff]
          %v1503 = vld [vmem:[%s2 + $0x118] sm:$0xff]
          %v1504 = vld [vmem:[%s2 + $0x120] sm:$0xff]
          %v1505 = vld [vmem:[%s2 + $0x128] sm:$0xff]
          %v1506 = vld [vmem:[%s2 + $0x130] sm:$0xff]
          %v1507 = vld [vmem:[%s2 + $0x138] sm:$0xff]
          %v1508 = vld [vmem:[%s2 + $0x140] sm:$0xff]
          %v1509 = vld [vmem:[%s2 + $0x148] sm:$0xff]
          %v1510 = vld [vmem:[%s2 + $0x150] sm:$0xff]
          %v1511 = vld [vmem:[%s2 + $0x158] sm:$0xff]
          %v1512 = vld [vmem:[%s2 + $0x160] sm:$0xff]
          %v1513 = vld [vmem:[%s2 + $0x168] sm:$0xff]
          %v1514 = vld [vmem:[%s2 + $0x170] sm:$0xff]
          %v1515 = vld [vmem:[%s2 + $0x178] sm:$0xff]
          %v1516 = vld [vmem:[%s2 + $0x180] sm:$0xff]
          %v1517 = vld [vmem:[%s2 + $0x188] sm:$0xff]
          %v1518 = vld [vmem:[%s2 + $0x190] sm:$0xff]
          %v1519 = vld [vmem:[%s2 + $0x198] sm:$0xff]
          %v1520 = vld [vmem:[%s2 + $0x1a0] sm:$0xff]
          %v1521 = vld [vmem:[%s2 + $0x1a8] sm:$0xff]
          %v1522 = vld [vmem:[%s2 + $0x1b0] sm:$0xff]
          %v1523 = vld [vmem:[%s2 + $0x1b8] sm:$0xff]
          %v1524 = vld [vmem:[%s2 + $0x1c0] sm:$0xff]
          %v1525 = vld [vmem:[%s2 + $0x1c8] sm:$0xff]
          %v1526 = vld [vmem:[%s2 + $0x1d0] sm:$0xff]
          %v1527 = vld [vmem:[%s2 + $0x1d8] sm:$0xff]
          %v1528 = vld [vmem:[%s2 + $0x1e0] sm:$0xff]
          %v1529 = vld [vmem:[%s2 + $0x1e8] sm:$0xff]
          %v1530 = vld [vmem:[%s2 + $0x1f0] sm:$0xff]
          %v1531 = vld [vmem:[%s2 + $0x1f8] sm:$0xff]
          %v1532 = vld [vmem:[%s2 + $0x200] sm:$0xff]
          %v1533 = vld [vmem:[%s2 + $0x208] sm:$0xff]
          %v1534 = vld [vmem:[%s2 + $0x210] sm:$0xff]
          %v1535 = vld [vmem:[%s2 + $0x218] sm:$0xff]
          %v1536 = vld [vmem:[%s2 + $0x220] sm:$0xff]
          %v1537 = vld [vmem:[%s2 + $0x228] sm:$0xff]
          %v1538 = vld [vmem:[%s2 + $0x230] sm:$0xff]
          %v1539 = vld [vmem:[%s2 + $0x238] sm:$0xff]
          %v1540 = vld [vmem:[%s2 + $0x240] sm:$0xff]
          %v1541 = vld [vmem:[%s2 + $0x248] sm:$0xff]
          %v1542 = vld [vmem:[%s2 + $0x250] sm:$0xff]
          %v1543 = vld [vmem:[%s2 + $0x258] sm:$0xff]
          %v1544 = vld [vmem:[%s2 + $0x260] sm:$0xff]
          %v1545 = vld [vmem:[%s2 + $0x268] sm:$0xff]
          %v1546 = vld [vmem:[%s2 + $0x270] sm:$0xff]
          %v1547 = vld [vmem:[%s2 + $0x278] sm:$0xff]
          %v1548 = vld [vmem:[%s2 + $0x280] sm:$0xff]
          %v1549 = vld [vmem:[%s2 + $0x288] sm:$0xff]
          %v1550 = vld [vmem:[%s2 + $0x290] sm:$0xff]
          %v1551 = vld [vmem:[%s2 + $0x298] sm:$0xff]
          %v1552 = vld [vmem:[%s2 + $0x2a0] sm:$0xff]
          %v1553 = vld [vmem:[%s2 + $0x2a8] sm:$0xff]
          %v1554 = vld [vmem:[%s2 + $0x2b0] sm:$0xff]
          %v1555 = vld [vmem:[%s2 + $0x2b8] sm:$0xff]
          %v1556 = vld [vmem:[%s2 + $0x2c0] sm:$0xff]
          %v1557 = vld [vmem:[%s2 + $0x2c8] sm:$0xff]
          %v1558 = vld [vmem:[%s2 + $0x2d0] sm:$0xff]
          %v1559 = vld [vmem:[%s2 + $0x2d8] sm:$0xff]
          %v1560 = vld [vmem:[%s2 + $0x2e0] sm:$0xff]
          %v1561 = vld [vmem:[%s2 + $0x2e8] sm:$0xff]
          %v1562 = vld [vmem:[%s2 + $0x2f0] sm:$0xff]
          %v1563 = vld [vmem:[%s2 + $0x2f8] sm:$0xff]
          %v1564 = vld [vmem:[%s2 + $0x300] sm:$0xff]
          %v1565 = vld [vmem:[%s2 + $0x308] sm:$0xff]
          %v1566 = vld [vmem:[%s2 + $0x310] sm:$0xff]
          %v1567 = vld [vmem:[%s2 + $0x318] sm:$0xff]
          %v1568 = vld [vmem:[%s2 + $0x320] sm:$0xff]
          %v1569 = vld [vmem:[%s2 + $0x328] sm:$0xff]
          %v1570 = vld [vmem:[%s2 + $0x330] sm:$0xff]
          %v1571 = vld [vmem:[%s2 + $0x338] sm:$0xff]
          %v1572 = vld [vmem:[%s2 + $0x340] sm:$0xff]
          %v1573 = vld [vmem:[%s2 + $0x348] sm:$0xff]
          %v1574 = vld [vmem:[%s2 + $0x350] sm:$0xff]
          %v1575 = vld [vmem:[%s2 + $0x358] sm:$0xff]
          %v1576 = vld [vmem:[%s2 + $0x360] sm:$0xff]
          %v1577 = vld [vmem:[%s2 + $0x368] sm:$0xff]
          %v1578 = vld [vmem:[%s2 + $0x370] sm:$0xff]
          %v1579 = vld [vmem:[%s2 + $0x378] sm:$0xff]
          %v1580 = vld [vmem:[%s2 + $0x380] sm:$0xff]
          %v1581 = vld [vmem:[%s2 + $0x388] sm:$0xff]
          %v1582 = vld [vmem:[%s2 + $0x390] sm:$0xff]
          %v1583 = vld [vmem:[%s2 + $0x398] sm:$0xff]
          %v1584 = vld [vmem:[%s2 + $0x3a0] sm:$0xff]
          %v1585 = vld [vmem:[%s2 + $0x3a8] sm:$0xff]
          %v1586 = vld [vmem:[%s2 + $0x3b0] sm:$0xff]
          %v1587 = vld [vmem:[%s2 + $0x3b8] sm:$0xff]
          %v1588 = vld [vmem:[%s2 + $0x3c0] sm:$0xff]
          %v1589 = vld [vmem:[%s2 + $0x3c8] sm:$0xff]
          %v1590 = vld [vmem:[%s2 + $0x3d0] sm:$0xff]
          %v1591 = vld [vmem:[%s2 + $0x3d8] sm:$0xff]
          %v1592 = vld [vmem:[%s2 + $0x3e0] sm:$0xff]
          %v1593 = vld [vmem:[%s2 + $0x3e8] sm:$0xff]
          %v1594 = vld [vmem:[%s2 + $0x3f0] sm:$0xff]
          %v1595 = vld [vmem:[%s2 + $0x3f8] sm:$0xff]
          %v1596 = vld [vmem:[%s2 + $0x400] sm:$0xff]
          %v1597 = vld [vmem:[%s2 + $0x408] sm:$0xff]
          %v1598 = vld [vmem:[%s2 + $0x410] sm:$0xff]
          %v1599 = vld [vmem:[%s2 + $0x418] sm:$0xff]
          %v1600 = vld [vmem:[%s2 + $0x420] sm:$0xff]
          %v1601 = vld [vmem:[%s2 + $0x428] sm:$0xff]
          %v1602 = vld [vmem:[%s2 + $0x430] sm:$0xff]
          %v1603 = vld [vmem:[%s2 + $0x438] sm:$0xff]
          %v1604 = vld [vmem:[%s2 + $0x440] sm:$0xff]
          %v1605 = vld [vmem:[%s2 + $0x448] sm:$0xff]
          %v1606 = vld [vmem:[%s2 + $0x450] sm:$0xff]
          %v1607 = vld [vmem:[%s2 + $0x458] sm:$0xff]
          %v1608 = vld [vmem:[%s2 + $0x460] sm:$0xff]
          %v1609 = vld [vmem:[%s2 + $0x468] sm:$0xff]
          %v1610 = vld [vmem:[%s2 + $0x470] sm:$0xff]
          %v1611 = vld [vmem:[%s2 + $0x478] sm:$0xff]
          %v1612 = vld [vmem:[%s2 + $0x480] sm:$0xff]
          %v1613 = vld [vmem:[%s2 + $0x488] sm:$0xff]
          %v1614 = vld [vmem:[%s2 + $0x490] sm:$0xff]
          %v1615 = vld [vmem:[%s2 + $0x498] sm:$0xff]
          %v1616 = vld [vmem:[%s2 + $0x4a0] sm:$0xff]
          %v1617 = vld [vmem:[%s2 + $0x4a8] sm:$0xff]
          %v1618 = vld [vmem:[%s2 + $0x4b0] sm:$0xff]
          %v1619 = vld [vmem:[%s2 + $0x4b8] sm:$0xff]
          %v1620 = vld [vmem:[%s2 + $0x4c0] sm:$0xff]
          %v1621 = vld [vmem:[%s2 + $0x4c8] sm:$0xff]
          %v1622 = vld [vmem:[%s2 + $0x4d0] sm:$0xff]
          %v1623 = vld [vmem:[%s2 + $0x4d8] sm:$0xff]
          %v1624 = vld [vmem:[%s2 + $0x4e0] sm:$0xff]
          %v1625 = vld [vmem:[%s2 + $0x4e8] sm:$0xff]
          %v1626 = vld [vmem:[%s2 + $0x4f0] sm:$0xff]
          %v1627 = vld [vmem:[%s2 + $0x4f8] sm:$0xff]
          %v1628 = vld [vmem:[%s2 + $0x500] sm:$0xff]
          %v1629 = vld [vmem:[%s2 + $0x508] sm:$0xff]
          %v1630 = vld [vmem:[%s2 + $0x510] sm:$0xff]
          %v1631 = vld [vmem:[%s2 + $0x518] sm:$0xff]
          %v1632 = vld [vmem:[%s2 + $0x520] sm:$0xff]
          %v1633 = vld [vmem:[%s2 + $0x528] sm:$0xff]
          %v1634 = vld [vmem:[%s2 + $0x530] sm:$0xff]
          %v1635 = vld [vmem:[%s2 + $0x538] sm:$0xff]
          %v1636 = vld [vmem:[%s2 + $0x540] sm:$0xff]
          %v1637 = vld [vmem:[%s2 + $0x548] sm:$0xff]
          %v1638 = vld [vmem:[%s2 + $0x550] sm:$0xff]
          %v1639 = vld [vmem:[%s2 + $0x558] sm:$0xff]
          %v1640 = vld [vmem:[%s2 + $0x560] sm:$0xff]
          %v1641 = vld [vmem:[%s2 + $0x568] sm:$0xff]
          %v1642 = vld [vmem:[%s2 + $0x570] sm:$0xff]
          %v1643 = vld [vmem:[%s2 + $0x578] sm:$0xff]
          %v1644 = vld [vmem:[%s2 + $0x580] sm:$0xff]
          %v1645 = vld [vmem:[%s2 + $0x588] sm:$0xff]
          %v1646 = vld [vmem:[%s2 + $0x590] sm:$0xff]
          %v1647 = vld [vmem:[%s2 + $0x598] sm:$0xff]
          %v1648 = vld [vmem:[%s2 + $0x5a0] sm:$0xff]
          %v1649 = vld [vmem:[%s2 + $0x5a8] sm:$0xff]
          %v1650 = vld [vmem:[%s2 + $0x5b0] sm:$0xff]
          %v1651 = vld [vmem:[%s2 + $0x5b8] sm:$0xff]
          %v1652 = vld [vmem:[%s2 + $0x5c0] sm:$0xff]
          %v1653 = vld [vmem:[%s2 + $0x5c8] sm:$0xff]
          %v1654 = vld [vmem:[%s2 + $0x5d0] sm:$0xff]
          %v1655 = vld [vmem:[%s2 + $0x5d8] sm:$0xff]
          %v1656 = vld [vmem:[%s2 + $0x5e0] sm:$0xff]
          %v1657 = vld [vmem:[%s2 + $0x5e8] sm:$0xff]
          %v1658 = vld [vmem:[%s2 + $0x5f0] sm:$0xff]
          %v1659 = vld [vmem:[%s2 + $0x5f8] sm:$0xff]
          %v1660 = vld [vmem:[%s2 + $0x600] sm:$0xff]
          %v1661 = vld [vmem:[%s2 + $0x608] sm:$0xff]
          %v1662 = vld [vmem:[%s2 + $0x610] sm:$0xff]
          %v1663 = vld [vmem:[%s2 + $0x618] sm:$0xff]
          %v1664 = vld [vmem:[%s2 + $0x620] sm:$0xff]
          %v1665 = vld [vmem:[%s2 + $0x628] sm:$0xff]
          %v1666 = vld [vmem:[%s2 + $0x630] sm:$0xff]
          %v1667 = vld [vmem:[%s2 + $0x638] sm:$0xff]
          %v1668 = vld [vmem:[%s2 + $0x640] sm:$0xff]
          %v1669 = vld [vmem:[%s2 + $0x648] sm:$0xff]
          %v1670 = vld [vmem:[%s2 + $0x650] sm:$0xff]
          %v1671 = vld [vmem:[%s2 + $0x658] sm:$0xff]
          %v1672 = vld [vmem:[%s2 + $0x660] sm:$0xff]
          %v1673 = vld [vmem:[%s2 + $0x668] sm:$0xff]
          %v1674 = vld [vmem:[%s2 + $0x670] sm:$0xff]
          %v1675 = vld [vmem:[%s2 + $0x678] sm:$0xff]
          %v1676 = vld [vmem:[%s2 + $0x680] sm:$0xff]
          %v1677 = vld [vmem:[%s2 + $0x688] sm:$0xff]
          %v1678 = vld [vmem:[%s2 + $0x690] sm:$0xff]
          %v1679 = vld [vmem:[%s2 + $0x698] sm:$0xff]
          %v1680 = vld [vmem:[%s2 + $0x6a0] sm:$0xff]
          %v1681 = vld [vmem:[%s2 + $0x6a8] sm:$0xff]
          %v1682 = vld [vmem:[%s2 + $0x6b0] sm:$0xff]
          %v1683 = vld [vmem:[%s2 + $0x6b8] sm:$0xff]
          %v1684 = vld [vmem:[%s2 + $0x6c0] sm:$0xff]
          %v1685 = vld [vmem:[%s2 + $0x6c8] sm:$0xff]
          %v1686 = vld [vmem:[%s2 + $0x6d0] sm:$0xff]
          %v1687 = vld [vmem:[%s2 + $0x6d8] sm:$0xff]
          %v1688 = vld [vmem:[%s2 + $0x6e0] sm:$0xff]
          %v1689 = vld [vmem:[%s2 + $0x6e8] sm:$0xff]
          %v1690 = vld [vmem:[%s2 + $0x6f0] sm:$0xff]
          %v1691 = vld [vmem:[%s2 + $0x6f8] sm:$0xff]
          %v1692 = vld [vmem:[%s2 + $0x700] sm:$0xff]
          %v1693 = vld [vmem:[%s2 + $0x708] sm:$0xff]
          %v1694 = vld [vmem:[%s2 + $0x710] sm:$0xff]
          %v1695 = vld [vmem:[%s2 + $0x718] sm:$0xff]
          %v1696 = vld [vmem:[%s2 + $0x720] sm:$0xff]
          %v1697 = vld [vmem:[%s2 + $0x728] sm:$0xff]
          %v1698 = vld [vmem:[%s2 + $0x730] sm:$0xff]
          %v1699 = vld [vmem:[%s2 + $0x738] sm:$0xff]
          %v1700 = vld [vmem:[%s2 + $0x740] sm:$0xff]
          %v1701 = vld [vmem:[%s2 + $0x748] sm:$0xff]
          %v1702 = vld [vmem:[%s2 + $0x750] sm:$0xff]
          %v1703 = vld [vmem:[%s2 + $0x758] sm:$0xff]
          %v1704 = vld [vmem:[%s2 + $0x760] sm:$0xff]
          %v1705 = vld [vmem:[%s2 + $0x768] sm:$0xff]
          %v1706 = vld [vmem:[%s2 + $0x770] sm:$0xff]
          %v1707 = vld [vmem:[%s2 + $0x778] sm:$0xff]
          %v1708 = vld [vmem:[%s2 + $0x780] sm:$0xff]
          %v1709 = vld [vmem:[%s2 + $0x788] sm:$0xff]
          %v1710 = vld [vmem:[%s2 + $0x790] sm:$0xff]
          %v1711 = vld [vmem:[%s2 + $0x798] sm:$0xff]
          %v1712 = vld [vmem:[%s2 + $0x7a0] sm:$0xff]
          %v1713 = vld [vmem:[%s2 + $0x7a8] sm:$0xff]
          %v1714 = vld [vmem:[%s2 + $0x7b0] sm:$0xff]
          %v1715 = vld [vmem:[%s2 + $0x7b8] sm:$0xff]
          %v1716 = vld [vmem:[%s2 + $0x7c0] sm:$0xff]
          %v1717 = vld [vmem:[%s2 + $0x7c8] sm:$0xff]
          %v1718 = vld [vmem:[%s2 + $0x7d0] sm:$0xff]
          %v1719 = vld [vmem:[%s2 + $0x7d8] sm:$0xff]
          %v1720 = vld [vmem:[%s2 + $0x7e0] sm:$0xff]
          %v1721 = vld [vmem:[%s2 + $0x7e8] sm:$0xff]
          %v1722 = vld [vmem:[%s2 + $0x7f0] sm:$0xff]
          %v1723 = vld [vmem:[%s2 + $0x7f8] sm:$0xff]
          %v1724 = vpack.c.bf16 %v1472, %v1468
          %v1725 = vpack.c.bf16 %v1473, %v1469
          %v1726 = vpack.c.bf16 %v1474, %v1470
          %v1727 = vpack.c.bf16 %v1475, %v1471
          %v1728 = vpack.c.bf16 %v1480, %v1476
          %v1729 = vpack.c.bf16 %v1481, %v1477
          %v1730 = vpack.c.bf16 %v1482, %v1478
          %v1731 = vpack.c.bf16 %v1483, %v1479
          %v1732 = vpack.c.bf16 %v1488, %v1484
          %v1733 = vpack.c.bf16 %v1489, %v1485
          %v1734 = vpack.c.bf16 %v1490, %v1486
          %v1735 = vpack.c.bf16 %v1491, %v1487
          %v1736 = vpack.c.bf16 %v1496, %v1492
          %v1737 = vpack.c.bf16 %v1497, %v1493
          %v1738 = vpack.c.bf16 %v1498, %v1494
          %v1739 = vpack.c.bf16 %v1499, %v1495
          %v1740 = vpack.c.bf16 %v1504, %v1500
          %v1741 = vpack.c.bf16 %v1505, %v1501
          %v1742 = vpack.c.bf16 %v1506, %v1502
          %v1743 = vpack.c.bf16 %v1507, %v1503
          %v1744 = vpack.c.bf16 %v1512, %v1508
          %v1745 = vpack.c.bf16 %v1513, %v1509
          %v1746 = vpack.c.bf16 %v1514, %v1510
          %v1747 = vpack.c.bf16 %v1515, %v1511
          %v1748 = vpack.c.bf16 %v1520, %v1516
          %v1749 = vpack.c.bf16 %v1521, %v1517
          %v1750 = vpack.c.bf16 %v1522, %v1518
          %v1751 = vpack.c.bf16 %v1523, %v1519
          %v1752 = vpack.c.bf16 %v1528, %v1524
          %v1753 = vpack.c.bf16 %v1529, %v1525
          %v1754 = vpack.c.bf16 %v1530, %v1526
          %v1755 = vpack.c.bf16 %v1531, %v1527
          %v1756 = vpack.c.bf16 %v1536, %v1532
          %v1757 = vpack.c.bf16 %v1537, %v1533
          %v1758 = vpack.c.bf16 %v1538, %v1534
          %v1759 = vpack.c.bf16 %v1539, %v1535
          %v1760 = vpack.c.bf16 %v1544, %v1540
          %v1761 = vpack.c.bf16 %v1545, %v1541
          %v1762 = vpack.c.bf16 %v1546, %v1542
          %v1763 = vpack.c.bf16 %v1547, %v1543
          %v1764 = vpack.c.bf16 %v1552, %v1548
          %v1765 = vpack.c.bf16 %v1553, %v1549
          %v1766 = vpack.c.bf16 %v1554, %v1550
          %v1767 = vpack.c.bf16 %v1555, %v1551
          %v1768 = vpack.c.bf16 %v1560, %v1556
          %v1769 = vpack.c.bf16 %v1561, %v1557
          %v1770 = vpack.c.bf16 %v1562, %v1558
          %v1771 = vpack.c.bf16 %v1563, %v1559
          %v1772 = vpack.c.bf16 %v1568, %v1564
          %v1773 = vpack.c.bf16 %v1569, %v1565
          %v1774 = vpack.c.bf16 %v1570, %v1566
          %v1775 = vpack.c.bf16 %v1571, %v1567
          %v1776 = vpack.c.bf16 %v1576, %v1572
          %v1777 = vpack.c.bf16 %v1577, %v1573
          %v1778 = vpack.c.bf16 %v1578, %v1574
          %v1779 = vpack.c.bf16 %v1579, %v1575
          %v1780 = vpack.c.bf16 %v1584, %v1580
          %v1781 = vpack.c.bf16 %v1585, %v1581
          %v1782 = vpack.c.bf16 %v1586, %v1582
          %v1783 = vpack.c.bf16 %v1587, %v1583
          %v1784 = vpack.c.bf16 %v1592, %v1588
          %v1785 = vpack.c.bf16 %v1593, %v1589
          %v1786 = vpack.c.bf16 %v1594, %v1590
          %v1787 = vpack.c.bf16 %v1595, %v1591
          %v1788 = vpack.c.bf16 %v1600, %v1596
          %v1789 = vpack.c.bf16 %v1601, %v1597
          %v1790 = vpack.c.bf16 %v1602, %v1598
          %v1791 = vpack.c.bf16 %v1603, %v1599
          %v1792 = vpack.c.bf16 %v1608, %v1604
          %v1793 = vpack.c.bf16 %v1609, %v1605
          %v1794 = vpack.c.bf16 %v1610, %v1606
          %v1795 = vpack.c.bf16 %v1611, %v1607
          %v1796 = vpack.c.bf16 %v1616, %v1612
          %v1797 = vpack.c.bf16 %v1617, %v1613
          %v1798 = vpack.c.bf16 %v1618, %v1614
          %v1799 = vpack.c.bf16 %v1619, %v1615
          %v1800 = vpack.c.bf16 %v1624, %v1620
          %v1801 = vpack.c.bf16 %v1625, %v1621
          %v1802 = vpack.c.bf16 %v1626, %v1622
          %v1803 = vpack.c.bf16 %v1627, %v1623
          %v1804 = vpack.c.bf16 %v1632, %v1628
          %v1805 = vpack.c.bf16 %v1633, %v1629
          %v1806 = vpack.c.bf16 %v1634, %v1630
          %v1807 = vpack.c.bf16 %v1635, %v1631
          %v1808 = vpack.c.bf16 %v1640, %v1636
          %v1809 = vpack.c.bf16 %v1641, %v1637
          %v1810 = vpack.c.bf16 %v1642, %v1638
          %v1811 = vpack.c.bf16 %v1643, %v1639
          %v1812 = vpack.c.bf16 %v1648, %v1644
          %v1813 = vpack.c.bf16 %v1649, %v1645
          %v1814 = vpack.c.bf16 %v1650, %v1646
          %v1815 = vpack.c.bf16 %v1651, %v1647
          %v1816 = vpack.c.bf16 %v1656, %v1652
          %v1817 = vpack.c.bf16 %v1657, %v1653
          %v1818 = vpack.c.bf16 %v1658, %v1654
          %v1819 = vpack.c.bf16 %v1659, %v1655
          %v1820 = vpack.c.bf16 %v1664, %v1660
          %v1821 = vpack.c.bf16 %v1665, %v1661
          %v1822 = vpack.c.bf16 %v1666, %v1662
          %v1823 = vpack.c.bf16 %v1667, %v1663
          %v1824 = vpack.c.bf16 %v1672, %v1668
          %v1825 = vpack.c.bf16 %v1673, %v1669
          %v1826 = vpack.c.bf16 %v1674, %v1670
          %v1827 = vpack.c.bf16 %v1675, %v1671
          %v1828 = vpack.c.bf16 %v1680, %v1676
          %v1829 = vpack.c.bf16 %v1681, %v1677
          %v1830 = vpack.c.bf16 %v1682, %v1678
          %v1831 = vpack.c.bf16 %v1683, %v1679
          %v1832 = vpack.c.bf16 %v1688, %v1684
          %v1833 = vpack.c.bf16 %v1689, %v1685
          %v1834 = vpack.c.bf16 %v1690, %v1686
          %v1835 = vpack.c.bf16 %v1691, %v1687
          %v1836 = vpack.c.bf16 %v1696, %v1692
          %v1837 = vpack.c.bf16 %v1697, %v1693
          %v1838 = vpack.c.bf16 %v1698, %v1694
          %v1839 = vpack.c.bf16 %v1699, %v1695
          %v1840 = vpack.c.bf16 %v1704, %v1700
          %v1841 = vpack.c.bf16 %v1705, %v1701
          %v1842 = vpack.c.bf16 %v1706, %v1702
          %v1843 = vpack.c.bf16 %v1707, %v1703
          %v1844 = vpack.c.bf16 %v1712, %v1708
          %v1845 = vpack.c.bf16 %v1713, %v1709
          %v1846 = vpack.c.bf16 %v1714, %v1710
          %v1847 = vpack.c.bf16 %v1715, %v1711
          %v1848 = vpack.c.bf16 %v1720, %v1716
          %v1849 = vpack.c.bf16 %v1721, %v1717
          %v1850 = vpack.c.bf16 %v1722, %v1718
          %v1851 = vpack.c.bf16 %v1723, %v1719
          %v1852 = vld [vmem:[%s3] sm:$0xf]
          %v1854 = vlaneseq
          %v1855 = vshrl.u32 %v1854, 7
          %v1856 = vsub.s32 0, %v1855
          %v1857 = vrot.slane %v1852, %v1856
          %v1858 = vlaneseq
          %v1859 = vshrl.u32 %v1858, 7
          %v1860 = vsub.s32 1, %v1859
          %v1861 = vrot.slane %v1852, %v1860
          %v1862 = vlaneseq
          %v1863 = vshrl.u32 %v1862, 7
          %v1864 = vsub.s32 2, %v1863
          %v1865 = vrot.slane %v1852, %v1864
          %v1866 = vlaneseq
          %v1867 = vshrl.u32 %v1866, 7
          %v1868 = vsub.s32 3, %v1867
          %v1869 = vrot.slane %v1852, %v1868
          %1874 = vmatprep.subr.bf16.mxu0 %v1753
          %1875 = vmatpush1.bf16.xpose.msra.mxu0 %v1752
          %1876 = vmatprep.subr.bf16.mxu0 %v1749
          %1877 = vmatpush1.bf16.xpose.msra.mxu0 %v1748
          %1878 = vmatprep.subr.bf16.mxu0 %v1745
          %1879 = vmatpush1.bf16.xpose.msra.mxu0 %v1744
          %1880 = vmatprep.subr.bf16.mxu0 %v1741
          %1881 = vmatpush1.bf16.xpose.msra.mxu0 %v1740
          %1882 = vmatprep.subr.bf16.mxu0 %v1737
          %1883 = vmatpush1.bf16.xpose.msra.mxu0 %v1736
          %1884 = vmatprep.subr.bf16.mxu0 %v1733
          %1885 = vmatpush1.bf16.xpose.msra.mxu0 %v1732
          %1886 = vmatprep.subr.bf16.mxu0 %v1729
          %1887 = vmatpush1.bf16.xpose.msra.mxu0 %v1728
          %1888 = vmatprep.subr.bf16.mxu0 %v1725
          %1889 = vmatpush1.bf16.xpose.msra.mxu0 %v1724
          %1890 = vmatprep.subr.bf16.mxu0 %v1785
          %1891 = vmatpush2.bf16.xpose.msra.mxu0 %v1784
          %1892 = vmatprep.subr.bf16.mxu0 %v1781
          %1893 = vmatpush2.bf16.xpose.msra.mxu0 %v1780
          %1894 = vmatprep.subr.bf16.mxu0 %v1777
          %1895 = vmatpush2.bf16.xpose.msra.mxu0 %v1776
          %1896 = vmatprep.subr.bf16.mxu0 %v1773
          %1897 = vmatpush2.bf16.xpose.msra.mxu0 %v1772
          %1898 = vmatprep.subr.bf16.mxu0 %v1769
          %1899 = vmatpush2.bf16.xpose.msra.mxu0 %v1768
          %1900 = vmatprep.subr.bf16.mxu0 %v1765
          %1901 = vmatpush2.bf16.xpose.msra.mxu0 %v1764
          %1902 = vmatprep.subr.bf16.mxu0 %v1761
          %1903 = vmatpush2.bf16.xpose.msra.mxu0 %v1760
          %1904 = vmatprep.subr.bf16.mxu0 %v1757
          %1905 = vmatpush2.bf16.xpose.msra.mxu0 %v1756
          %1906 = vmatprep.mubr.bf16.mxu0 %v1465
          %1907 = vmatmul.mubr.bf16.gmra.mxu0 %v1464
          %v1908 = vpop.f32.mrf.mxu0
          %v1909 = vadd.f32 %v1857, %v1908
          %v1910 = vpop.f32.mrf.mxu0
          %v1911 = vadd.f32 %v1861, %v1910
          %v1912 = vpop.f32.mrf.mxu0
          %v1913 = vpop.f32.mrf.mxu0
          %1914 = vdwg.mxu0
          %1915 = vmatprep.subr.bf16.mxu0 %v1755
          %1916 = vmatpush1.bf16.xpose.msra.mxu0 %v1754
          %1917 = vmatprep.subr.bf16.mxu0 %v1751
          %1918 = vmatpush1.bf16.xpose.msra.mxu0 %v1750
          %1919 = vmatprep.subr.bf16.mxu0 %v1747
          %1920 = vmatpush1.bf16.xpose.msra.mxu0 %v1746
          %1921 = vmatprep.subr.bf16.mxu0 %v1743
          %1922 = vmatpush1.bf16.xpose.msra.mxu0 %v1742
          %1923 = vmatprep.subr.bf16.mxu0 %v1739
          %1924 = vmatpush1.bf16.xpose.msra.mxu0 %v1738
          %1925 = vmatprep.subr.bf16.mxu0 %v1735
          %1926 = vmatpush1.bf16.xpose.msra.mxu0 %v1734
          %1927 = vmatprep.subr.bf16.mxu0 %v1731
          %1928 = vmatpush1.bf16.xpose.msra.mxu0 %v1730
          %1929 = vmatprep.subr.bf16.mxu0 %v1727
          %1930 = vmatpush1.bf16.xpose.msra.mxu0 %v1726
          %1931 = vmatprep.subr.bf16.mxu0 %v1787
          %1932 = vmatpush2.bf16.xpose.msra.mxu0 %v1786
          %1933 = vmatprep.subr.bf16.mxu0 %v1783
          %1934 = vmatpush2.bf16.xpose.msra.mxu0 %v1782
          %1935 = vmatprep.subr.bf16.mxu0 %v1779
          %1936 = vmatpush2.bf16.xpose.msra.mxu0 %v1778
          %1937 = vmatprep.subr.bf16.mxu0 %v1775
          %1938 = vmatpush2.bf16.xpose.msra.mxu0 %v1774
          %1939 = vmatprep.subr.bf16.mxu0 %v1771
          %1940 = vmatpush2.bf16.xpose.msra.mxu0 %v1770
          %1941 = vmatprep.subr.bf16.mxu0 %v1767
          %1942 = vmatpush2.bf16.xpose.msra.mxu0 %v1766
          %1943 = vmatprep.subr.bf16.mxu0 %v1763
          %1944 = vmatpush2.bf16.xpose.msra.mxu0 %v1762
          %1945 = vmatprep.subr.bf16.mxu0 %v1759
          %1946 = vmatpush2.bf16.xpose.msra.mxu0 %v1758
          %1947 = vmatprep.mubr.bf16.mxu0 %v1467
          %1948 = vmatmul.mubr.bf16.gmra.mxu0 %v1466
          %v1949 = vpop.f32.mrf.mxu0
          %v1950 = vadd.f32 %v1909, %v1949
          %v1951 = vpop.f32.mrf.mxu0
          %v1952 = vadd.f32 %v1911, %v1951
          %v1953 = vpop.f32.mrf.mxu0
          %v1954 = vpop.f32.mrf.mxu0
          %1955 = vdwg.mxu0
          %1956 = vmatprep.subr.bf16.mxu0 %v1817
          %1957 = vmatpush1.bf16.xpose.msra.mxu0 %v1816
          %1958 = vmatprep.subr.bf16.mxu0 %v1813
          %1959 = vmatpush1.bf16.xpose.msra.mxu0 %v1812
          %1960 = vmatprep.subr.bf16.mxu0 %v1809
          %1961 = vmatpush1.bf16.xpose.msra.mxu0 %v1808
          %1962 = vmatprep.subr.bf16.mxu0 %v1805
          %1963 = vmatpush1.bf16.xpose.msra.mxu0 %v1804
          %1964 = vmatprep.subr.bf16.mxu0 %v1801
          %1965 = vmatpush1.bf16.xpose.msra.mxu0 %v1800
          %1966 = vmatprep.subr.bf16.mxu0 %v1797
          %1967 = vmatpush1.bf16.xpose.msra.mxu0 %v1796
          %1968 = vmatprep.subr.bf16.mxu0 %v1793
          %1969 = vmatpush1.bf16.xpose.msra.mxu0 %v1792
          %1970 = vmatprep.subr.bf16.mxu0 %v1789
          %1971 = vmatpush1.bf16.xpose.msra.mxu0 %v1788
          %1972 = vmatprep.subr.bf16.mxu0 %v1849
          %1973 = vmatpush2.bf16.xpose.msra.mxu0 %v1848
          %1974 = vmatprep.subr.bf16.mxu0 %v1845
          %1975 = vmatpush2.bf16.xpose.msra.mxu0 %v1844
          %1976 = vmatprep.subr.bf16.mxu0 %v1841
          %1977 = vmatpush2.bf16.xpose.msra.mxu0 %v1840
          %1978 = vmatprep.subr.bf16.mxu0 %v1837
          %1979 = vmatpush2.bf16.xpose.msra.mxu0 %v1836
          %1980 = vmatprep.subr.bf16.mxu0 %v1833
          %1981 = vmatpush2.bf16.xpose.msra.mxu0 %v1832
          %1982 = vmatprep.subr.bf16.mxu0 %v1829
          %1983 = vmatpush2.bf16.xpose.msra.mxu0 %v1828
          %1984 = vmatprep.subr.bf16.mxu0 %v1825
          %1985 = vmatpush2.bf16.xpose.msra.mxu0 %v1824
          %1986 = vmatprep.subr.bf16.mxu0 %v1821
          %1987 = vmatpush2.bf16.xpose.msra.mxu0 %v1820
          %1988 = vmatprep.mubr.bf16.mxu0 %v1465
          %1989 = vmatmul.mubr.bf16.gmra.mxu0 %v1464
          %v1990 = vpop.f32.mrf.mxu0
          %v1991 = vadd.f32 %v1865, %v1990
          %v1992 = vpop.f32.mrf.mxu0
          %v1993 = vadd.f32 %v1869, %v1992
          %v1994 = vpop.f32.mrf.mxu0
          %v1995 = vpop.f32.mrf.mxu0
          %1996 = vdwg.mxu0
          %1997 = vmatprep.subr.bf16.mxu0 %v1819
          %1998 = vmatpush1.bf16.xpose.msra.mxu0 %v1818
          %1999 = vmatprep.subr.bf16.mxu0 %v1815
          %2000 = vmatpush1.bf16.xpose.msra.mxu0 %v1814
          %2001 = vmatprep.subr.bf16.mxu0 %v1811
          %2002 = vmatpush1.bf16.xpose.msra.mxu0 %v1810
          %2003 = vmatprep.subr.bf16.mxu0 %v1807
          %2004 = vmatpush1.bf16.xpose.msra.mxu0 %v1806
          %2005 = vmatprep.subr.bf16.mxu0 %v1803
          %2006 = vmatpush1.bf16.xpose.msra.mxu0 %v1802
          %2007 = vmatprep.subr.bf16.mxu0 %v1799
          %2008 = vmatpush1.bf16.xpose.msra.mxu0 %v1798
          %2009 = vmatprep.subr.bf16.mxu0 %v1795
          %2010 = vmatpush1.bf16.xpose.msra.mxu0 %v1794
          %2011 = vmatprep.subr.bf16.mxu0 %v1791
          %2012 = vmatpush1.bf16.xpose.msra.mxu0 %v1790
          %2013 = vmatprep.subr.bf16.mxu0 %v1851
          %2014 = vmatpush2.bf16.xpose.msra.mxu0 %v1850
          %2015 = vmatprep.subr.bf16.mxu0 %v1847
          %2016 = vmatpush2.bf16.xpose.msra.mxu0 %v1846
          %2017 = vmatprep.subr.bf16.mxu0 %v1843
          %2018 = vmatpush2.bf16.xpose.msra.mxu0 %v1842
          %2019 = vmatprep.subr.bf16.mxu0 %v1839
          %2020 = vmatpush2.bf16.xpose.msra.mxu0 %v1838
          %2021 = vmatprep.subr.bf16.mxu0 %v1835
          %2022 = vmatpush2.bf16.xpose.msra.mxu0 %v1834
          %2023 = vmatprep.subr.bf16.mxu0 %v1831
          %2024 = vmatpush2.bf16.xpose.msra.mxu0 %v1830
          %2025 = vmatprep.subr.bf16.mxu0 %v1827
          %2026 = vmatpush2.bf16.xpose.msra.mxu0 %v1826
          %2027 = vmatprep.subr.bf16.mxu0 %v1823
          %2028 = vmatpush2.bf16.xpose.msra.mxu0 %v1822
          %2029 = vmatprep.mubr.bf16.mxu0 %v1467
          %2030 = vmatmul.mubr.bf16.gmra.mxu0 %v1466
          %v2031 = vpop.f32.mrf.mxu0
          %v2032 = vadd.f32 %v1991, %v2031
          %v2033 = vpop.f32.mrf.mxu0
          %v2034 = vadd.f32 %v1993, %v2033
          %v2035 = vpop.f32.mrf.mxu0
          %v2036 = vpop.f32.mrf.mxu0
          %2037 = vdwg.mxu0
          %2038 = vst [vmem:[%s249] sm:$0xff] %v1950
          %2039 = vst [vmem:[%s249 + $0x8] sm:$0xff] %v1952
          %2040 = vst [vmem:[%s249 + $0x10] sm:$0xff] %v2032
          %2041 = vst [vmem:[%s249 + $0x18] sm:$0xff] %v2034
        $region44: #{mha_encoder_decoder_attention.5} parent=35 // pred_fallthru
          _
        %s2042 = sand.u32 %s145, 1
        %s2043 = scalar_lea.sflag [#allocation6], %s2042
        %s2044 = sand.u32 %s145, 1
        %s2045 = smul.addr %s2044, 32
        %s2046 = scalar_lea.vmem [#allocation5], %s2045
        // Predicated region
        $region45: #{mha_encoder_decoder_attention.5} parent=35 // pred_check
          %p2047 = pneg %p155
        $region46: #{mha_encoder_decoder_attention.5} parent=35 // pred_check_branch
          %2049 = sbr.rel (%p2047) target = $region48
        $region47: #{mha_encoder_decoder_attention.5} parent=35 // pred_region
          %s2051 = ssub.s32 512, 512
          %2052 = vsyncadd %s2043, %s2051
          %s2053 = smul.addr %s24, 4
          %s2054 = smul.addr %s23, 4
          %s2055 = sadd.s32 %s2053, %s2054
          %s2056 = smul.addr %s2055, 128
          %s2057 = scalar_lea.hbm %s4, %s2056
          %s2059 = sshll.u32 %s2046, 4
          %s2060 = int_to_ptr.vmem [resolvable:$true] %s2059
          %2062 = dma.vmem_to_hbm [thread:$0]  %s2060, 512, %s2057, %s2043
        $region48: #{mha_encoder_decoder_attention.5} parent=35 // pred_fallthru
          _
      $region36: #{mha_encoder_decoder_attention.5} parent=5 // pred_fallthru
        _
      %p2063 = scmp.le.s32.totalorder 2, %s13
      // Predicated region
      $region49: #{mha_encoder_decoder_attention.5} parent=5 // pred_check
        %p2064 = pneg %p2063
      $region50: #{mha_encoder_decoder_attention.5} parent=5 // pred_check_branch
        %2066 = sbr.rel (%p2064) target = $region52
      $region51: #{mha_encoder_decoder_attention.5} parent=5 // pred_region
        %s2067 = ssub.s32 %s13, 2
        // Predicated region
        $region53: #{mha_encoder_decoder_attention.5} parent=51 // pred_check
          %p2068 = pneg %p161
        $region54: #{mha_encoder_decoder_attention.5} parent=51 // pred_check_branch
          %2070 = sbr.rel (%p2068) target = $region56
        $region55: #{mha_encoder_decoder_attention.5} parent=51 // pred_region
          %s2071 = sand.u32 %s146, 1
          %s2072 = scalar_lea.sflag [#allocation6], %s2071
          %s2073 = sand.u32 %s146, 1
          %s2074 = smul.addr %s2073, 32
          %s2075 = scalar_lea.vmem [#allocation5], %s2074
          %2076 = dma.done %s2072, 512
        $region56: #{mha_encoder_decoder_attention.5} parent=51 // pred_fallthru
          _
      $region52: #{mha_encoder_decoder_attention.5} parent=5 // pred_fallthru
        _
    $region6: #{mha_encoder_decoder_attention.5} parent=1 // loop_footer
      %s17 = sadd.s32 1, %s13
    $region7: #{mha_encoder_decoder_attention.5} parent=1 // loop_footer_branch
      %12 = sbr.rel target = $region3
    $region8: #{mha_encoder_decoder_attention.5} parent=1 // loop_exit
      _
    %2077 = vsyncpa [#allocation6], 1
    %s2078 = scalar_lea.sflag [#allocation6], 1
    %2079 = vsyncpa %s2078, 1

</llo_original>
